<compile_context>
chip_gen: v5e
topology: v5e:2x2
jax: 0.10.0
libtpu: 0.0.40
codegen_flags: <defaults>
</compile_context>

<pallas_src>
import jax
import jax.numpy as jnp
from jax.experimental import pallas as pl
from jax.experimental.pallas import tpu as pltpu


# ----------------------------------------------------------------------------
# Host-side weight packing helpers.
# Packed gate-column layout (8H lanes): [i_f i_r f_f f_r g_f g_r o_f o_r].
# Packed hidden layout (2H lanes):      [h_fwd | h_rev].
# ----------------------------------------------------------------------------
def _pack_dir(w, d, H):
    """Spread a (in, 4H) transposed weight of direction d into the interleaved
    (in, 8H) packed gate-column layout (zeros in the other direction's blocks)."""
    cols = []
    for k in range(4):                       # PyTorch gate order i, f, g, o
        blk = w[:, k * H:(k + 1) * H]
        zero = jnp.zeros_like(blk)
        cols += [blk, zero] if d == 0 else [zero, blk]
    return jnp.concatenate(cols, axis=1)     # (in, 8H)


# ----------------------------------------------------------------------------
# Fused kernel: embedding gather + whole LSTM stack + final Linear, all VMEM.
# ----------------------------------------------------------------------------
def _make_lstm_fc_kernel(T, B, E, H, num_layers, layer_offsets):
    P = 2 * H          # packed hidden width  [fwd | rev]

    def kernel(ids_ref, emb_ref, w_ref, fc_ref, out_ref, x_scr, h_scr, gate_scr):
        # ---- 1. fused embedding gather -> packed layer-0 input slab --------
        # x_scr row (s*B + b): lanes [0:E)  = emb[ids[b, s]]        (fwd time s)
        #                      lanes [E:2E) = emb[ids[b, T-1-s]]    (rev time)
        for t in range(T):
            for b in range(B):
                row = emb_ref[pl.ds(ids_ref[b, t], 1), :]            # (1, E)
                rf = t * B + b
                rr = (T - 1 - t) * B + b
                x_scr[rf:rf + 1, 0:E] = row
                x_scr[rr:rr + 1, E:2 * E] = row

        last_fwd = None
        last_rev = None

        for l in range(num_layers):
            wih_off, whh_off, b_off, in_p = layer_offsets[l]
            is_last = (l == num_layers - 1)

            # ---- 2. batched dual-direction input projection: ONE matmul ----
            # Independent of the recurrence carry; staged in gate_scr so the
            # per-step reads are plain 2-row vector loads.
            lhs = x_scr[...] if l == 0 else h_scr[...]
            gate_scr[...] = (
                jnp.dot(lhs, w_ref[wih_off:wih_off + in_p, :],
                        preferred_element_type=jnp.float32)
                + w_ref[b_off:b_off + 1, :])

            whh = w_ref[whh_off:whh_off + P, :]                      # (2H, 8H)

            # ---- 3. fused fwd+rev recurrence: one block-diag matmul/step ----
            h = jnp.zeros((B, P), jnp.float32)
            c = jnp.zeros((B, P), jnp.float32)
            for s in range(T):
                gates = gate_scr[s * B:(s + 1) * B, :] + jnp.dot(
                    h, whh, preferred_element_type=jnp.float32)      # (B, 8H)
                sg = jax.nn.sigmoid(gates)        # full-vreg sigmoid, pick below
                i_g = sg[:, 0 * P:1 * P]
                f_g = sg[:, 1 * P:2 * P]
                o_g = sg[:, 3 * P:4 * P]
                g_g = jnp.tanh(gates[:, 2 * P:3 * P])
                c = f_g * c + i_g * g_g
                h = o_g * jnp.tanh(c)
                # h lanes [0:H) = fwd hidden at time s,
                #   lanes [H:2H) = rev hidden at time T-1-s.

                if is_last:
                    # Valid ONLY because the model consumes out[:, -1, :]:
                    #   fwd feature = fwd hidden at the final step (s = T-1),
                    #   rev feature = rev hidden at time T-1, i.e. its FIRST
                    #   step of the reverse scan (s = 0).
                    if s == 0:
                        last_rev = h[:, H:2 * H]
                    if s == T - 1:
                        last_fwd = h[:, 0:H]
                else:
                    # Scatter into the next layer's packed input slab:
                    # h_scr row (s'*B + b) = [h_f[s'] | h_r[s'] | h_f[T-1-s'] | h_r[T-1-s']]
                    sr = T - 1 - s
                    h_scr[s * B:(s + 1) * B, 0:H] = h[:, 0:H]
                    h_scr[sr * B:(sr + 1) * B, 2 * H:3 * H] = h[:, 0:H]
                    h_scr[sr * B:(sr + 1) * B, H:2 * H] = h[:, H:2 * H]
                    h_scr[s * B:(s + 1) * B, 3 * H:4 * H] = h[:, H:2 * H]

        # ---- 4. fused final Linear on the resident last-timestep features --
        out_ref[...] = (
            fc_ref[P:P + 1, :]
            + jnp.dot(last_fwd, fc_ref[0:H, :], preferred_element_type=jnp.float32)
            + jnp.dot(last_rev, fc_ref[H:P, :], preferred_element_type=jnp.float32))

    return kernel


# ----------------------------------------------------------------------------
# Parameters (deterministic synthetic init, PyTorch-style shapes/semantics),
# plus the packed kernel operands.
# ----------------------------------------------------------------------------
class LSTMParams:
    def __init__(self, key, vocab_size, embedding_dim, num_layers, hidden_dim,
                 out_channels, bidirectional):
        assert bidirectional, "fused kernel is specialised to bidirectional=True"
        self.vocab_size = vocab_size
        self.embedding_dim = embedding_dim
        self.num_layers = num_layers
        self.hidden_dim = hidden_dim
        self.out_channels = out_channels
        self.num_directions = 2
        D, H = self.num_directions, hidden_dim

        k = 1.0 / float(hidden_dim) ** 0.5
        n_keys = 1 + num_layers * D * 4 + 2
        keys = iter(jax.random.split(key, n_keys))

        # Embedding table (nn.Embedding: N(0, 1)).
        self.embedding = jax.random.normal(
            next(keys), (vocab_size, embedding_dim), jnp.float32)

        # LSTM weights, stored transposed (for x @ W^T) and stacked over
        # directions: wih (D, in, 4H), whh (D, H, 4H), bias b_ih+b_hh (D, 1, 4H).
        self.lstm = []
        for layer in range(num_layers):
            in_size = embedding_dim if layer == 0 else hidden_dim * D
            wihs, whhs, bs = [], [], []
            for _ in range(D):
                wihs.append(jax.random.uniform(
                    next(keys), (in_size, 4 * H), jnp.float32, -k, k))
                whhs.append(jax.random.uniform(
                    next(keys), (H, 4 * H), jnp.float32, -k, k))
                b_ih = jax.random.uniform(
                    next(keys), (4 * H,), jnp.float32, -k, k)
                b_hh = jax.random.uniform(
                    next(keys), (4 * H,), jnp.float32, -k, k)
                bs.append((b_ih + b_hh).reshape(1, -1))
            self.lstm.append((jnp.stack(wihs), jnp.stack(whhs), jnp.stack(bs)))

        fc_in = hidden_dim * D
        kf = 1.0 / float(fc_in) ** 0.5
        self.fc_w_t = jax.random.uniform(
            next(keys), (fc_in, out_channels), jnp.float32, -kf, kf)
        self.fc_b = jax.random.uniform(
            next(keys), (1, out_channels), jnp.float32, -kf, kf)

        # ---- packed kernel operands --------------------------------------
        # One 256-wide weight slab: per layer [Wih_packed ; Whh_packed], then
        # all biases padded to 8 rows each (keeps every row offset 8-aligned).
        rows, offsets, biases = [], [], []
        roff = 0
        for layer in range(num_layers):
            wih, whh, b = self.lstm[layer]
            wih_p = jnp.concatenate(
                [_pack_dir(wih[0], 0, H), _pack_dir(wih[1], 1, H)], axis=0)
            whh_p = jnp.concatenate(
                [_pack_dir(whh[0], 0, H), _pack_dir(whh[1], 1, H)], axis=0)
            bias_p = _pack_dir(b[0], 0, H) + _pack_dir(b[1], 1, H)   # (1, 8H)
            in_p = wih_p.shape[0]
            offsets.append([roff, roff + in_p, 0, in_p])
            rows += [wih_p, whh_p]
            roff += in_p + 2 * H
            biases.append(bias_p)
        for layer in range(num_layers):
            offsets[layer][2] = roff
            rows.append(jnp.concatenate(
                [biases[layer], jnp.zeros((7, 8 * H), jnp.float32)], axis=0))
            roff += 8
        self.w_packed = jnp.concatenate(rows, axis=0)                # (rows, 8H)
        self.layer_offsets = [tuple(o) for o in offsets]
        self.fc_packed = jnp.concatenate([self.fc_w_t, self.fc_b], axis=0)


# ----------------------------------------------------------------------------
# Forward: one fused Pallas call (ids -> logits), no XLA glue ops.
# ----------------------------------------------------------------------------
def lstm_forward(params: LSTMParams, x_ids):
    """x_ids: (B, T) int32 token ids -> (B, out_channels) float32."""
    B, T = x_ids.shape
    H = params.hidden_dim
    E = params.embedding_dim
    L = params.num_layers
    C = params.out_channels

    kernel = _make_lstm_fc_kernel(T, B, E, H, L, params.layer_offsets)

    grid_spec = pltpu.PrefetchScalarGridSpec(
        num_scalar_prefetch=1,           # x_ids -> SMEM
        grid=(1,),
        in_specs=[
            pl.BlockSpec(params.embedding.shape, lambda i, ids: (0, 0)),
            pl.BlockSpec(params.w_packed.shape, lambda i, ids: (0, 0)),
            pl.BlockSpec(params.fc_packed.shape, lambda i, ids: (0, 0)),
        ],
        out_specs=pl.BlockSpec((B, C), lambda i, ids: (0, 0)),
        scratch_shapes=[
            pltpu.VMEM((T * B, 2 * E), jnp.float32),   # packed layer-0 inputs
            pltpu.VMEM((T * B, 4 * H), jnp.float32),   # packed layer>=1 inputs
            pltpu.VMEM((T * B, 8 * H), jnp.float32),   # per-layer gate_x slab
        ],
    )

    return pl.pallas_call(
        kernel,
        out_shape=jax.ShapeDtypeStruct((B, C), jnp.float32),
        grid_spec=grid_spec,
        compiler_params=pltpu.CompilerParams(
            dimension_semantics=("arbitrary",)),
    )(x_ids.astype(jnp.int32), params.embedding, params.w_packed,
      params.fc_packed)


# ----------------------------------------------------------------------------
# Pure-JAX reference (full recurrences, no shortcuts) for validation.
# ----------------------------------------------------------------------------
def lstm_forward_reference(params: LSTMParams, x_ids):
    B, T = x_ids.shape
    H = params.hidden_dim
    D = params.num_directions
    hp = jax.lax.Precision.HIGHEST

    layer_in = jnp.take(params.embedding, x_ids, axis=0)   # (B, T, E)
    for l in range(params.num_layers):
        wih, whh, b = params.lstm[l]
        outs = []
        for d in range(D):
            reverse = (d == 1)
            h = jnp.zeros((B, H), jnp.float32)
            c = jnp.zeros((B, H), jnp.float32)
            hs = [None] * T
            order = range(T - 1, -1, -1) if reverse else range(T)
            for t in order:
                g = (jnp.dot(layer_in[:, t, :], wih[d], precision=hp)
                     + jnp.dot(h, whh[d], precision=hp) + b[d])
                i_g = jax.nn.sigmoid(g[:, 0 * H:1 * H])
                f_g = jax.nn.sigmoid(g[:, 1 * H:2 * H])
                g_g = jnp.tanh(g[:, 2 * H:3 * H])
                o_g = jax.nn.sigmoid(g[:, 3 * H:4 * H])
                c = f_g * c + i_g * g_g
                h = o_g * jnp.tanh(c)
                hs[t] = h
            outs.append(jnp.stack(hs, axis=1))              # (B, T, H)
        layer_in = jnp.concatenate(outs, axis=-1)           # (B, T, D*H)

    last = layer_in[:, -1, :]
    return jnp.dot(last, params.fc_w_t, precision=hp) + params.fc_b


if __name__ == "__main__":
    # Module hyper-parameters (small, consistent with the PyTorch __init__).
    vocab_size = 50
    embedding_dim = 32
    num_layers = 2
    hidden_dim = 32
    out_channels = 4
    bidirectional = True
    B, T = 2, 8

    key = jax.random.PRNGKey(0)
    pkey, xkey = jax.random.split(key)

    params = LSTMParams(pkey, vocab_size, embedding_dim, num_layers,
                        hidden_dim, out_channels, bidirectional)
    x_ids = jax.random.randint(xkey, (B, T), 0, vocab_size, dtype=jnp.int32)

    out = jax.block_until_ready(lstm_forward(params, x_ids))

    assert out.shape == (B, out_channels), out.shape
    assert out.dtype == jnp.float32, out.dtype

    # Numerical cross-check against the straightforward pure-JAX reference.
    ref = jax.block_until_ready(lstm_forward_reference(params, x_ids))
    assert jnp.allclose(out, ref, rtol=2e-3, atol=2e-3), (out, ref)

    print("KERNEL_OK")
</pallas_src>

<mosaic_0001>
module attributes {stable_mosaic.version = 11 : i64} {
  func.func @kernel(%arg0: i32, %arg1: memref<2x8xi32, #tpu.memory_space<smem>>, %arg2: memref<50x32xf32, #tpu.memory_space<vmem>>, %arg3: memref<336x256xf32, #tpu.memory_space<vmem>>, %arg4: memref<65x4xf32, #tpu.memory_space<vmem>>, %arg5: memref<2x4xf32, #tpu.memory_space<vmem>>, %arg6: memref<16x64xf32, #tpu.memory_space<vmem>>, %arg7: memref<16x128xf32, #tpu.memory_space<vmem>>, %arg8: memref<16x256xf32, #tpu.memory_space<vmem>>) attributes {dimension_semantics = [#tpu.dimension_semantics<arbitrary>], iteration_bounds = array<i64: 1>, scalar_prefetch = 1 : i64, scratch_operands = 3 : i64, tpu.core_type = #tpu.core_type<tc>, window_params = [{pipeline_mode = #tpu.pipeline_mode<synchronous>, transform_indices = @transform_0, window_bounds = array<i64: 50, 32>}, {pipeline_mode = #tpu.pipeline_mode<synchronous>, transform_indices = @transform_1, window_bounds = array<i64: 336, 256>}, {pipeline_mode = #tpu.pipeline_mode<synchronous>, transform_indices = @transform_2, window_bounds = array<i64: 65, 4>}, {pipeline_mode = #tpu.pipeline_mode<synchronous>, transform_indices = @transform_3, window_bounds = array<i64: 2, 4>}]} {
    %c0 = arith.constant 0 : index
    %c0_0 = arith.constant 0 : index
    %0 = memref.load %arg1[%c0, %c0_0] : memref<2x8xi32, #tpu.memory_space<smem>>
    %1 = arith.index_cast %0 : i32 to index
    %c0_1 = arith.constant 0 : index
    %2 = vector.load %arg2[%1, %c0_1] : memref<50x32xf32, #tpu.memory_space<vmem>>, vector<1x32xf32>
    %c0_2 = arith.constant 0 : index
    %c0_3 = arith.constant 0 : index
    %3 = vector.load %arg6[%c0_2, %c0_3] : memref<16x64xf32, #tpu.memory_space<vmem>>, vector<1x32xf32>
    tpu.vector_store %arg6[%c0_2, %c0_3], %2 {strides = array<i32>} : memref<16x64xf32, #tpu.memory_space<vmem>>, vector<1x32xf32>,
    %c14 = arith.constant 14 : index
    %c32 = arith.constant 32 : index
    %4 = vector.load %arg6[%c14, %c32] : memref<16x64xf32, #tpu.memory_space<vmem>>, vector<1x32xf32>
    tpu.vector_store %arg6[%c14, %c32], %2 {strides = array<i32>} : memref<16x64xf32, #tpu.memory_space<vmem>>, vector<1x32xf32>,
    %c1 = arith.constant 1 : index
    %c0_4 = arith.constant 0 : index
    %5 = memref.load %arg1[%c1, %c0_4] : memref<2x8xi32, #tpu.memory_space<smem>>
    %6 = arith.index_cast %5 : i32 to index
    %c0_5 = arith.constant 0 : index
    %7 = vector.load %arg2[%6, %c0_5] : memref<50x32xf32, #tpu.memory_space<vmem>>, vector<1x32xf32>
    %c1_6 = arith.constant 1 : index
    %c0_7 = arith.constant 0 : index
    %8 = vector.load %arg6[%c1_6, %c0_7] : memref<16x64xf32, #tpu.memory_space<vmem>>, vector<1x32xf32>
    tpu.vector_store %arg6[%c1_6, %c0_7], %7 {strides = array<i32>} : memref<16x64xf32, #tpu.memory_space<vmem>>, vector<1x32xf32>,
    %c15 = arith.constant 15 : index
    %c32_8 = arith.constant 32 : index
    %9 = vector.load %arg6[%c15, %c32_8] : memref<16x64xf32, #tpu.memory_space<vmem>>, vector<1x32xf32>
    tpu.vector_store %arg6[%c15, %c32_8], %7 {strides = array<i32>} : memref<16x64xf32, #tpu.memory_space<vmem>>, vector<1x32xf32>,
    %c0_9 = arith.constant 0 : index
    %c1_10 = arith.constant 1 : index
    %10 = memref.load %arg1[%c0_9, %c1_10] : memref<2x8xi32, #tpu.memory_space<smem>>
    %11 = arith.index_cast %10 : i32 to index
    %c0_11 = arith.constant 0 : index
    %12 = vector.load %arg2[%11, %c0_11] : memref<50x32xf32, #tpu.memory_space<vmem>>, vector<1x32xf32>
    %c2 = arith.constant 2 : index
    %c0_12 = arith.constant 0 : index
    %13 = vector.load %arg6[%c2, %c0_12] : memref<16x64xf32, #tpu.memory_space<vmem>>, vector<1x32xf32>
    tpu.vector_store %arg6[%c2, %c0_12], %12 {strides = array<i32>} : memref<16x64xf32, #tpu.memory_space<vmem>>, vector<1x32xf32>,
    %c12 = arith.constant 12 : index
    %c32_13 = arith.constant 32 : index
    %14 = vector.load %arg6[%c12, %c32_13] : memref<16x64xf32, #tpu.memory_space<vmem>>, vector<1x32xf32>
    tpu.vector_store %arg6[%c12, %c32_13], %12 {strides = array<i32>} : memref<16x64xf32, #tpu.memory_space<vmem>>, vector<1x32xf32>,
    %c1_14 = arith.constant 1 : index
    %c1_15 = arith.constant 1 : index
    %15 = memref.load %arg1[%c1_14, %c1_15] : memref<2x8xi32, #tpu.memory_space<smem>>
    %16 = arith.index_cast %15 : i32 to index
    %c0_16 = arith.constant 0 : index
    %17 = vector.load %arg2[%16, %c0_16] : memref<50x32xf32, #tpu.memory_space<vmem>>, vector<1x32xf32>
    %c3 = arith.constant 3 : index
    %c0_17 = arith.constant 0 : index
    %18 = vector.load %arg6[%c3, %c0_17] : memref<16x64xf32, #tpu.memory_space<vmem>>, vector<1x32xf32>
    tpu.vector_store %arg6[%c3, %c0_17], %17 {strides = array<i32>} : memref<16x64xf32, #tpu.memory_space<vmem>>, vector<1x32xf32>,
    %c13 = arith.constant 13 : index
    %c32_18 = arith.constant 32 : index
    %19 = vector.load %arg6[%c13, %c32_18] : memref<16x64xf32, #tpu.memory_space<vmem>>, vector<1x32xf32>
    tpu.vector_store %arg6[%c13, %c32_18], %17 {strides = array<i32>} : memref<16x64xf32, #tpu.memory_space<vmem>>, vector<1x32xf32>,
    %c0_19 = arith.constant 0 : index
    %c2_20 = arith.constant 2 : index
    %20 = memref.load %arg1[%c0_19, %c2_20] : memref<2x8xi32, #tpu.memory_space<smem>>
    %21 = arith.index_cast %20 : i32 to index
    %c0_21 = arith.constant 0 : index
    %22 = vector.load %arg2[%21, %c0_21] : memref<50x32xf32, #tpu.memory_space<vmem>>, vector<1x32xf32>
    %c4 = arith.constant 4 : index
    %c0_22 = arith.constant 0 : index
    %23 = vector.load %arg6[%c4, %c0_22] : memref<16x64xf32, #tpu.memory_space<vmem>>, vector<1x32xf32>
    tpu.vector_store %arg6[%c4, %c0_22], %22 {strides = array<i32>} : memref<16x64xf32, #tpu.memory_space<vmem>>, vector<1x32xf32>,
    %c10 = arith.constant 10 : index
    %c32_23 = arith.constant 32 : index
    %24 = vector.load %arg6[%c10, %c32_23] : memref<16x64xf32, #tpu.memory_space<vmem>>, vector<1x32xf32>
    tpu.vector_store %arg6[%c10, %c32_23], %22 {strides = array<i32>} : memref<16x64xf32, #tpu.memory_space<vmem>>, vector<1x32xf32>,
    %c1_24 = arith.constant 1 : index
    %c2_25 = arith.constant 2 : index
    %25 = memref.load %arg1[%c1_24, %c2_25] : memref<2x8xi32, #tpu.memory_space<smem>>
    %26 = arith.index_cast %25 : i32 to index
    %c0_26 = arith.constant 0 : index
    %27 = vector.load %arg2[%26, %c0_26] : memref<50x32xf32, #tpu.memory_space<vmem>>, vector<1x32xf32>
    %c5 = arith.constant 5 : index
    %c0_27 = arith.constant 0 : index
    %28 = vector.load %arg6[%c5, %c0_27] : memref<16x64xf32, #tpu.memory_space<vmem>>, vector<1x32xf32>
    tpu.vector_store %arg6[%c5, %c0_27], %27 {strides = array<i32>} : memref<16x64xf32, #tpu.memory_space<vmem>>, vector<1x32xf32>,
    %c11 = arith.constant 11 : index
    %c32_28 = arith.constant 32 : index
    %29 = vector.load %arg6[%c11, %c32_28] : memref<16x64xf32, #tpu.memory_space<vmem>>, vector<1x32xf32>
    tpu.vector_store %arg6[%c11, %c32_28], %27 {strides = array<i32>} : memref<16x64xf32, #tpu.memory_space<vmem>>, vector<1x32xf32>,
    %c0_29 = arith.constant 0 : index
    %c3_30 = arith.constant 3 : index
    %30 = memref.load %arg1[%c0_29, %c3_30] : memref<2x8xi32, #tpu.memory_space<smem>>
    %31 = arith.index_cast %30 : i32 to index
    %c0_31 = arith.constant 0 : index
    %32 = vector.load %arg2[%31, %c0_31] : memref<50x32xf32, #tpu.memory_space<vmem>>, vector<1x32xf32>
    %c6 = arith.constant 6 : index
    %c0_32 = arith.constant 0 : index
    %33 = vector.load %arg6[%c6, %c0_32] : memref<16x64xf32, #tpu.memory_space<vmem>>, vector<1x32xf32>
    tpu.vector_store %arg6[%c6, %c0_32], %32 {strides = array<i32>} : memref<16x64xf32, #tpu.memory_space<vmem>>, vector<1x32xf32>,
    %c8 = arith.constant 8 : index
    %c32_33 = arith.constant 32 : index
    %34 = vector.load %arg6[%c8, %c32_33] : memref<16x64xf32, #tpu.memory_space<vmem>>, vector<1x32xf32>
    tpu.vector_store %arg6[%c8, %c32_33], %32 {strides = array<i32>} : memref<16x64xf32, #tpu.memory_space<vmem>>, vector<1x32xf32>,
    %c1_34 = arith.constant 1 : index
    %c3_35 = arith.constant 3 : index
    %35 = memref.load %arg1[%c1_34, %c3_35] : memref<2x8xi32, #tpu.memory_space<smem>>
    %36 = arith.index_cast %35 : i32 to index
    %c0_36 = arith.constant 0 : index
    %37 = vector.load %arg2[%36, %c0_36] : memref<50x32xf32, #tpu.memory_space<vmem>>, vector<1x32xf32>
    %c7 = arith.constant 7 : index
    %c0_37 = arith.constant 0 : index
    %38 = vector.load %arg6[%c7, %c0_37] : memref<16x64xf32, #tpu.memory_space<vmem>>, vector<1x32xf32>
    tpu.vector_store %arg6[%c7, %c0_37], %37 {strides = array<i32>} : memref<16x64xf32, #tpu.memory_space<vmem>>, vector<1x32xf32>,
    %c9 = arith.constant 9 : index
    %c32_38 = arith.constant 32 : index
    %39 = vector.load %arg6[%c9, %c32_38] : memref<16x64xf32, #tpu.memory_space<vmem>>, vector<1x32xf32>
    tpu.vector_store %arg6[%c9, %c32_38], %37 {strides = array<i32>} : memref<16x64xf32, #tpu.memory_space<vmem>>, vector<1x32xf32>,
    %c0_39 = arith.constant 0 : index
    %c4_40 = arith.constant 4 : index
    %40 = memref.load %arg1[%c0_39, %c4_40] : memref<2x8xi32, #tpu.memory_space<smem>>
    %41 = arith.index_cast %40 : i32 to index
    %c0_41 = arith.constant 0 : index
    %42 = vector.load %arg2[%41, %c0_41] : memref<50x32xf32, #tpu.memory_space<vmem>>, vector<1x32xf32>
    %c8_42 = arith.constant 8 : index
    %c0_43 = arith.constant 0 : index
    %43 = vector.load %arg6[%c8_42, %c0_43] : memref<16x64xf32, #tpu.memory_space<vmem>>, vector<1x32xf32>
    tpu.vector_store %arg6[%c8_42, %c0_43], %42 {strides = array<i32>} : memref<16x64xf32, #tpu.memory_space<vmem>>, vector<1x32xf32>,
    %c6_44 = arith.constant 6 : index
    %c32_45 = arith.constant 32 : index
    %44 = vector.load %arg6[%c6_44, %c32_45] : memref<16x64xf32, #tpu.memory_space<vmem>>, vector<1x32xf32>
    tpu.vector_store %arg6[%c6_44, %c32_45], %42 {strides = array<i32>} : memref<16x64xf32, #tpu.memory_space<vmem>>, vector<1x32xf32>,
    %c1_46 = arith.constant 1 : index
    %c4_47 = arith.constant 4 : index
    %45 = memref.load %arg1[%c1_46, %c4_47] : memref<2x8xi32, #tpu.memory_space<smem>>
    %46 = arith.index_cast %45 : i32 to index
    %c0_48 = arith.constant 0 : index
    %47 = vector.load %arg2[%46, %c0_48] : memref<50x32xf32, #tpu.memory_space<vmem>>, vector<1x32xf32>
    %c9_49 = arith.constant 9 : index
    %c0_50 = arith.constant 0 : index
    %48 = vector.load %arg6[%c9_49, %c0_50] : memref<16x64xf32, #tpu.memory_space<vmem>>, vector<1x32xf32>
    tpu.vector_store %arg6[%c9_49, %c0_50], %47 {strides = array<i32>} : memref<16x64xf32, #tpu.memory_space<vmem>>, vector<1x32xf32>,
    %c7_51 = arith.constant 7 : index
    %c32_52 = arith.constant 32 : index
    %49 = vector.load %arg6[%c7_51, %c32_52] : memref<16x64xf32, #tpu.memory_space<vmem>>, vector<1x32xf32>
    tpu.vector_store %arg6[%c7_51, %c32_52], %47 {strides = array<i32>} : memref<16x64xf32, #tpu.memory_space<vmem>>, vector<1x32xf32>,
    %c0_53 = arith.constant 0 : index
    %c5_54 = arith.constant 5 : index
    %50 = memref.load %arg1[%c0_53, %c5_54] : memref<2x8xi32, #tpu.memory_space<smem>>
    %51 = arith.index_cast %50 : i32 to index
    %c0_55 = arith.constant 0 : index
    %52 = vector.load %arg2[%51, %c0_55] : memref<50x32xf32, #tpu.memory_space<vmem>>, vector<1x32xf32>
    %c10_56 = arith.constant 10 : index
    %c0_57 = arith.constant 0 : index
    %53 = vector.load %arg6[%c10_56, %c0_57] : memref<16x64xf32, #tpu.memory_space<vmem>>, vector<1x32xf32>
    tpu.vector_store %arg6[%c10_56, %c0_57], %52 {strides = array<i32>} : memref<16x64xf32, #tpu.memory_space<vmem>>, vector<1x32xf32>,
    %c4_58 = arith.constant 4 : index
    %c32_59 = arith.constant 32 : index
    %54 = vector.load %arg6[%c4_58, %c32_59] : memref<16x64xf32, #tpu.memory_space<vmem>>, vector<1x32xf32>
    tpu.vector_store %arg6[%c4_58, %c32_59], %52 {strides = array<i32>} : memref<16x64xf32, #tpu.memory_space<vmem>>, vector<1x32xf32>,
    %c1_60 = arith.constant 1 : index
    %c5_61 = arith.constant 5 : index
    %55 = memref.load %arg1[%c1_60, %c5_61] : memref<2x8xi32, #tpu.memory_space<smem>>
    %56 = arith.index_cast %55 : i32 to index
    %c0_62 = arith.constant 0 : index
    %57 = vector.load %arg2[%56, %c0_62] : memref<50x32xf32, #tpu.memory_space<vmem>>, vector<1x32xf32>
    %c11_63 = arith.constant 11 : index
    %c0_64 = arith.constant 0 : index
    %58 = vector.load %arg6[%c11_63, %c0_64] : memref<16x64xf32, #tpu.memory_space<vmem>>, vector<1x32xf32>
    tpu.vector_store %arg6[%c11_63, %c0_64], %57 {strides = array<i32>} : memref<16x64xf32, #tpu.memory_space<vmem>>, vector<1x32xf32>,
    %c5_65 = arith.constant 5 : index
    %c32_66 = arith.constant 32 : index
    %59 = vector.load %arg6[%c5_65, %c32_66] : memref<16x64xf32, #tpu.memory_space<vmem>>, vector<1x32xf32>
    tpu.vector_store %arg6[%c5_65, %c32_66], %57 {strides = array<i32>} : memref<16x64xf32, #tpu.memory_space<vmem>>, vector<1x32xf32>,
    %c0_67 = arith.constant 0 : index
    %c6_68 = arith.constant 6 : index
    %60 = memref.load %arg1[%c0_67, %c6_68] : memref<2x8xi32, #tpu.memory_space<smem>>
    %61 = arith.index_cast %60 : i32 to index
    %c0_69 = arith.constant 0 : index
    %62 = vector.load %arg2[%61, %c0_69] : memref<50x32xf32, #tpu.memory_space<vmem>>, vector<1x32xf32>
    %c12_70 = arith.constant 12 : index
    %c0_71 = arith.constant 0 : index
    %63 = vector.load %arg6[%c12_70, %c0_71] : memref<16x64xf32, #tpu.memory_space<vmem>>, vector<1x32xf32>
    tpu.vector_store %arg6[%c12_70, %c0_71], %62 {strides = array<i32>} : memref<16x64xf32, #tpu.memory_space<vmem>>, vector<1x32xf32>,
    %c2_72 = arith.constant 2 : index
    %c32_73 = arith.constant 32 : index
    %64 = vector.load %arg6[%c2_72, %c32_73] : memref<16x64xf32, #tpu.memory_space<vmem>>, vector<1x32xf32>
    tpu.vector_store %arg6[%c2_72, %c32_73], %62 {strides = array<i32>} : memref<16x64xf32, #tpu.memory_space<vmem>>, vector<1x32xf32>,
    %c1_74 = arith.constant 1 : index
    %c6_75 = arith.constant 6 : index
    %65 = memref.load %arg1[%c1_74, %c6_75] : memref<2x8xi32, #tpu.memory_space<smem>>
    %66 = arith.index_cast %65 : i32 to index
    %c0_76 = arith.constant 0 : index
    %67 = vector.load %arg2[%66, %c0_76] : memref<50x32xf32, #tpu.memory_space<vmem>>, vector<1x32xf32>
    %c13_77 = arith.constant 13 : index
    %c0_78 = arith.constant 0 : index
    %68 = vector.load %arg6[%c13_77, %c0_78] : memref<16x64xf32, #tpu.memory_space<vmem>>, vector<1x32xf32>
    tpu.vector_store %arg6[%c13_77, %c0_78], %67 {strides = array<i32>} : memref<16x64xf32, #tpu.memory_space<vmem>>, vector<1x32xf32>,
    %c3_79 = arith.constant 3 : index
    %c32_80 = arith.constant 32 : index
    %69 = vector.load %arg6[%c3_79, %c32_80] : memref<16x64xf32, #tpu.memory_space<vmem>>, vector<1x32xf32>
    tpu.vector_store %arg6[%c3_79, %c32_80], %67 {strides = array<i32>} : memref<16x64xf32, #tpu.memory_space<vmem>>, vector<1x32xf32>,
    %c0_81 = arith.constant 0 : index
    %c7_82 = arith.constant 7 : index
    %70 = memref.load %arg1[%c0_81, %c7_82] : memref<2x8xi32, #tpu.memory_space<smem>>
    %71 = arith.index_cast %70 : i32 to index
    %c0_83 = arith.constant 0 : index
    %72 = vector.load %arg2[%71, %c0_83] : memref<50x32xf32, #tpu.memory_space<vmem>>, vector<1x32xf32>
    %c14_84 = arith.constant 14 : index
    %c0_85 = arith.constant 0 : index
    %73 = vector.load %arg6[%c14_84, %c0_85] : memref<16x64xf32, #tpu.memory_space<vmem>>, vector<1x32xf32>
    tpu.vector_store %arg6[%c14_84, %c0_85], %72 {strides = array<i32>} : memref<16x64xf32, #tpu.memory_space<vmem>>, vector<1x32xf32>,
    %c0_86 = arith.constant 0 : index
    %c32_87 = arith.constant 32 : index
    %74 = vector.load %arg6[%c0_86, %c32_87] : memref<16x64xf32, #tpu.memory_space<vmem>>, vector<1x32xf32>
    tpu.vector_store %arg6[%c0_86, %c32_87], %72 {strides = array<i32>} : memref<16x64xf32, #tpu.memory_space<vmem>>, vector<1x32xf32>,
    %c1_88 = arith.constant 1 : index
    %c7_89 = arith.constant 7 : index
    %75 = memref.load %arg1[%c1_88, %c7_89] : memref<2x8xi32, #tpu.memory_space<smem>>
    %76 = arith.index_cast %75 : i32 to index
    %c0_90 = arith.constant 0 : index
    %77 = vector.load %arg2[%76, %c0_90] : memref<50x32xf32, #tpu.memory_space<vmem>>, vector<1x32xf32>
    %c15_91 = arith.constant 15 : index
    %c0_92 = arith.constant 0 : index
    %78 = vector.load %arg6[%c15_91, %c0_92] : memref<16x64xf32, #tpu.memory_space<vmem>>, vector<1x32xf32>
    tpu.vector_store %arg6[%c15_91, %c0_92], %77 {strides = array<i32>} : memref<16x64xf32, #tpu.memory_space<vmem>>, vector<1x32xf32>,
    %c1_93 = arith.constant 1 : index
    %c32_94 = arith.constant 32 : index
    %79 = vector.load %arg6[%c1_93, %c32_94] : memref<16x64xf32, #tpu.memory_space<vmem>>, vector<1x32xf32>
    tpu.vector_store %arg6[%c1_93, %c32_94], %77 {strides = array<i32>} : memref<16x64xf32, #tpu.memory_space<vmem>>, vector<1x32xf32>,
    %c0_95 = arith.constant 0 : index
    %c0_96 = arith.constant 0 : index
    %80 = vector.load %arg6[%c0_95, %c0_96] : memref<16x64xf32, #tpu.memory_space<vmem>>, vector<16x64xf32>
    %c0_97 = arith.constant 0 : index
    %c0_98 = arith.constant 0 : index
    %81 = vector.load %arg3[%c0_97, %c0_98] : memref<336x256xf32, #tpu.memory_space<vmem>>, vector<64x256xf32>
    %cst = arith.constant dense<0.000000e+00> : vector<16x256xf32>
    %82 = tpu.matmul %80, %81, %cst {dimension_numbers = #tpu.dot_dimension_numbers<[1], [0], [0], [1], [0, 0, 1, 1], [], []>} : vector<16x64xf32>, vector<64x256xf32>, vector<16x256xf32> -> vector<16x256xf32>
    %c320 = arith.constant 320 : index
    %c0_99 = arith.constant 0 : index
    %83 = vector.load %arg3[%c320, %c0_99] : memref<336x256xf32, #tpu.memory_space<vmem>>, vector<1x256xf32>
    %84 = vector.broadcast %83 : vector<1x256xf32> to vector<16x256xf32>
    %85 = arith.addf %82, %84 : vector<16x256xf32>
    %c0_100 = arith.constant 0 : index
    %c0_101 = arith.constant 0 : index
    %86 = vector.load %arg8[%c0_100, %c0_101] : memref<16x256xf32, #tpu.memory_space<vmem>>, vector<16x256xf32>
    tpu.vector_store %arg8[%c0_100, %c0_101], %85 {strides = array<i32>} : memref<16x256xf32, #tpu.memory_space<vmem>>, vector<16x256xf32>,
    %c64 = arith.constant 64 : index
    %c0_102 = arith.constant 0 : index
    %87 = vector.load %arg3[%c64, %c0_102] : memref<336x256xf32, #tpu.memory_space<vmem>>, vector<64x256xf32>
    %cst_103 = arith.constant 0.000000e+00 : f32
    %88 = vector.broadcast %cst_103 : f32 to vector<2x64xf32>
    %cst_104 = arith.constant 0.000000e+00 : f32
    %89 = vector.broadcast %cst_104 : f32 to vector<2x64xf32>
    %c0_105 = arith.constant 0 : index
    %c0_106 = arith.constant 0 : index
    %90 = vector.load %arg8[%c0_105, %c0_106] : memref<16x256xf32, #tpu.memory_space<vmem>>, vector<2x256xf32>
    %cst_107 = arith.constant dense<0.000000e+00> : vector<2x256xf32>
    %91 = tpu.matmul %88, %87, %cst_107 {dimension_numbers = #tpu.dot_dimension_numbers<[1], [0], [0], [1], [0, 0, 1, 1], [], []>} : vector<2x64xf32>, vector<64x256xf32>, vector<2x256xf32> -> vector<2x256xf32>
    %92 = arith.addf %90, %91 : vector<2x256xf32>
    %93 = arith.negf %92 : vector<2x256xf32>
    %94 = math.exp %93 : vector<2x256xf32>
    %cst_108 = arith.constant 1.000000e+00 : f32
    %95 = vector.broadcast %cst_108 : f32 to vector<2x256xf32>
    %96 = arith.addf %95, %94 : vector<2x256xf32>
    %97 = arith.divf %95, %96 : vector<2x256xf32>
    %98 = vector.extract_strided_slice %97 {offsets = [0, 0], sizes = [2, 64], strides = [1, 1]} : vector<2x256xf32> to vector<2x64xf32>
    %99 = vector.extract_strided_slice %97 {offsets = [0, 64], sizes = [2, 64], strides = [1, 1]} : vector<2x256xf32> to vector<2x64xf32>
    %100 = vector.extract_strided_slice %97 {offsets = [0, 192], sizes = [2, 64], strides = [1, 1]} : vector<2x256xf32> to vector<2x64xf32>
    %101 = vector.extract_strided_slice %92 {offsets = [0, 128], sizes = [2, 64], strides = [1, 1]} : vector<2x256xf32> to vector<2x64xf32>
    %102 = math.tanh %101 : vector<2x64xf32>
    %103 = arith.mulf %99, %89 : vector<2x64xf32>
    %104 = arith.mulf %98, %102 : vector<2x64xf32>
    %105 = arith.addf %103, %104 : vector<2x64xf32>
    %106 = math.tanh %105 : vector<2x64xf32>
    %107 = arith.mulf %100, %106 : vector<2x64xf32>
    %108 = vector.extract_strided_slice %107 {offsets = [0, 0], sizes = [2, 32], strides = [1, 1]} : vector<2x64xf32> to vector<2x32xf32>
    %c0_109 = arith.constant 0 : index
    %c0_110 = arith.constant 0 : index
    %109 = vector.load %arg7[%c0_109, %c0_110] : memref<16x128xf32, #tpu.memory_space<vmem>>, vector<2x32xf32>
    tpu.vector_store %arg7[%c0_109, %c0_110], %108 {strides = array<i32>} : memref<16x128xf32, #tpu.memory_space<vmem>>, vector<2x32xf32>,
    %110 = vector.extract_strided_slice %107 {offsets = [0, 0], sizes = [2, 32], strides = [1, 1]} : vector<2x64xf32> to vector<2x32xf32>
    %c14_111 = arith.constant 14 : index
    %c64_112 = arith.constant 64 : index
    %111 = vector.load %arg7[%c14_111, %c64_112] : memref<16x128xf32, #tpu.memory_space<vmem>>, vector<2x32xf32>
    tpu.vector_store %arg7[%c14_111, %c64_112], %110 {strides = array<i32>} : memref<16x128xf32, #tpu.memory_space<vmem>>, vector<2x32xf32>,
    %112 = vector.extract_strided_slice %107 {offsets = [0, 32], sizes = [2, 32], strides = [1, 1]} : vector<2x64xf32> to vector<2x32xf32>
    %c14_113 = arith.constant 14 : index
    %c32_114 = arith.constant 32 : index
    %113 = vector.load %arg7[%c14_113, %c32_114] : memref<16x128xf32, #tpu.memory_space<vmem>>, vector<2x32xf32>
    tpu.vector_store %arg7[%c14_113, %c32_114], %112 {strides = array<i32>} : memref<16x128xf32, #tpu.memory_space<vmem>>, vector<2x32xf32>,
    %114 = vector.extract_strided_slice %107 {offsets = [0, 32], sizes = [2, 32], strides = [1, 1]} : vector<2x64xf32> to vector<2x32xf32>
    %c0_115 = arith.constant 0 : index
    %c96 = arith.constant 96 : index
    %115 = vector.load %arg7[%c0_115, %c96] : memref<16x128xf32, #tpu.memory_space<vmem>>, vector<2x32xf32>
    tpu.vector_store %arg7[%c0_115, %c96], %114 {strides = array<i32>} : memref<16x128xf32, #tpu.memory_space<vmem>>, vector<2x32xf32>,
    %c2_116 = arith.constant 2 : index
    %c0_117 = arith.constant 0 : index
    %116 = vector.load %arg8[%c2_116, %c0_117] : memref<16x256xf32, #tpu.memory_space<vmem>>, vector<2x256xf32>
    %cst_118 = arith.constant dense<0.000000e+00> : vector<2x256xf32>
    %117 = tpu.matmul %107, %87, %cst_118 {dimension_numbers = #tpu.dot_dimension_numbers<[1], [0], [0], [1], [0, 0, 1, 1], [], []>} : vector<2x64xf32>, vector<64x256xf32>, vector<2x256xf32> -> vector<2x256xf32>
    %118 = arith.addf %116, %117 : vector<2x256xf32>
    %119 = arith.negf %118 : vector<2x256xf32>
    %120 = math.exp %119 : vector<2x256xf32>
    %cst_119 = arith.constant 1.000000e+00 : f32
    %121 = vector.broadcast %cst_119 : f32 to vector<2x256xf32>
    %122 = arith.addf %121, %120 : vector<2x256xf32>
    %123 = arith.divf %121, %122 : vector<2x256xf32>
    %124 = vector.extract_strided_slice %123 {offsets = [0, 0], sizes = [2, 64], strides = [1, 1]} : vector<2x256xf32> to vector<2x64xf32>
    %125 = vector.extract_strided_slice %123 {offsets = [0, 64], sizes = [2, 64], strides = [1, 1]} : vector<2x256xf32> to vector<2x64xf32>
    %126 = vector.extract_strided_slice %123 {offsets = [0, 192], sizes = [2, 64], strides = [1, 1]} : vector<2x256xf32> to vector<2x64xf32>
    %127 = vector.extract_strided_slice %118 {offsets = [0, 128], sizes = [2, 64], strides = [1, 1]} : vector<2x256xf32> to vector<2x64xf32>
    %128 = math.tanh %127 : vector<2x64xf32>
    %129 = arith.mulf %125, %105 : vector<2x64xf32>
    %130 = arith.mulf %124, %128 : vector<2x64xf32>
    %131 = arith.addf %129, %130 : vector<2x64xf32>
    %132 = math.tanh %131 : vector<2x64xf32>
    %133 = arith.mulf %126, %132 : vector<2x64xf32>
    %134 = vector.extract_strided_slice %133 {offsets = [0, 0], sizes = [2, 32], strides = [1, 1]} : vector<2x64xf32> to vector<2x32xf32>
    %c2_120 = arith.constant 2 : index
    %c0_121 = arith.constant 0 : index
    %135 = vector.load %arg7[%c2_120, %c0_121] : memref<16x128xf32, #tpu.memory_space<vmem>>, vector<2x32xf32>
    tpu.vector_store %arg7[%c2_120, %c0_121], %134 {strides = array<i32>} : memref<16x128xf32, #tpu.memory_space<vmem>>, vector<2x32xf32>,
    %136 = vector.extract_strided_slice %133 {offsets = [0, 0], sizes = [2, 32], strides = [1, 1]} : vector<2x64xf32> to vector<2x32xf32>
    %c12_122 = arith.constant 12 : index
    %c64_123 = arith.constant 64 : index
    %137 = vector.load %arg7[%c12_122, %c64_123] : memref<16x128xf32, #tpu.memory_space<vmem>>, vector<2x32xf32>
    tpu.vector_store %arg7[%c12_122, %c64_123], %136 {strides = array<i32>} : memref<16x128xf32, #tpu.memory_space<vmem>>, vector<2x32xf32>,
    %138 = vector.extract_strided_slice %133 {offsets = [0, 32], sizes = [2, 32], strides = [1, 1]} : vector<2x64xf32> to vector<2x32xf32>
    %c12_124 = arith.constant 12 : index
    %c32_125 = arith.constant 32 : index
    %139 = vector.load %arg7[%c12_124, %c32_125] : memref<16x128xf32, #tpu.memory_space<vmem>>, vector<2x32xf32>
    tpu.vector_store %arg7[%c12_124, %c32_125], %138 {strides = array<i32>} : memref<16x128xf32, #tpu.memory_space<vmem>>, vector<2x32xf32>,
    %140 = vector.extract_strided_slice %133 {offsets = [0, 32], sizes = [2, 32], strides = [1, 1]} : vector<2x64xf32> to vector<2x32xf32>
    %c2_126 = arith.constant 2 : index
    %c96_127 = arith.constant 96 : index
    %141 = vector.load %arg7[%c2_126, %c96_127] : memref<16x128xf32, #tpu.memory_space<vmem>>, vector<2x32xf32>
    tpu.vector_store %arg7[%c2_126, %c96_127], %140 {strides = array<i32>} : memref<16x128xf32, #tpu.memory_space<vmem>>, vector<2x32xf32>,
    %c4_128 = arith.constant 4 : index
    %c0_129 = arith.constant 0 : index
    %142 = vector.load %arg8[%c4_128, %c0_129] : memref<16x256xf32, #tpu.memory_space<vmem>>, vector<2x256xf32>
    %cst_130 = arith.constant dense<0.000000e+00> : vector<2x256xf32>
    %143 = tpu.matmul %133, %87, %cst_130 {dimension_numbers = #tpu.dot_dimension_numbers<[1], [0], [0], [1], [0, 0, 1, 1], [], []>} : vector<2x64xf32>, vector<64x256xf32>, vector<2x256xf32> -> vector<2x256xf32>
    %144 = arith.addf %142, %143 : vector<2x256xf32>
    %145 = arith.negf %144 : vector<2x256xf32>
    %146 = math.exp %145 : vector<2x256xf32>
    %cst_131 = arith.constant 1.000000e+00 : f32
    %147 = vector.broadcast %cst_131 : f32 to vector<2x256xf32>
    %148 = arith.addf %147, %146 : vector<2x256xf32>
    %149 = arith.divf %147, %148 : vector<2x256xf32>
    %150 = vector.extract_strided_slice %149 {offsets = [0, 0], sizes = [2, 64], strides = [1, 1]} : vector<2x256xf32> to vector<2x64xf32>
    %151 = vector.extract_strided_slice %149 {offsets = [0, 64], sizes = [2, 64], strides = [1, 1]} : vector<2x256xf32> to vector<2x64xf32>
    %152 = vector.extract_strided_slice %149 {offsets = [0, 192], sizes = [2, 64], strides = [1, 1]} : vector<2x256xf32> to vector<2x64xf32>
    %153 = vector.extract_strided_slice %144 {offsets = [0, 128], sizes = [2, 64], strides = [1, 1]} : vector<2x256xf32> to vector<2x64xf32>
    %154 = math.tanh %153 : vector<2x64xf32>
    %155 = arith.mulf %151, %131 : vector<2x64xf32>
    %156 = arith.mulf %150, %154 : vector<2x64xf32>
    %157 = arith.addf %155, %156 : vector<2x64xf32>
    %158 = math.tanh %157 : vector<2x64xf32>
    %159 = arith.mulf %152, %158 : vector<2x64xf32>
    %160 = vector.extract_strided_slice %159 {offsets = [0, 0], sizes = [2, 32], strides = [1, 1]} : vector<2x64xf32> to vector<2x32xf32>
    %c4_132 = arith.constant 4 : index
    %c0_133 = arith.constant 0 : index
    %161 = vector.load %arg7[%c4_132, %c0_133] : memref<16x128xf32, #tpu.memory_space<vmem>>, vector<2x32xf32>
    tpu.vector_store %arg7[%c4_132, %c0_133], %160 {strides = array<i32>} : memref<16x128xf32, #tpu.memory_space<vmem>>, vector<2x32xf32>,
    %162 = vector.extract_strided_slice %159 {offsets = [0, 0], sizes = [2, 32], strides = [1, 1]} : vector<2x64xf32> to vector<2x32xf32>
    %c10_134 = arith.constant 10 : index
    %c64_135 = arith.constant 64 : index
    %163 = vector.load %arg7[%c10_134, %c64_135] : memref<16x128xf32, #tpu.memory_space<vmem>>, vector<2x32xf32>
    tpu.vector_store %arg7[%c10_134, %c64_135], %162 {strides = array<i32>} : memref<16x128xf32, #tpu.memory_space<vmem>>, vector<2x32xf32>,
    %164 = vector.extract_strided_slice %159 {offsets = [0, 32], sizes = [2, 32], strides = [1, 1]} : vector<2x64xf32> to vector<2x32xf32>
    %c10_136 = arith.constant 10 : index
    %c32_137 = arith.constant 32 : index
    %165 = vector.load %arg7[%c10_136, %c32_137] : memref<16x128xf32, #tpu.memory_space<vmem>>, vector<2x32xf32>
    tpu.vector_store %arg7[%c10_136, %c32_137], %164 {strides = array<i32>} : memref<16x128xf32, #tpu.memory_space<vmem>>, vector<2x32xf32>,
    %166 = vector.extract_strided_slice %159 {offsets = [0, 32], sizes = [2, 32], strides = [1, 1]} : vector<2x64xf32> to vector<2x32xf32>
    %c4_138 = arith.constant 4 : index
    %c96_139 = arith.constant 96 : index
    %167 = vector.load %arg7[%c4_138, %c96_139] : memref<16x128xf32, #tpu.memory_space<vmem>>, vector<2x32xf32>
    tpu.vector_store %arg7[%c4_138, %c96_139], %166 {strides = array<i32>} : memref<16x128xf32, #tpu.memory_space<vmem>>, vector<2x32xf32>,
    %c6_140 = arith.constant 6 : index
    %c0_141 = arith.constant 0 : index
    %168 = vector.load %arg8[%c6_140, %c0_141] : memref<16x256xf32, #tpu.memory_space<vmem>>, vector<2x256xf32>
    %cst_142 = arith.constant dense<0.000000e+00> : vector<2x256xf32>
    %169 = tpu.matmul %159, %87, %cst_142 {dimension_numbers = #tpu.dot_dimension_numbers<[1], [0], [0], [1], [0, 0, 1, 1], [], []>} : vector<2x64xf32>, vector<64x256xf32>, vector<2x256xf32> -> vector<2x256xf32>
    %170 = arith.addf %168, %169 : vector<2x256xf32>
    %171 = arith.negf %170 : vector<2x256xf32>
    %172 = math.exp %171 : vector<2x256xf32>
    %cst_143 = arith.constant 1.000000e+00 : f32
    %173 = vector.broadcast %cst_143 : f32 to vector<2x256xf32>
    %174 = arith.addf %173, %172 : vector<2x256xf32>
    %175 = arith.divf %173, %174 : vector<2x256xf32>
    %176 = vector.extract_strided_slice %175 {offsets = [0, 0], sizes = [2, 64], strides = [1, 1]} : vector<2x256xf32> to vector<2x64xf32>
    %177 = vector.extract_strided_slice %175 {offsets = [0, 64], sizes = [2, 64], strides = [1, 1]} : vector<2x256xf32> to vector<2x64xf32>
    %178 = vector.extract_strided_slice %175 {offsets = [0, 192], sizes = [2, 64], strides = [1, 1]} : vector<2x256xf32> to vector<2x64xf32>
    %179 = vector.extract_strided_slice %170 {offsets = [0, 128], sizes = [2, 64], strides = [1, 1]} : vector<2x256xf32> to vector<2x64xf32>
    %180 = math.tanh %179 : vector<2x64xf32>
    %181 = arith.mulf %177, %157 : vector<2x64xf32>
    %182 = arith.mulf %176, %180 : vector<2x64xf32>
    %183 = arith.addf %181, %182 : vector<2x64xf32>
    %184 = math.tanh %183 : vector<2x64xf32>
    %185 = arith.mulf %178, %184 : vector<2x64xf32>
    %186 = vector.extract_strided_slice %185 {offsets = [0, 0], sizes = [2, 32], strides = [1, 1]} : vector<2x64xf32> to vector<2x32xf32>
    %c6_144 = arith.constant 6 : index
    %c0_145 = arith.constant 0 : index
    %187 = vector.load %arg7[%c6_144, %c0_145] : memref<16x128xf32, #tpu.memory_space<vmem>>, vector<2x32xf32>
    tpu.vector_store %arg7[%c6_144, %c0_145], %186 {strides = array<i32>} : memref<16x128xf32, #tpu.memory_space<vmem>>, vector<2x32xf32>,
    %188 = vector.extract_strided_slice %185 {offsets = [0, 0], sizes = [2, 32], strides = [1, 1]} : vector<2x64xf32> to vector<2x32xf32>
    %c8_146 = arith.constant 8 : index
    %c64_147 = arith.constant 64 : index
    %189 = vector.load %arg7[%c8_146, %c64_147] : memref<16x128xf32, #tpu.memory_space<vmem>>, vector<2x32xf32>
    tpu.vector_store %arg7[%c8_146, %c64_147], %188 {strides = array<i32>} : memref<16x128xf32, #tpu.memory_space<vmem>>, vector<2x32xf32>,
    %190 = vector.extract_strided_slice %185 {offsets = [0, 32], sizes = [2, 32], strides = [1, 1]} : vector<2x64xf32> to vector<2x32xf32>
    %c8_148 = arith.constant 8 : index
    %c32_149 = arith.constant 32 : index
    %191 = vector.load %arg7[%c8_148, %c32_149] : memref<16x128xf32, #tpu.memory_space<vmem>>, vector<2x32xf32>
    tpu.vector_store %arg7[%c8_148, %c32_149], %190 {strides = array<i32>} : memref<16x128xf32, #tpu.memory_space<vmem>>, vector<2x32xf32>,
    %192 = vector.extract_strided_slice %185 {offsets = [0, 32], sizes = [2, 32], strides = [1, 1]} : vector<2x64xf32> to vector<2x32xf32>
    %c6_150 = arith.constant 6 : index
    %c96_151 = arith.constant 96 : index
    %193 = vector.load %arg7[%c6_150, %c96_151] : memref<16x128xf32, #tpu.memory_space<vmem>>, vector<2x32xf32>
    tpu.vector_store %arg7[%c6_150, %c96_151], %192 {strides = array<i32>} : memref<16x128xf32, #tpu.memory_space<vmem>>, vector<2x32xf32>,
    %c8_152 = arith.constant 8 : index
    %c0_153 = arith.constant 0 : index
    %194 = vector.load %arg8[%c8_152, %c0_153] : memref<16x256xf32, #tpu.memory_space<vmem>>, vector<2x256xf32>
    %cst_154 = arith.constant dense<0.000000e+00> : vector<2x256xf32>
    %195 = tpu.matmul %185, %87, %cst_154 {dimension_numbers = #tpu.dot_dimension_numbers<[1], [0], [0], [1], [0, 0, 1, 1], [], []>} : vector<2x64xf32>, vector<64x256xf32>, vector<2x256xf32> -> vector<2x256xf32>
    %196 = arith.addf %194, %195 : vector<2x256xf32>
    %197 = arith.negf %196 : vector<2x256xf32>
    %198 = math.exp %197 : vector<2x256xf32>
    %cst_155 = arith.constant 1.000000e+00 : f32
    %199 = vector.broadcast %cst_155 : f32 to vector<2x256xf32>
    %200 = arith.addf %199, %198 : vector<2x256xf32>
    %201 = arith.divf %199, %200 : vector<2x256xf32>
    %202 = vector.extract_strided_slice %201 {offsets = [0, 0], sizes = [2, 64], strides = [1, 1]} : vector<2x256xf32> to vector<2x64xf32>
    %203 = vector.extract_strided_slice %201 {offsets = [0, 64], sizes = [2, 64], strides = [1, 1]} : vector<2x256xf32> to vector<2x64xf32>
    %204 = vector.extract_strided_slice %201 {offsets = [0, 192], sizes = [2, 64], strides = [1, 1]} : vector<2x256xf32> to vector<2x64xf32>
    %205 = vector.extract_strided_slice %196 {offsets = [0, 128], sizes = [2, 64], strides = [1, 1]} : vector<2x256xf32> to vector<2x64xf32>
    %206 = math.tanh %205 : vector<2x64xf32>
    %207 = arith.mulf %203, %183 : vector<2x64xf32>
    %208 = arith.mulf %202, %206 : vector<2x64xf32>
    %209 = arith.addf %207, %208 : vector<2x64xf32>
    %210 = math.tanh %209 : vector<2x64xf32>
    %211 = arith.mulf %204, %210 : vector<2x64xf32>
    %212 = vector.extract_strided_slice %211 {offsets = [0, 0], sizes = [2, 32], strides = [1, 1]} : vector<2x64xf32> to vector<2x32xf32>
    %c8_156 = arith.constant 8 : index
    %c0_157 = arith.constant 0 : index
    %213 = vector.load %arg7[%c8_156, %c0_157] : memref<16x128xf32, #tpu.memory_space<vmem>>, vector<2x32xf32>
    tpu.vector_store %arg7[%c8_156, %c0_157], %212 {strides = array<i32>} : memref<16x128xf32, #tpu.memory_space<vmem>>, vector<2x32xf32>,
    %214 = vector.extract_strided_slice %211 {offsets = [0, 0], sizes = [2, 32], strides = [1, 1]} : vector<2x64xf32> to vector<2x32xf32>
    %c6_158 = arith.constant 6 : index
    %c64_159 = arith.constant 64 : index
    %215 = vector.load %arg7[%c6_158, %c64_159] : memref<16x128xf32, #tpu.memory_space<vmem>>, vector<2x32xf32>
    tpu.vector_store %arg7[%c6_158, %c64_159], %214 {strides = array<i32>} : memref<16x128xf32, #tpu.memory_space<vmem>>, vector<2x32xf32>,
    %216 = vector.extract_strided_slice %211 {offsets = [0, 32], sizes = [2, 32], strides = [1, 1]} : vector<2x64xf32> to vector<2x32xf32>
    %c6_160 = arith.constant 6 : index
    %c32_161 = arith.constant 32 : index
    %217 = vector.load %arg7[%c6_160, %c32_161] : memref<16x128xf32, #tpu.memory_space<vmem>>, vector<2x32xf32>
    tpu.vector_store %arg7[%c6_160, %c32_161], %216 {strides = array<i32>} : memref<16x128xf32, #tpu.memory_space<vmem>>, vector<2x32xf32>,
    %218 = vector.extract_strided_slice %211 {offsets = [0, 32], sizes = [2, 32], strides = [1, 1]} : vector<2x64xf32> to vector<2x32xf32>
    %c8_162 = arith.constant 8 : index
    %c96_163 = arith.constant 96 : index
    %219 = vector.load %arg7[%c8_162, %c96_163] : memref<16x128xf32, #tpu.memory_space<vmem>>, vector<2x32xf32>
    tpu.vector_store %arg7[%c8_162, %c96_163], %218 {strides = array<i32>} : memref<16x128xf32, #tpu.memory_space<vmem>>, vector<2x32xf32>,
    %c10_164 = arith.constant 10 : index
    %c0_165 = arith.constant 0 : index
    %220 = vector.load %arg8[%c10_164, %c0_165] : memref<16x256xf32, #tpu.memory_space<vmem>>, vector<2x256xf32>
    %cst_166 = arith.constant dense<0.000000e+00> : vector<2x256xf32>
    %221 = tpu.matmul %211, %87, %cst_166 {dimension_numbers = #tpu.dot_dimension_numbers<[1], [0], [0], [1], [0, 0, 1, 1], [], []>} : vector<2x64xf32>, vector<64x256xf32>, vector<2x256xf32> -> vector<2x256xf32>
    %222 = arith.addf %220, %221 : vector<2x256xf32>
    %223 = arith.negf %222 : vector<2x256xf32>
    %224 = math.exp %223 : vector<2x256xf32>
    %cst_167 = arith.constant 1.000000e+00 : f32
    %225 = vector.broadcast %cst_167 : f32 to vector<2x256xf32>
    %226 = arith.addf %225, %224 : vector<2x256xf32>
    %227 = arith.divf %225, %226 : vector<2x256xf32>
    %228 = vector.extract_strided_slice %227 {offsets = [0, 0], sizes = [2, 64], strides = [1, 1]} : vector<2x256xf32> to vector<2x64xf32>
    %229 = vector.extract_strided_slice %227 {offsets = [0, 64], sizes = [2, 64], strides = [1, 1]} : vector<2x256xf32> to vector<2x64xf32>
    %230 = vector.extract_strided_slice %227 {offsets = [0, 192], sizes = [2, 64], strides = [1, 1]} : vector<2x256xf32> to vector<2x64xf32>
    %231 = vector.extract_strided_slice %222 {offsets = [0, 128], sizes = [2, 64], strides = [1, 1]} : vector<2x256xf32> to vector<2x64xf32>
    %232 = math.tanh %231 : vector<2x64xf32>
    %233 = arith.mulf %229, %209 : vector<2x64xf32>
    %234 = arith.mulf %228, %232 : vector<2x64xf32>
    %235 = arith.addf %233, %234 : vector<2x64xf32>
    %236 = math.tanh %235 : vector<2x64xf32>
    %237 = arith.mulf %230, %236 : vector<2x64xf32>
    %238 = vector.extract_strided_slice %237 {offsets = [0, 0], sizes = [2, 32], strides = [1, 1]} : vector<2x64xf32> to vector<2x32xf32>
    %c10_168 = arith.constant 10 : index
    %c0_169 = arith.constant 0 : index
    %239 = vector.load %arg7[%c10_168, %c0_169] : memref<16x128xf32, #tpu.memory_space<vmem>>, vector<2x32xf32>
    tpu.vector_store %arg7[%c10_168, %c0_169], %238 {strides = array<i32>} : memref<16x128xf32, #tpu.memory_space<vmem>>, vector<2x32xf32>,
    %240 = vector.extract_strided_slice %237 {offsets = [0, 0], sizes = [2, 32], strides = [1, 1]} : vector<2x64xf32> to vector<2x32xf32>
    %c4_170 = arith.constant 4 : index
    %c64_171 = arith.constant 64 : index
    %241 = vector.load %arg7[%c4_170, %c64_171] : memref<16x128xf32, #tpu.memory_space<vmem>>, vector<2x32xf32>
    tpu.vector_store %arg7[%c4_170, %c64_171], %240 {strides = array<i32>} : memref<16x128xf32, #tpu.memory_space<vmem>>, vector<2x32xf32>,
    %242 = vector.extract_strided_slice %237 {offsets = [0, 32], sizes = [2, 32], strides = [1, 1]} : vector<2x64xf32> to vector<2x32xf32>
    %c4_172 = arith.constant 4 : index
    %c32_173 = arith.constant 32 : index
    %243 = vector.load %arg7[%c4_172, %c32_173] : memref<16x128xf32, #tpu.memory_space<vmem>>, vector<2x32xf32>
    tpu.vector_store %arg7[%c4_172, %c32_173], %242 {strides = array<i32>} : memref<16x128xf32, #tpu.memory_space<vmem>>, vector<2x32xf32>,
    %244 = vector.extract_strided_slice %237 {offsets = [0, 32], sizes = [2, 32], strides = [1, 1]} : vector<2x64xf32> to vector<2x32xf32>
    %c10_174 = arith.constant 10 : index
    %c96_175 = arith.constant 96 : index
    %245 = vector.load %arg7[%c10_174, %c96_175] : memref<16x128xf32, #tpu.memory_space<vmem>>, vector<2x32xf32>
    tpu.vector_store %arg7[%c10_174, %c96_175], %244 {strides = array<i32>} : memref<16x128xf32, #tpu.memory_space<vmem>>, vector<2x32xf32>,
    %c12_176 = arith.constant 12 : index
    %c0_177 = arith.constant 0 : index
    %246 = vector.load %arg8[%c12_176, %c0_177] : memref<16x256xf32, #tpu.memory_space<vmem>>, vector<2x256xf32>
    %cst_178 = arith.constant dense<0.000000e+00> : vector<2x256xf32>
    %247 = tpu.matmul %237, %87, %cst_178 {dimension_numbers = #tpu.dot_dimension_numbers<[1], [0], [0], [1], [0, 0, 1, 1], [], []>} : vector<2x64xf32>, vector<64x256xf32>, vector<2x256xf32> -> vector<2x256xf32>
    %248 = arith.addf %246, %247 : vector<2x256xf32>
    %249 = arith.negf %248 : vector<2x256xf32>
    %250 = math.exp %249 : vector<2x256xf32>
    %cst_179 = arith.constant 1.000000e+00 : f32
    %251 = vector.broadcast %cst_179 : f32 to vector<2x256xf32>
    %252 = arith.addf %251, %250 : vector<2x256xf32>
    %253 = arith.divf %251, %252 : vector<2x256xf32>
    %254 = vector.extract_strided_slice %253 {offsets = [0, 0], sizes = [2, 64], strides = [1, 1]} : vector<2x256xf32> to vector<2x64xf32>
    %255 = vector.extract_strided_slice %253 {offsets = [0, 64], sizes = [2, 64], strides = [1, 1]} : vector<2x256xf32> to vector<2x64xf32>
    %256 = vector.extract_strided_slice %253 {offsets = [0, 192], sizes = [2, 64], strides = [1, 1]} : vector<2x256xf32> to vector<2x64xf32>
    %257 = vector.extract_strided_slice %248 {offsets = [0, 128], sizes = [2, 64], strides = [1, 1]} : vector<2x256xf32> to vector<2x64xf32>
    %258 = math.tanh %257 : vector<2x64xf32>
    %259 = arith.mulf %255, %235 : vector<2x64xf32>
    %260 = arith.mulf %254, %258 : vector<2x64xf32>
    %261 = arith.addf %259, %260 : vector<2x64xf32>
    %262 = math.tanh %261 : vector<2x64xf32>
    %263 = arith.mulf %256, %262 : vector<2x64xf32>
    %264 = vector.extract_strided_slice %263 {offsets = [0, 0], sizes = [2, 32], strides = [1, 1]} : vector<2x64xf32> to vector<2x32xf32>
    %c12_180 = arith.constant 12 : index
    %c0_181 = arith.constant 0 : index
    %265 = vector.load %arg7[%c12_180, %c0_181] : memref<16x128xf32, #tpu.memory_space<vmem>>, vector<2x32xf32>
    tpu.vector_store %arg7[%c12_180, %c0_181], %264 {strides = array<i32>} : memref<16x128xf32, #tpu.memory_space<vmem>>, vector<2x32xf32>,
    %266 = vector.extract_strided_slice %263 {offsets = [0, 0], sizes = [2, 32], strides = [1, 1]} : vector<2x64xf32> to vector<2x32xf32>
    %c2_182 = arith.constant 2 : index
    %c64_183 = arith.constant 64 : index
    %267 = vector.load %arg7[%c2_182, %c64_183] : memref<16x128xf32, #tpu.memory_space<vmem>>, vector<2x32xf32>
    tpu.vector_store %arg7[%c2_182, %c64_183], %266 {strides = array<i32>} : memref<16x128xf32, #tpu.memory_space<vmem>>, vector<2x32xf32>,
    %268 = vector.extract_strided_slice %263 {offsets = [0, 32], sizes = [2, 32], strides = [1, 1]} : vector<2x64xf32> to vector<2x32xf32>
    %c2_184 = arith.constant 2 : index
    %c32_185 = arith.constant 32 : index
    %269 = vector.load %arg7[%c2_184, %c32_185] : memref<16x128xf32, #tpu.memory_space<vmem>>, vector<2x32xf32>
    tpu.vector_store %arg7[%c2_184, %c32_185], %268 {strides = array<i32>} : memref<16x128xf32, #tpu.memory_space<vmem>>, vector<2x32xf32>,
    %270 = vector.extract_strided_slice %263 {offsets = [0, 32], sizes = [2, 32], strides = [1, 1]} : vector<2x64xf32> to vector<2x32xf32>
    %c12_186 = arith.constant 12 : index
    %c96_187 = arith.constant 96 : index
    %271 = vector.load %arg7[%c12_186, %c96_187] : memref<16x128xf32, #tpu.memory_space<vmem>>, vector<2x32xf32>
    tpu.vector_store %arg7[%c12_186, %c96_187], %270 {strides = array<i32>} : memref<16x128xf32, #tpu.memory_space<vmem>>, vector<2x32xf32>,
    %c14_188 = arith.constant 14 : index
    %c0_189 = arith.constant 0 : index
    %272 = vector.load %arg8[%c14_188, %c0_189] : memref<16x256xf32, #tpu.memory_space<vmem>>, vector<2x256xf32>
    %cst_190 = arith.constant dense<0.000000e+00> : vector<2x256xf32>
    %273 = tpu.matmul %263, %87, %cst_190 {dimension_numbers = #tpu.dot_dimension_numbers<[1], [0], [0], [1], [0, 0, 1, 1], [], []>} : vector<2x64xf32>, vector<64x256xf32>, vector<2x256xf32> -> vector<2x256xf32>
    %274 = arith.addf %272, %273 : vector<2x256xf32>
    %275 = arith.negf %274 : vector<2x256xf32>
    %276 = math.exp %275 : vector<2x256xf32>
    %cst_191 = arith.constant 1.000000e+00 : f32
    %277 = vector.broadcast %cst_191 : f32 to vector<2x256xf32>
    %278 = arith.addf %277, %276 : vector<2x256xf32>
    %279 = arith.divf %277, %278 : vector<2x256xf32>
    %280 = vector.extract_strided_slice %279 {offsets = [0, 0], sizes = [2, 64], strides = [1, 1]} : vector<2x256xf32> to vector<2x64xf32>
    %281 = vector.extract_strided_slice %279 {offsets = [0, 64], sizes = [2, 64], strides = [1, 1]} : vector<2x256xf32> to vector<2x64xf32>
    %282 = vector.extract_strided_slice %279 {offsets = [0, 192], sizes = [2, 64], strides = [1, 1]} : vector<2x256xf32> to vector<2x64xf32>
    %283 = vector.extract_strided_slice %274 {offsets = [0, 128], sizes = [2, 64], strides = [1, 1]} : vector<2x256xf32> to vector<2x64xf32>
    %284 = math.tanh %283 : vector<2x64xf32>
    %285 = arith.mulf %281, %261 : vector<2x64xf32>
    %286 = arith.mulf %280, %284 : vector<2x64xf32>
    %287 = arith.addf %285, %286 : vector<2x64xf32>
    %288 = math.tanh %287 : vector<2x64xf32>
    %289 = arith.mulf %282, %288 : vector<2x64xf32>
    %290 = vector.extract_strided_slice %289 {offsets = [0, 0], sizes = [2, 32], strides = [1, 1]} : vector<2x64xf32> to vector<2x32xf32>
    %c14_192 = arith.constant 14 : index
    %c0_193 = arith.constant 0 : index
    %291 = vector.load %arg7[%c14_192, %c0_193] : memref<16x128xf32, #tpu.memory_space<vmem>>, vector<2x32xf32>
    tpu.vector_store %arg7[%c14_192, %c0_193], %290 {strides = array<i32>} : memref<16x128xf32, #tpu.memory_space<vmem>>, vector<2x32xf32>,
    %292 = vector.extract_strided_slice %289 {offsets = [0, 0], sizes = [2, 32], strides = [1, 1]} : vector<2x64xf32> to vector<2x32xf32>
    %c0_194 = arith.constant 0 : index
    %c64_195 = arith.constant 64 : index
    %293 = vector.load %arg7[%c0_194, %c64_195] : memref<16x128xf32, #tpu.memory_space<vmem>>, vector<2x32xf32>
    tpu.vector_store %arg7[%c0_194, %c64_195], %292 {strides = array<i32>} : memref<16x128xf32, #tpu.memory_space<vmem>>, vector<2x32xf32>,
    %294 = vector.extract_strided_slice %289 {offsets = [0, 32], sizes = [2, 32], strides = [1, 1]} : vector<2x64xf32> to vector<2x32xf32>
    %c0_196 = arith.constant 0 : index
    %c32_197 = arith.constant 32 : index
    %295 = vector.load %arg7[%c0_196, %c32_197] : memref<16x128xf32, #tpu.memory_space<vmem>>, vector<2x32xf32>
    tpu.vector_store %arg7[%c0_196, %c32_197], %294 {strides = array<i32>} : memref<16x128xf32, #tpu.memory_space<vmem>>, vector<2x32xf32>,
    %296 = vector.extract_strided_slice %289 {offsets = [0, 32], sizes = [2, 32], strides = [1, 1]} : vector<2x64xf32> to vector<2x32xf32>
    %c14_198 = arith.constant 14 : index
    %c96_199 = arith.constant 96 : index
    %297 = vector.load %arg7[%c14_198, %c96_199] : memref<16x128xf32, #tpu.memory_space<vmem>>, vector<2x32xf32>
    tpu.vector_store %arg7[%c14_198, %c96_199], %296 {strides = array<i32>} : memref<16x128xf32, #tpu.memory_space<vmem>>, vector<2x32xf32>,
    %c0_200 = arith.constant 0 : index
    %c0_201 = arith.constant 0 : index
    %298 = vector.load %arg7[%c0_200, %c0_201] : memref<16x128xf32, #tpu.memory_space<vmem>>, vector<16x128xf32>
    %c128 = arith.constant 128 : index
    %c0_202 = arith.constant 0 : index
    %299 = vector.load %arg3[%c128, %c0_202] : memref<336x256xf32, #tpu.memory_space<vmem>>, vector<128x256xf32>
    %cst_203 = arith.constant dense<0.000000e+00> : vector<16x256xf32>
    %300 = tpu.matmul %298, %299, %cst_203 {dimension_numbers = #tpu.dot_dimension_numbers<[1], [0], [0], [1], [0, 0, 1, 1], [], []>} : vector<16x128xf32>, vector<128x256xf32>, vector<16x256xf32> -> vector<16x256xf32>
    %c328 = arith.constant 328 : index
    %c0_204 = arith.constant 0 : index
    %301 = vector.load %arg3[%c328, %c0_204] : memref<336x256xf32, #tpu.memory_space<vmem>>, vector<1x256xf32>
    %302 = vector.broadcast %301 : vector<1x256xf32> to vector<16x256xf32>
    %303 = arith.addf %300, %302 : vector<16x256xf32>
    %c0_205 = arith.constant 0 : index
    %c0_206 = arith.constant 0 : index
    %304 = vector.load %arg8[%c0_205, %c0_206] : memref<16x256xf32, #tpu.memory_space<vmem>>, vector<16x256xf32>
    tpu.vector_store %arg8[%c0_205, %c0_206], %303 {strides = array<i32>} : memref<16x256xf32, #tpu.memory_space<vmem>>, vector<16x256xf32>,
    %c256 = arith.constant 256 : index
    %c0_207 = arith.constant 0 : index
    %305 = vector.load %arg3[%c256, %c0_207] : memref<336x256xf32, #tpu.memory_space<vmem>>, vector<64x256xf32>
    %cst_208 = arith.constant 0.000000e+00 : f32
    %306 = vector.broadcast %cst_208 : f32 to vector<2x64xf32>
    %cst_209 = arith.constant 0.000000e+00 : f32
    %307 = vector.broadcast %cst_209 : f32 to vector<2x64xf32>
    %c0_210 = arith.constant 0 : index
    %c0_211 = arith.constant 0 : index
    %308 = vector.load %arg8[%c0_210, %c0_211] : memref<16x256xf32, #tpu.memory_space<vmem>>, vector<2x256xf32>
    %cst_212 = arith.constant dense<0.000000e+00> : vector<2x256xf32>
    %309 = tpu.matmul %306, %305, %cst_212 {dimension_numbers = #tpu.dot_dimension_numbers<[1], [0], [0], [1], [0, 0, 1, 1], [], []>} : vector<2x64xf32>, vector<64x256xf32>, vector<2x256xf32> -> vector<2x256xf32>
    %310 = arith.addf %308, %309 : vector<2x256xf32>
    %311 = arith.negf %310 : vector<2x256xf32>
    %312 = math.exp %311 : vector<2x256xf32>
    %cst_213 = arith.constant 1.000000e+00 : f32
    %313 = vector.broadcast %cst_213 : f32 to vector<2x256xf32>
    %314 = arith.addf %313, %312 : vector<2x256xf32>
    %315 = arith.divf %313, %314 : vector<2x256xf32>
    %316 = vector.extract_strided_slice %315 {offsets = [0, 0], sizes = [2, 64], strides = [1, 1]} : vector<2x256xf32> to vector<2x64xf32>
    %317 = vector.extract_strided_slice %315 {offsets = [0, 64], sizes = [2, 64], strides = [1, 1]} : vector<2x256xf32> to vector<2x64xf32>
    %318 = vector.extract_strided_slice %315 {offsets = [0, 192], sizes = [2, 64], strides = [1, 1]} : vector<2x256xf32> to vector<2x64xf32>
    %319 = vector.extract_strided_slice %310 {offsets = [0, 128], sizes = [2, 64], strides = [1, 1]} : vector<2x256xf32> to vector<2x64xf32>
    %320 = math.tanh %319 : vector<2x64xf32>
    %321 = arith.mulf %317, %307 : vector<2x64xf32>
    %322 = arith.mulf %316, %320 : vector<2x64xf32>
    %323 = arith.addf %321, %322 : vector<2x64xf32>
    %324 = math.tanh %323 : vector<2x64xf32>
    %325 = arith.mulf %318, %324 : vector<2x64xf32>
    %326 = vector.extract_strided_slice %325 {offsets = [0, 32], sizes = [2, 32], strides = [1, 1]} : vector<2x64xf32> to vector<2x32xf32>
    %c2_214 = arith.constant 2 : index
    %c0_215 = arith.constant 0 : index
    %327 = vector.load %arg8[%c2_214, %c0_215] : memref<16x256xf32, #tpu.memory_space<vmem>>, vector<2x256xf32>
    %cst_216 = arith.constant dense<0.000000e+00> : vector<2x256xf32>
    %328 = tpu.matmul %325, %305, %cst_216 {dimension_numbers = #tpu.dot_dimension_numbers<[1], [0], [0], [1], [0, 0, 1, 1], [], []>} : vector<2x64xf32>, vector<64x256xf32>, vector<2x256xf32> -> vector<2x256xf32>
    %329 = arith.addf %327, %328 : vector<2x256xf32>
    %330 = arith.negf %329 : vector<2x256xf32>
    %331 = math.exp %330 : vector<2x256xf32>
    %cst_217 = arith.constant 1.000000e+00 : f32
    %332 = vector.broadcast %cst_217 : f32 to vector<2x256xf32>
    %333 = arith.addf %332, %331 : vector<2x256xf32>
    %334 = arith.divf %332, %333 : vector<2x256xf32>
    %335 = vector.extract_strided_slice %334 {offsets = [0, 0], sizes = [2, 64], strides = [1, 1]} : vector<2x256xf32> to vector<2x64xf32>
    %336 = vector.extract_strided_slice %334 {offsets = [0, 64], sizes = [2, 64], strides = [1, 1]} : vector<2x256xf32> to vector<2x64xf32>
    %337 = vector.extract_strided_slice %334 {offsets = [0, 192], sizes = [2, 64], strides = [1, 1]} : vector<2x256xf32> to vector<2x64xf32>
    %338 = vector.extract_strided_slice %329 {offsets = [0, 128], sizes = [2, 64], strides = [1, 1]} : vector<2x256xf32> to vector<2x64xf32>
    %339 = math.tanh %338 : vector<2x64xf32>
    %340 = arith.mulf %336, %323 : vector<2x64xf32>
    %341 = arith.mulf %335, %339 : vector<2x64xf32>
    %342 = arith.addf %340, %341 : vector<2x64xf32>
    %343 = math.tanh %342 : vector<2x64xf32>
    %344 = arith.mulf %337, %343 : vector<2x64xf32>
    %c4_218 = arith.constant 4 : index
    %c0_219 = arith.constant 0 : index
    %345 = vector.load %arg8[%c4_218, %c0_219] : memref<16x256xf32, #tpu.memory_space<vmem>>, vector<2x256xf32>
    %cst_220 = arith.constant dense<0.000000e+00> : vector<2x256xf32>
    %346 = tpu.matmul %344, %305, %cst_220 {dimension_numbers = #tpu.dot_dimension_numbers<[1], [0], [0], [1], [0, 0, 1, 1], [], []>} : vector<2x64xf32>, vector<64x256xf32>, vector<2x256xf32> -> vector<2x256xf32>
    %347 = arith.addf %345, %346 : vector<2x256xf32>
    %348 = arith.negf %347 : vector<2x256xf32>
    %349 = math.exp %348 : vector<2x256xf32>
    %cst_221 = arith.constant 1.000000e+00 : f32
    %350 = vector.broadcast %cst_221 : f32 to vector<2x256xf32>
    %351 = arith.addf %350, %349 : vector<2x256xf32>
    %352 = arith.divf %350, %351 : vector<2x256xf32>
    %353 = vector.extract_strided_slice %352 {offsets = [0, 0], sizes = [2, 64], strides = [1, 1]} : vector<2x256xf32> to vector<2x64xf32>
    %354 = vector.extract_strided_slice %352 {offsets = [0, 64], sizes = [2, 64], strides = [1, 1]} : vector<2x256xf32> to vector<2x64xf32>
    %355 = vector.extract_strided_slice %352 {offsets = [0, 192], sizes = [2, 64], strides = [1, 1]} : vector<2x256xf32> to vector<2x64xf32>
    %356 = vector.extract_strided_slice %347 {offsets = [0, 128], sizes = [2, 64], strides = [1, 1]} : vector<2x256xf32> to vector<2x64xf32>
    %357 = math.tanh %356 : vector<2x64xf32>
    %358 = arith.mulf %354, %342 : vector<2x64xf32>
    %359 = arith.mulf %353, %357 : vector<2x64xf32>
    %360 = arith.addf %358, %359 : vector<2x64xf32>
    %361 = math.tanh %360 : vector<2x64xf32>
    %362 = arith.mulf %355, %361 : vector<2x64xf32>
    %c6_222 = arith.constant 6 : index
    %c0_223 = arith.constant 0 : index
    %363 = vector.load %arg8[%c6_222, %c0_223] : memref<16x256xf32, #tpu.memory_space<vmem>>, vector<2x256xf32>
    %cst_224 = arith.constant dense<0.000000e+00> : vector<2x256xf32>
    %364 = tpu.matmul %362, %305, %cst_224 {dimension_numbers = #tpu.dot_dimension_numbers<[1], [0], [0], [1], [0, 0, 1, 1], [], []>} : vector<2x64xf32>, vector<64x256xf32>, vector<2x256xf32> -> vector<2x256xf32>
    %365 = arith.addf %363, %364 : vector<2x256xf32>
    %366 = arith.negf %365 : vector<2x256xf32>
    %367 = math.exp %366 : vector<2x256xf32>
    %cst_225 = arith.constant 1.000000e+00 : f32
    %368 = vector.broadcast %cst_225 : f32 to vector<2x256xf32>
    %369 = arith.addf %368, %367 : vector<2x256xf32>
    %370 = arith.divf %368, %369 : vector<2x256xf32>
    %371 = vector.extract_strided_slice %370 {offsets = [0, 0], sizes = [2, 64], strides = [1, 1]} : vector<2x256xf32> to vector<2x64xf32>
    %372 = vector.extract_strided_slice %370 {offsets = [0, 64], sizes = [2, 64], strides = [1, 1]} : vector<2x256xf32> to vector<2x64xf32>
    %373 = vector.extract_strided_slice %370 {offsets = [0, 192], sizes = [2, 64], strides = [1, 1]} : vector<2x256xf32> to vector<2x64xf32>
    %374 = vector.extract_strided_slice %365 {offsets = [0, 128], sizes = [2, 64], strides = [1, 1]} : vector<2x256xf32> to vector<2x64xf32>
    %375 = math.tanh %374 : vector<2x64xf32>
    %376 = arith.mulf %372, %360 : vector<2x64xf32>
    %377 = arith.mulf %371, %375 : vector<2x64xf32>
    %378 = arith.addf %376, %377 : vector<2x64xf32>
    %379 = math.tanh %378 : vector<2x64xf32>
    %380 = arith.mulf %373, %379 : vector<2x64xf32>
    %c8_226 = arith.constant 8 : index
    %c0_227 = arith.constant 0 : index
    %381 = vector.load %arg8[%c8_226, %c0_227] : memref<16x256xf32, #tpu.memory_space<vmem>>, vector<2x256xf32>
    %cst_228 = arith.constant dense<0.000000e+00> : vector<2x256xf32>
    %382 = tpu.matmul %380, %305, %cst_228 {dimension_numbers = #tpu.dot_dimension_numbers<[1], [0], [0], [1], [0, 0, 1, 1], [], []>} : vector<2x64xf32>, vector<64x256xf32>, vector<2x256xf32> -> vector<2x256xf32>
    %383 = arith.addf %381, %382 : vector<2x256xf32>
    %384 = arith.negf %383 : vector<2x256xf32>
    %385 = math.exp %384 : vector<2x256xf32>
    %cst_229 = arith.constant 1.000000e+00 : f32
    %386 = vector.broadcast %cst_229 : f32 to vector<2x256xf32>
    %387 = arith.addf %386, %385 : vector<2x256xf32>
    %388 = arith.divf %386, %387 : vector<2x256xf32>
    %389 = vector.extract_strided_slice %388 {offsets = [0, 0], sizes = [2, 64], strides = [1, 1]} : vector<2x256xf32> to vector<2x64xf32>
    %390 = vector.extract_strided_slice %388 {offsets = [0, 64], sizes = [2, 64], strides = [1, 1]} : vector<2x256xf32> to vector<2x64xf32>
    %391 = vector.extract_strided_slice %388 {offsets = [0, 192], sizes = [2, 64], strides = [1, 1]} : vector<2x256xf32> to vector<2x64xf32>
    %392 = vector.extract_strided_slice %383 {offsets = [0, 128], sizes = [2, 64], strides = [1, 1]} : vector<2x256xf32> to vector<2x64xf32>
    %393 = math.tanh %392 : vector<2x64xf32>
    %394 = arith.mulf %390, %378 : vector<2x64xf32>
    %395 = arith.mulf %389, %393 : vector<2x64xf32>
    %396 = arith.addf %394, %395 : vector<2x64xf32>
    %397 = math.tanh %396 : vector<2x64xf32>
    %398 = arith.mulf %391, %397 : vector<2x64xf32>
    %c10_230 = arith.constant 10 : index
    %c0_231 = arith.constant 0 : index
    %399 = vector.load %arg8[%c10_230, %c0_231] : memref<16x256xf32, #tpu.memory_space<vmem>>, vector<2x256xf32>
    %cst_232 = arith.constant dense<0.000000e+00> : vector<2x256xf32>
    %400 = tpu.matmul %398, %305, %cst_232 {dimension_numbers = #tpu.dot_dimension_numbers<[1], [0], [0], [1], [0, 0, 1, 1], [], []>} : vector<2x64xf32>, vector<64x256xf32>, vector<2x256xf32> -> vector<2x256xf32>
    %401 = arith.addf %399, %400 : vector<2x256xf32>
    %402 = arith.negf %401 : vector<2x256xf32>
    %403 = math.exp %402 : vector<2x256xf32>
    %cst_233 = arith.constant 1.000000e+00 : f32
    %404 = vector.broadcast %cst_233 : f32 to vector<2x256xf32>
    %405 = arith.addf %404, %403 : vector<2x256xf32>
    %406 = arith.divf %404, %405 : vector<2x256xf32>
    %407 = vector.extract_strided_slice %406 {offsets = [0, 0], sizes = [2, 64], strides = [1, 1]} : vector<2x256xf32> to vector<2x64xf32>
    %408 = vector.extract_strided_slice %406 {offsets = [0, 64], sizes = [2, 64], strides = [1, 1]} : vector<2x256xf32> to vector<2x64xf32>
    %409 = vector.extract_strided_slice %406 {offsets = [0, 192], sizes = [2, 64], strides = [1, 1]} : vector<2x256xf32> to vector<2x64xf32>
    %410 = vector.extract_strided_slice %401 {offsets = [0, 128], sizes = [2, 64], strides = [1, 1]} : vector<2x256xf32> to vector<2x64xf32>
    %411 = math.tanh %410 : vector<2x64xf32>
    %412 = arith.mulf %408, %396 : vector<2x64xf32>
    %413 = arith.mulf %407, %411 : vector<2x64xf32>
    %414 = arith.addf %412, %413 : vector<2x64xf32>
    %415 = math.tanh %414 : vector<2x64xf32>
    %416 = arith.mulf %409, %415 : vector<2x64xf32>
    %c12_234 = arith.constant 12 : index
    %c0_235 = arith.constant 0 : index
    %417 = vector.load %arg8[%c12_234, %c0_235] : memref<16x256xf32, #tpu.memory_space<vmem>>, vector<2x256xf32>
    %cst_236 = arith.constant dense<0.000000e+00> : vector<2x256xf32>
    %418 = tpu.matmul %416, %305, %cst_236 {dimension_numbers = #tpu.dot_dimension_numbers<[1], [0], [0], [1], [0, 0, 1, 1], [], []>} : vector<2x64xf32>, vector<64x256xf32>, vector<2x256xf32> -> vector<2x256xf32>
    %419 = arith.addf %417, %418 : vector<2x256xf32>
    %420 = arith.negf %419 : vector<2x256xf32>
    %421 = math.exp %420 : vector<2x256xf32>
    %cst_237 = arith.constant 1.000000e+00 : f32
    %422 = vector.broadcast %cst_237 : f32 to vector<2x256xf32>
    %423 = arith.addf %422, %421 : vector<2x256xf32>
    %424 = arith.divf %422, %423 : vector<2x256xf32>
    %425 = vector.extract_strided_slice %424 {offsets = [0, 0], sizes = [2, 64], strides = [1, 1]} : vector<2x256xf32> to vector<2x64xf32>
    %426 = vector.extract_strided_slice %424 {offsets = [0, 64], sizes = [2, 64], strides = [1, 1]} : vector<2x256xf32> to vector<2x64xf32>
    %427 = vector.extract_strided_slice %424 {offsets = [0, 192], sizes = [2, 64], strides = [1, 1]} : vector<2x256xf32> to vector<2x64xf32>
    %428 = vector.extract_strided_slice %419 {offsets = [0, 128], sizes = [2, 64], strides = [1, 1]} : vector<2x256xf32> to vector<2x64xf32>
    %429 = math.tanh %428 : vector<2x64xf32>
    %430 = arith.mulf %426, %414 : vector<2x64xf32>
    %431 = arith.mulf %425, %429 : vector<2x64xf32>
    %432 = arith.addf %430, %431 : vector<2x64xf32>
    %433 = math.tanh %432 : vector<2x64xf32>
    %434 = arith.mulf %427, %433 : vector<2x64xf32>
    %c14_238 = arith.constant 14 : index
    %c0_239 = arith.constant 0 : index
    %435 = vector.load %arg8[%c14_238, %c0_239] : memref<16x256xf32, #tpu.memory_space<vmem>>, vector<2x256xf32>
    %cst_240 = arith.constant dense<0.000000e+00> : vector<2x256xf32>
    %436 = tpu.matmul %434, %305, %cst_240 {dimension_numbers = #tpu.dot_dimension_numbers<[1], [0], [0], [1], [0, 0, 1, 1], [], []>} : vector<2x64xf32>, vector<64x256xf32>, vector<2x256xf32> -> vector<2x256xf32>
    %437 = arith.addf %435, %436 : vector<2x256xf32>
    %438 = arith.negf %437 : vector<2x256xf32>
    %439 = math.exp %438 : vector<2x256xf32>
    %cst_241 = arith.constant 1.000000e+00 : f32
    %440 = vector.broadcast %cst_241 : f32 to vector<2x256xf32>
    %441 = arith.addf %440, %439 : vector<2x256xf32>
    %442 = arith.divf %440, %441 : vector<2x256xf32>
    %443 = vector.extract_strided_slice %442 {offsets = [0, 0], sizes = [2, 64], strides = [1, 1]} : vector<2x256xf32> to vector<2x64xf32>
    %444 = vector.extract_strided_slice %442 {offsets = [0, 64], sizes = [2, 64], strides = [1, 1]} : vector<2x256xf32> to vector<2x64xf32>
    %445 = vector.extract_strided_slice %442 {offsets = [0, 192], sizes = [2, 64], strides = [1, 1]} : vector<2x256xf32> to vector<2x64xf32>
    %446 = vector.extract_strided_slice %437 {offsets = [0, 128], sizes = [2, 64], strides = [1, 1]} : vector<2x256xf32> to vector<2x64xf32>
    %447 = math.tanh %446 : vector<2x64xf32>
    %448 = arith.mulf %444, %432 : vector<2x64xf32>
    %449 = arith.mulf %443, %447 : vector<2x64xf32>
    %450 = arith.addf %448, %449 : vector<2x64xf32>
    %451 = math.tanh %450 : vector<2x64xf32>
    %452 = arith.mulf %445, %451 : vector<2x64xf32>
    %453 = vector.extract_strided_slice %452 {offsets = [0, 0], sizes = [2, 32], strides = [1, 1]} : vector<2x64xf32> to vector<2x32xf32>
    %c64_242 = arith.constant 64 : index
    %c0_243 = arith.constant 0 : index
    %454 = vector.load %arg4[%c64_242, %c0_243] : memref<65x4xf32, #tpu.memory_space<vmem>>, vector<1x4xf32>
    %c0_244 = arith.constant 0 : index
    %c0_245 = arith.constant 0 : index
    %455 = vector.load %arg4[%c0_244, %c0_245] : memref<65x4xf32, #tpu.memory_space<vmem>>, vector<32x4xf32>
    %cst_246 = arith.constant dense<0.000000e+00> : vector<2x4xf32>
    %456 = tpu.matmul %453, %455, %cst_246 {dimension_numbers = #tpu.dot_dimension_numbers<[1], [0], [0], [1], [0, 0, 1, 1], [], []>} : vector<2x32xf32>, vector<32x4xf32>, vector<2x4xf32> -> vector<2x4xf32>
    %457 = vector.broadcast %454 : vector<1x4xf32> to vector<2x4xf32>
    %458 = arith.addf %457, %456 : vector<2x4xf32>
    %c32_247 = arith.constant 32 : index
    %c0_248 = arith.constant 0 : index
    %459 = vector.load %arg4[%c32_247, %c0_248] : memref<65x4xf32, #tpu.memory_space<vmem>>, vector<32x4xf32>
    %cst_249 = arith.constant dense<0.000000e+00> : vector<2x4xf32>
    %460 = tpu.matmul %326, %459, %cst_249 {dimension_numbers = #tpu.dot_dimension_numbers<[1], [0], [0], [1], [0, 0, 1, 1], [], []>} : vector<2x32xf32>, vector<32x4xf32>, vector<2x4xf32> -> vector<2x4xf32>
    %461 = arith.addf %458, %460 : vector<2x4xf32>
    %c0_250 = arith.constant 0 : index
    %c0_251 = arith.constant 0 : index
    %462 = vector.load %arg5[%c0_250, %c0_251] : memref<2x4xf32, #tpu.memory_space<vmem>>, vector<2x4xf32>
    tpu.vector_store %arg5[%c0_250, %c0_251], %461 {strides = array<i32>} : memref<2x4xf32, #tpu.memory_space<vmem>>, vector<2x4xf32>,
    return
  }
  func.func @transform_0(%arg0: i32, %arg1: memref<2x8xi32, #tpu.memory_space<smem>>) -> (i32, i32) {
    %c0_i32 = arith.constant 0 : i32
    %c0_i32_0 = arith.constant 0 : i32
    %c0_i32_1 = arith.constant 0 : i32
    return %c0_i32, %c0_i32_0 : i32, i32
  }
  func.func @transform_1(%arg0: i32, %arg1: memref<2x8xi32, #tpu.memory_space<smem>>) -> (i32, i32) {
    %c0_i32 = arith.constant 0 : i32
    %c0_i32_0 = arith.constant 0 : i32
    %c0_i32_1 = arith.constant 0 : i32
    return %c0_i32, %c0_i32_0 : i32, i32
  }
  func.func @transform_2(%arg0: i32, %arg1: memref<2x8xi32, #tpu.memory_space<smem>>) -> (i32, i32) {
    %c0_i32 = arith.constant 0 : i32
    %c0_i32_0 = arith.constant 0 : i32
    %c0_i32_1 = arith.constant 0 : i32
    return %c0_i32, %c0_i32_0 : i32, i32
  }
  func.func @transform_3(%arg0: i32, %arg1: memref<2x8xi32, #tpu.memory_space<smem>>) -> (i32, i32) {
    %c0_i32 = arith.constant 0 : i32
    %c0_i32_0 = arith.constant 0 : i32
    %c0_i32_1 = arith.constant 0 : i32
    return %c0_i32, %c0_i32_0 : i32, i32
  }
}

</mosaic_0001>

<llo_original>
// kernel: tpu_custom_call.1
$region0: #{tpu_custom_call.1}
  #allocation0 [shape = 'u32[]', space=smem, size = 0x4, offset = 0x4, fixed_abs, tag = 'smem constant byte address 0x4 - core index']
  #allocation1 [shape = 'u32[72,128]{1,0:T(1,128)}', space=vmem, size = 0x9000, scoped, tag = 'internal scratch']
  #allocation2 [shape = 'f32[16,64]{1,0:T(8,128)}', space=vmem, size = 0x2000, scoped, tag = 'scratch operand']
  #allocation3 [shape = 'f32[16,128]{1,0:T(8,128)}', space=vmem, size = 0x2000, scoped, tag = 'scratch operand']
  #allocation4 [shape = 'f32[16,256]{1,0:T(8,128)}', space=vmem, size = 0x4000, scoped, tag = 'scratch operand']
  #allocation5 [shape = 's32[1]{0}', space=sflag, size = 0x4, scoped, tag = 'scoped memory for tpu_custom_call.1']
  #allocation6 [shape = 'u8[1024]{0}', space=smem, size = 0x400, scoped, tag = 'prefetched SMEM operand 0']
  %s0 = inlined_call_operand.vmem [shape: s32[2,8], index: 0, kind: input, shape index: {}]
  %s1 = inlined_call_operand.vmem [shape: f32[50,32], index: 1, kind: input, shape index: {}]
  %s2 = inlined_call_operand.hbm [shape: f32[336,256], index: 2, kind: input, shape index: {}]
  %s3 = inlined_call_operand.vmem [shape: f32[65,4], index: 3, kind: input, shape index: {}]
  %s4 = inlined_call_operand.hbm [shape: f32[2,4], index: 4, kind: output, shape index: {}]
  %s5 = sld [smem:[#allocation0]]
  $region26: #{tpu_custom_call.1} parent=0
    _
  %s7 = ssub.s32 1, %s5
  %s8 = scalar_select 0, %s7, %s5
  %s10 = sshll.u32 %s0, 4
  %s11 = int_to_ptr.vmem [resolvable:$true] %s10
  %13 = dma.vmem_to_smem %s11, 32, [#allocation6], [#allocation5]
  %15 = dma.done [#allocation5], 32
  %16 = sfence
  $region1: #{tpu_custom_call.1} parent=0
    #allocation7 [shape = 'u8[344064]{0}', space=vmem, size = 0x54000, scoped, tag = 'input window, operand 2, single buffered']
    #allocation8 [shape = 's32[1]{0}', space=sflag, size = 0x4, scoped, tag = 'scoped memory for tpu_custom_call.1']
    #allocation9 [shape = 's32[1]{0}', space=sflag, size = 0x4, scoped, tag = 'scoped memory for tpu_custom_call.1']
    #allocation10 [shape = 'u8[1024]{0}', space=vmem, size = 0x400, scoped, tag = 'output window, operand 0, single buffered']
    %17 = vsyncpa [#allocation8], 0
    %18 = vsyncpa [#allocation9], 0
    // Predicated region
    $region2: #{tpu_custom_call.1} parent=1 // pred_check
      _
    $region3: #{tpu_custom_call.1} parent=1 // pred_check_branch
      %20 = sbr.rel (0) target = $region5
    $region4: #{tpu_custom_call.1} parent=1 // pred_region
      _
    $region5: #{tpu_custom_call.1} parent=1 // pred_fallthru
      _
    // Predicated region
    $region6: #{tpu_custom_call.1} parent=1 // pred_check
      _
    $region7: #{tpu_custom_call.1} parent=1 // pred_check_branch
      %22 = sbr.rel (0) target = $region9
    $region8: #{tpu_custom_call.1} parent=1 // pred_region
      %24 = vsyncadd [#allocation8], 0
      %s25 = sshll.u32 %s2, 4
      %s26 = int_to_ptr.hbm [resolvable:$true] %s25
      %s27 = sshll.u32 [#allocation7], 4
      %s28 = int_to_ptr.vmem [resolvable:$true] %s27
      %33 = dma.hbm_to_vmem [thread:$0]  %s26, 10752, %s28, [#allocation8], 256, 256, 16
    $region9: #{tpu_custom_call.1} parent=1 // pred_fallthru
      _
    // Predicated region
    $region10: #{tpu_custom_call.1} parent=1 // pred_check
      _
    $region11: #{tpu_custom_call.1} parent=1 // pred_check_branch
      %35 = sbr.rel (0) target = $region13
    $region12: #{tpu_custom_call.1} parent=1 // pred_region
      _
    $region13: #{tpu_custom_call.1} parent=1 // pred_fallthru
      _
    // Predicated region
    $region14: #{tpu_custom_call.1} parent=1 // pred_check
      _
    $region15: #{tpu_custom_call.1} parent=1 // pred_check_branch
      %37 = sbr.rel (0) target = $region17
    $region16: #{tpu_custom_call.1} parent=1 // pred_region
      %39 = dma.done [#allocation8], 10752
    $region17: #{tpu_custom_call.1} parent=1 // pred_fallthru
      _
    %s40 = sld [smem:[#allocation6]]
    %s41 = scalar_lea.vmem %s1, %s40
    %v42 = vld [vmem:[%s41] sm:$0x1]
    %vm43 = vcmask 253952
    %44 = vst.msk [vmem:[#allocation2] sm:$0x1] %vm43, %v42
    %46 = vrot.lane.b32.xlu0 %v42, 32
    %v47 = vpop.permute.xlu0 %46
    %vm49 = vcmask 516352
    %50 = vst.msk [vmem:[#allocation2 + $0xe] sm:$0x1] %vm49, %v47
    %s51 = sld [smem:[#allocation6 + $0x80]]
    %s52 = scalar_lea.vmem %s1, %s51
    %v53 = vld [vmem:[%s52] sm:$0x1]
    %54 = vst.msk [vmem:[#allocation2 + $0x1] sm:$0x1] %vm43, %v53
    %56 = vrot.lane.b32.xlu0 %v53, 32
    %v57 = vpop.permute.xlu0 %56
    %59 = vst.msk [vmem:[#allocation2 + $0xf] sm:$0x1] %vm49, %v57
    %s60 = sld [smem:[#allocation6 + $0x1]]
    %s61 = scalar_lea.vmem %s1, %s60
    %v62 = vld [vmem:[%s61] sm:$0x1]
    %63 = vst.msk [vmem:[#allocation2 + $0x2] sm:$0x1] %vm43, %v62
    %65 = vrot.lane.b32.xlu0 %v62, 32
    %v66 = vpop.permute.xlu0 %65
    %68 = vst.msk [vmem:[#allocation2 + $0xc] sm:$0x1] %vm49, %v66
    %s69 = sld [smem:[#allocation6 + $0x81]]
    %s70 = scalar_lea.vmem %s1, %s69
    %v71 = vld [vmem:[%s70] sm:$0x1]
    %72 = vst.msk [vmem:[#allocation2 + $0x3] sm:$0x1] %vm43, %v71
    %74 = vrot.lane.b32.xlu0 %v71, 32
    %v75 = vpop.permute.xlu0 %74
    %77 = vst.msk [vmem:[#allocation2 + $0xd] sm:$0x1] %vm49, %v75
    %s78 = sld [smem:[#allocation6 + $0x2]]
    %s79 = scalar_lea.vmem %s1, %s78
    %v80 = vld [vmem:[%s79] sm:$0x1]
    %81 = vst.msk [vmem:[#allocation2 + $0x4] sm:$0x1] %vm43, %v80
    %83 = vrot.lane.b32.xlu0 %v80, 32
    %v84 = vpop.permute.xlu0 %83
    %86 = vst.msk [vmem:[#allocation2 + $0xa] sm:$0x1] %vm49, %v84
    %s87 = sld [smem:[#allocation6 + $0x82]]
    %s88 = scalar_lea.vmem %s1, %s87
    %v89 = vld [vmem:[%s88] sm:$0x1]
    %90 = vst.msk [vmem:[#allocation2 + $0x5] sm:$0x1] %vm43, %v89
    %92 = vrot.lane.b32.xlu0 %v89, 32
    %v93 = vpop.permute.xlu0 %92
    %95 = vst.msk [vmem:[#allocation2 + $0xb] sm:$0x1] %vm49, %v93
    %s96 = sld [smem:[#allocation6 + $0x3]]
    %s97 = scalar_lea.vmem %s1, %s96
    %v98 = vld [vmem:[%s97] sm:$0x1]
    %99 = vst.msk [vmem:[#allocation2 + $0x6] sm:$0x1] %vm43, %v98
    %101 = vrot.lane.b32.xlu0 %v98, 32
    %v102 = vpop.permute.xlu0 %101
    %104 = vst.msk [vmem:[#allocation2 + $0x8] sm:$0x1] %vm49, %v102
    %s105 = sld [smem:[#allocation6 + $0x83]]
    %s106 = scalar_lea.vmem %s1, %s105
    %v107 = vld [vmem:[%s106] sm:$0x1]
    %108 = vst.msk [vmem:[#allocation2 + $0x7] sm:$0x1] %vm43, %v107
    %110 = vrot.lane.b32.xlu0 %v107, 32
    %v111 = vpop.permute.xlu0 %110
    %113 = vst.msk [vmem:[#allocation2 + $0x9] sm:$0x1] %vm49, %v111
    %s114 = sld [smem:[#allocation6 + $0x4]]
    %s115 = scalar_lea.vmem %s1, %s114
    %v116 = vld [vmem:[%s115] sm:$0x1]
    %117 = vst.msk [vmem:[#allocation2 + $0x8] sm:$0x1] %vm43, %v116
    %119 = vrot.lane.b32.xlu0 %v116, 32
    %v120 = vpop.permute.xlu0 %119
    %122 = vst.msk [vmem:[#allocation2 + $0x6] sm:$0x1] %vm49, %v120
    %s123 = sld [smem:[#allocation6 + $0x84]]
    %s124 = scalar_lea.vmem %s1, %s123
    %v125 = vld [vmem:[%s124] sm:$0x1]
    %126 = vst.msk [vmem:[#allocation2 + $0x9] sm:$0x1] %vm43, %v125
    %128 = vrot.lane.b32.xlu0 %v125, 32
    %v129 = vpop.permute.xlu0 %128
    %131 = vst.msk [vmem:[#allocation2 + $0x7] sm:$0x1] %vm49, %v129
    %s132 = sld [smem:[#allocation6 + $0x5]]
    %s133 = scalar_lea.vmem %s1, %s132
    %v134 = vld [vmem:[%s133] sm:$0x1]
    %135 = vst.msk [vmem:[#allocation2 + $0xa] sm:$0x1] %vm43, %v134
    %137 = vrot.lane.b32.xlu0 %v134, 32
    %v138 = vpop.permute.xlu0 %137
    %140 = vst.msk [vmem:[#allocation2 + $0x4] sm:$0x1] %vm49, %v138
    %s141 = sld [smem:[#allocation6 + $0x85]]
    %s142 = scalar_lea.vmem %s1, %s141
    %v143 = vld [vmem:[%s142] sm:$0x1]
    %144 = vst.msk [vmem:[#allocation2 + $0xb] sm:$0x1] %vm43, %v143
    %146 = vrot.lane.b32.xlu0 %v143, 32
    %v147 = vpop.permute.xlu0 %146
    %149 = vst.msk [vmem:[#allocation2 + $0x5] sm:$0x1] %vm49, %v147
    %s150 = sld [smem:[#allocation6 + $0x6]]
    %s151 = scalar_lea.vmem %s1, %s150
    %v152 = vld [vmem:[%s151] sm:$0x1]
    %153 = vst.msk [vmem:[#allocation2 + $0xc] sm:$0x1] %vm43, %v152
    %155 = vrot.lane.b32.xlu0 %v152, 32
    %v156 = vpop.permute.xlu0 %155
    %158 = vst.msk [vmem:[#allocation2 + $0x2] sm:$0x1] %vm49, %v156
    %s159 = sld [smem:[#allocation6 + $0x86]]
    %s160 = scalar_lea.vmem %s1, %s159
    %v161 = vld [vmem:[%s160] sm:$0x1]
    %162 = vst.msk [vmem:[#allocation2 + $0xd] sm:$0x1] %vm43, %v161
    %164 = vrot.lane.b32.xlu0 %v161, 32
    %v165 = vpop.permute.xlu0 %164
    %167 = vst.msk [vmem:[#allocation2 + $0x3] sm:$0x1] %vm49, %v165
    %s168 = sld [smem:[#allocation6 + $0x7]]
    %s169 = scalar_lea.vmem %s1, %s168
    %v170 = vld [vmem:[%s169] sm:$0x1]
    %171 = vst.msk [vmem:[#allocation2 + $0xe] sm:$0x1] %vm43, %v170
    %173 = vrot.lane.b32.xlu0 %v170, 32
    %v174 = vpop.permute.xlu0 %173
    %176 = vst.msk [vmem:[#allocation2] sm:$0x1] %vm49, %v174
    %s177 = sld [smem:[#allocation6 + $0x87]]
    %s178 = scalar_lea.vmem %s1, %s177
    %v179 = vld [vmem:[%s178] sm:$0x1]
    %180 = vst.msk [vmem:[#allocation2 + $0xf] sm:$0x1] %vm43, %v179
    %182 = vrot.lane.b32.xlu0 %v179, 32
    %v183 = vpop.permute.xlu0 %182
    %185 = vst.msk [vmem:[#allocation2 + $0x1] sm:$0x1] %vm49, %v183
    %v186 = vld [vmem:[#allocation2] sm:$0xff]
    %v187 = vld [vmem:[#allocation2 + $0x8] sm:$0xff]
    %v188 = vld [vmem:[#allocation7] sm:$0xff]
    %v189 = vld [vmem:[#allocation7 + $0x8] sm:$0xff]
    %v190 = vld [vmem:[#allocation7 + $0x10] sm:$0xff]
    %v191 = vld [vmem:[#allocation7 + $0x18] sm:$0xff]
    %v192 = vld [vmem:[#allocation7 + $0x20] sm:$0xff]
    %v193 = vld [vmem:[#allocation7 + $0x28] sm:$0xff]
    %v194 = vld [vmem:[#allocation7 + $0x30] sm:$0xff]
    %v195 = vld [vmem:[#allocation7 + $0x38] sm:$0xff]
    %v196 = vld [vmem:[#allocation7 + $0x40] sm:$0xff]
    %v197 = vld [vmem:[#allocation7 + $0x48] sm:$0xff]
    %v198 = vld [vmem:[#allocation7 + $0x50] sm:$0xff]
    %v199 = vld [vmem:[#allocation7 + $0x58] sm:$0xff]
    %v200 = vld [vmem:[#allocation7 + $0x60] sm:$0xff]
    %v201 = vld [vmem:[#allocation7 + $0x68] sm:$0xff]
    %v202 = vld [vmem:[#allocation7 + $0x70] sm:$0xff]
    %v203 = vld [vmem:[#allocation7 + $0x78] sm:$0xff]
    %s204 = scalar_lea.vmem [#allocation7], 640
    %v205 = vld [vmem:[%s204] ss:$8 sm:$0x3]
    %v207 = vperm.slane %v205, 0
    %v208 = vperm.slane %v205, 1
    %vm211 = vcmask 523264
    %v213 = vsel %vm211, %v186, 0
    %v216 = vsel %vm211, %v187, 0
    %218 = vmatpush.msra.mxu0 0.0
    %219 = vmatpush.msra.mxu0 0.0
    %220 = vmatpush.msra.mxu0 0.0
    %221 = vmatpush.msra.mxu0 0.0
    %222 = vmatpush.msra.mxu0 0.0
    %223 = vmatpush.msra.mxu0 0.0
    %224 = vmatpush.msra.mxu0 0.0
    %225 = vmatpush.msra.mxu0 0.0
    %226 = vmatpush.msra.mxu0 %v202
    %227 = vmatpush.msra.mxu0 %v200
    %228 = vmatpush.msra.mxu0 %v198
    %229 = vmatpush.msra.mxu0 %v196
    %230 = vmatpush.msra.mxu0 %v194
    %231 = vmatpush.msra.mxu0 %v192
    %232 = vmatpush.msra.mxu0 %v190
    %233 = vmatpush.msra.mxu0 %v188
    %234 = vmatmul.f32.gmra.mxu0 %v213
    %v235 = vpop.f32.mrf.mxu0
    %v236 = vadd.f32 %v207, %v235
    %237 = vmatmul.f32.gmra.mxu0 %v216
    %v238 = vpop.f32.mrf.mxu0
    %v239 = vadd.f32 %v207, %v238
    %240 = vdwg.mxu0
    %241 = vmatpush.msra.mxu0 0.0
    %242 = vmatpush.msra.mxu0 0.0
    %243 = vmatpush.msra.mxu0 0.0
    %244 = vmatpush.msra.mxu0 0.0
    %245 = vmatpush.msra.mxu0 0.0
    %246 = vmatpush.msra.mxu0 0.0
    %247 = vmatpush.msra.mxu0 0.0
    %248 = vmatpush.msra.mxu0 0.0
    %249 = vmatpush.msra.mxu0 %v203
    %250 = vmatpush.msra.mxu0 %v201
    %251 = vmatpush.msra.mxu0 %v199
    %252 = vmatpush.msra.mxu0 %v197
    %253 = vmatpush.msra.mxu0 %v195
    %254 = vmatpush.msra.mxu0 %v193
    %255 = vmatpush.msra.mxu0 %v191
    %256 = vmatpush.msra.mxu0 %v189
    %257 = vmatmul.f32.gmra.mxu0 %v213
    %v258 = vpop.f32.mrf.mxu0
    %v259 = vadd.f32 %v208, %v258
    %260 = vmatmul.f32.gmra.mxu0 %v216
    %v261 = vpop.f32.mrf.mxu0
    %v262 = vadd.f32 %v208, %v261
    %263 = vdwg.mxu0
    %264 = vst [vmem:[#allocation4] sm:$0xff] %v236
    %265 = vst [vmem:[#allocation4 + $0x8] sm:$0xff] %v259
    %266 = vst [vmem:[#allocation4 + $0x10] sm:$0xff] %v239
    %267 = vst [vmem:[#allocation4 + $0x18] sm:$0xff] %v262
    %v268 = vld [vmem:[#allocation7 + $0x80] sm:$0xff]
    %v269 = vld [vmem:[#allocation7 + $0x88] sm:$0xff]
    %v270 = vld [vmem:[#allocation7 + $0x90] sm:$0xff]
    %v271 = vld [vmem:[#allocation7 + $0x98] sm:$0xff]
    %v272 = vld [vmem:[#allocation7 + $0xa0] sm:$0xff]
    %v273 = vld [vmem:[#allocation7 + $0xa8] sm:$0xff]
    %v274 = vld [vmem:[#allocation7 + $0xb0] sm:$0xff]
    %v275 = vld [vmem:[#allocation7 + $0xb8] sm:$0xff]
    %v276 = vld [vmem:[#allocation7 + $0xc0] sm:$0xff]
    %v277 = vld [vmem:[#allocation7 + $0xc8] sm:$0xff]
    %v278 = vld [vmem:[#allocation7 + $0xd0] sm:$0xff]
    %v279 = vld [vmem:[#allocation7 + $0xd8] sm:$0xff]
    %v280 = vld [vmem:[#allocation7 + $0xe0] sm:$0xff]
    %v281 = vld [vmem:[#allocation7 + $0xe8] sm:$0xff]
    %v282 = vld [vmem:[#allocation7 + $0xf0] sm:$0xff]
    %v283 = vld [vmem:[#allocation7 + $0xf8] sm:$0xff]
    %v284 = vld [vmem:[#allocation4] sm:$0x3]
    %v285 = vld [vmem:[#allocation4 + $0x8] sm:$0x3]
    %v287 = vsel %vm211, 0.0, 0
    %289 = vmatpush.msra.mxu0 0.0
    %290 = vmatpush.msra.mxu0 0.0
    %291 = vmatpush.msra.mxu0 0.0
    %292 = vmatpush.msra.mxu0 0.0
    %293 = vmatpush.msra.mxu0 0.0
    %294 = vmatpush.msra.mxu0 0.0
    %295 = vmatpush.msra.mxu0 0.0
    %296 = vmatpush.msra.mxu0 0.0
    %297 = vmatpush.msra.mxu0 %v282
    %298 = vmatpush.msra.mxu0 %v280
    %299 = vmatpush.msra.mxu0 %v278
    %300 = vmatpush.msra.mxu0 %v276
    %301 = vmatpush.msra.mxu0 %v274
    %302 = vmatpush.msra.mxu0 %v272
    %303 = vmatpush.msra.mxu0 %v270
    %304 = vmatpush.msra.mxu0 %v268
    %305 = vmatmul.f32.gmra.mxu0 %v287
    %v306 = vpop.f32.mrf.mxu0
    %v307 = vadd.f32 0.0, %v306
    %308 = vdwg.mxu0
    %309 = vmatpush.msra.mxu0 0.0
    %310 = vmatpush.msra.mxu0 0.0
    %311 = vmatpush.msra.mxu0 0.0
    %312 = vmatpush.msra.mxu0 0.0
    %313 = vmatpush.msra.mxu0 0.0
    %314 = vmatpush.msra.mxu0 0.0
    %315 = vmatpush.msra.mxu0 0.0
    %316 = vmatpush.msra.mxu0 0.0
    %317 = vmatpush.msra.mxu0 %v283
    %318 = vmatpush.msra.mxu0 %v281
    %319 = vmatpush.msra.mxu0 %v279
    %320 = vmatpush.msra.mxu0 %v277
    %321 = vmatpush.msra.mxu0 %v275
    %322 = vmatpush.msra.mxu0 %v273
    %323 = vmatpush.msra.mxu0 %v271
    %324 = vmatpush.msra.mxu0 %v269
    %325 = vmatmul.f32.gmra.mxu0 %v287
    %v326 = vpop.f32.mrf.mxu0
    %v327 = vadd.f32 0.0, %v326
    %328 = vdwg.mxu0
    %v329 = vadd.f32 %v284, %v307
    %v330 = vadd.f32 %v285, %v327
    %v331 = vxor.u32 %v329, 2147483648
    %v332 = vxor.u32 %v330, 2147483648
    %v333 = vmul.f32 %v331, 1.442695
    %v334 = vpow.pop %v333
    %v335 = vmul.f32 %v332, 1.442695
    %v336 = vpow.pop %v335
    %v337 = vadd.f32 %v334, 1.0
    %v338 = vadd.f32 %v336, 1.0
    %v339 = vrcp.pop %v337
    %v340 = vmul.f32 %v337, %v339
    %v341 = vsub.f32 1.0, %v340
    %v342 = vmul.f32 %v339, %v341
    %v343 = vadd.f32 %v339, %v342
    %vm344 = vweird.f32 %v337
    %vm345 = vweird.f32 %v339
    %vm346 = vmor %vm344, %vm345
    %v347 = vsel %vm346, %v339, %v343
    %v348 = vand.u32 2147483647, %v337
    %vm349 = vcmp.eq.f32.partialorder %v348, 8.507059e+37
    %v350 = vand.u32 %v337, 2147483648
    %v351 = vor.u32 1.1754944e-38, %v350
    %v352 = vsel %vm349, %v351, %v347
    %v353 = vmul.f32 1.0, %v352
    %v354 = vrcp.pop %v338
    %v355 = vmul.f32 %v338, %v354
    %v356 = vsub.f32 1.0, %v355
    %v357 = vmul.f32 %v354, %v356
    %v358 = vadd.f32 %v354, %v357
    %vm359 = vweird.f32 %v338
    %vm360 = vweird.f32 %v354
    %vm361 = vmor %vm359, %vm360
    %v362 = vsel %vm361, %v354, %v358
    %v363 = vand.u32 2147483647, %v338
    %vm364 = vcmp.eq.f32.partialorder %v363, 8.507059e+37
    %v365 = vand.u32 %v338, 2147483648
    %v366 = vor.u32 1.1754944e-38, %v365
    %v367 = vsel %vm364, %v366, %v362
    %v368 = vmul.f32 1.0, %v367
    %v369 = vtanh.pop %v330
    %v370 = vmul.f32 %v353, 0.0
    %v371 = vmul.f32 %v353, %v369
    %373 = vrot.lane.b32.xlu0 %v371, 64
    %v374 = vpop.permute.xlu0 %373
    %v376 = vadd.f32 %v370, %v374
    %v377 = vtanh.pop %v376
    %v378 = vmul.f32 %v368, %v377
    %380 = vrot.lane.b32.xlu0 %v378, 64
    %v381 = vpop.permute.xlu0 %380
    %vm383 = vcmask 254976
    %384 = vst.msk [vmem:[#allocation3] sm:$0x3] %vm383, %v381
    %vm385 = vcmask 779776
    %386 = vst.msk [vmem:[#allocation3 + $0xe] sm:$0x3] %vm385, %v378
    %vm387 = vcmask 517376
    %388 = vst.msk [vmem:[#allocation3 + $0xe] sm:$0x3] %vm387, %v381
    %vm389 = vcmask 1042176
    %390 = vst.msk [vmem:[#allocation3] sm:$0x3] %vm389, %v378
    %v391 = vld [vmem:[#allocation4] sm:$0xc]
    %v392 = vld [vmem:[#allocation4 + $0x8] sm:$0xc]
    %v393 = vsel %vm211, %v381, 0
    %395 = vmatpush.msra.mxu0 0.0
    %396 = vmatpush.msra.mxu0 0.0
    %397 = vmatpush.msra.mxu0 0.0
    %398 = vmatpush.msra.mxu0 0.0
    %399 = vmatpush.msra.mxu0 0.0
    %400 = vmatpush.msra.mxu0 0.0
    %401 = vmatpush.msra.mxu0 0.0
    %402 = vmatpush.msra.mxu0 0.0
    %403 = vmatpush.msra.mxu0 %v282
    %404 = vmatpush.msra.mxu0 %v280
    %405 = vmatpush.msra.mxu0 %v278
    %406 = vmatpush.msra.mxu0 %v276
    %407 = vmatpush.msra.mxu0 %v274
    %408 = vmatpush.msra.mxu0 %v272
    %409 = vmatpush.msra.mxu0 %v270
    %410 = vmatpush.msra.mxu0 %v268
    %411 = vmatmul.f32.gmra.mxu0 %v393
    %v412 = vpop.f32.mrf.mxu0
    %v413 = vadd.f32 0.0, %v412
    %414 = vdwg.mxu0
    %415 = vmatpush.msra.mxu0 0.0
    %416 = vmatpush.msra.mxu0 0.0
    %417 = vmatpush.msra.mxu0 0.0
    %418 = vmatpush.msra.mxu0 0.0
    %419 = vmatpush.msra.mxu0 0.0
    %420 = vmatpush.msra.mxu0 0.0
    %421 = vmatpush.msra.mxu0 0.0
    %422 = vmatpush.msra.mxu0 0.0
    %423 = vmatpush.msra.mxu0 %v283
    %424 = vmatpush.msra.mxu0 %v281
    %425 = vmatpush.msra.mxu0 %v279
    %426 = vmatpush.msra.mxu0 %v277
    %427 = vmatpush.msra.mxu0 %v275
    %428 = vmatpush.msra.mxu0 %v273
    %429 = vmatpush.msra.mxu0 %v271
    %430 = vmatpush.msra.mxu0 %v269
    %431 = vmatmul.f32.gmra.mxu0 %v393
    %v432 = vpop.f32.mrf.mxu0
    %v433 = vadd.f32 0.0, %v432
    %434 = vdwg.mxu0
    %v437 = vrot.slane %v413, 6
    %v438 = vrot.slane %v433, 6
    %v441 = vadd.f32 %v391, %v437
    %v442 = vadd.f32 %v392, %v438
    %v443 = vxor.u32 %v441, 2147483648
    %v444 = vxor.u32 %v442, 2147483648
    %v445 = vmul.f32 %v443, 1.442695
    %v446 = vpow.pop %v445
    %v447 = vmul.f32 %v444, 1.442695
    %v448 = vpow.pop %v447
    %v449 = vadd.f32 %v446, 1.0
    %v450 = vadd.f32 %v448, 1.0
    %v451 = vrcp.pop %v449
    %v452 = vmul.f32 %v449, %v451
    %v453 = vsub.f32 1.0, %v452
    %v454 = vmul.f32 %v451, %v453
    %v455 = vadd.f32 %v451, %v454
    %vm456 = vweird.f32 %v449
    %vm457 = vweird.f32 %v451
    %vm458 = vmor %vm456, %vm457
    %v459 = vsel %vm458, %v451, %v455
    %v460 = vand.u32 2147483647, %v449
    %vm461 = vcmp.eq.f32.partialorder %v460, 8.507059e+37
    %v462 = vand.u32 %v449, 2147483648
    %v463 = vor.u32 1.1754944e-38, %v462
    %v464 = vsel %vm461, %v463, %v459
    %v465 = vmul.f32 1.0, %v464
    %v466 = vrcp.pop %v450
    %v467 = vmul.f32 %v450, %v466
    %v468 = vsub.f32 1.0, %v467
    %v469 = vmul.f32 %v466, %v468
    %v470 = vadd.f32 %v466, %v469
    %vm471 = vweird.f32 %v450
    %vm472 = vweird.f32 %v466
    %vm473 = vmor %vm471, %vm472
    %v474 = vsel %vm473, %v466, %v470
    %v475 = vand.u32 2147483647, %v450
    %vm476 = vcmp.eq.f32.partialorder %v475, 8.507059e+37
    %v477 = vand.u32 %v450, 2147483648
    %v478 = vor.u32 1.1754944e-38, %v477
    %v479 = vsel %vm476, %v478, %v474
    %v480 = vmul.f32 1.0, %v479
    %v481 = vtanh.pop %v442
    %v483 = vrot.slane %v376, 6
    %v485 = vmul.f32 %v465, %v483
    %v486 = vmul.f32 %v465, %v481
    %488 = vrot.lane.b32.xlu0 %v486, 64
    %v489 = vpop.permute.xlu0 %488
    %v491 = vadd.f32 %v485, %v489
    %v492 = vtanh.pop %v491
    %v493 = vmul.f32 %v480, %v492
    %495 = vrot.lane.b32.xlu0 %v493, 64
    %v496 = vpop.permute.xlu0 %495
    %vm498 = vcmask 257026
    %499 = vst.msk [vmem:[#allocation3] sm:$0xc] %vm498, %v496
    %vm500 = vcmask 781826
    %501 = vst.msk [vmem:[#allocation3 + $0xa] sm:$0xc] %vm500, %v493
    %vm502 = vcmask 519426
    %503 = vst.msk [vmem:[#allocation3 + $0xa] sm:$0xc] %vm502, %v496
    %vm504 = vcmask 1044226
    %505 = vst.msk [vmem:[#allocation3] sm:$0xc] %vm504, %v493
    %v506 = vld [vmem:[#allocation4] sm:$0x30]
    %v507 = vld [vmem:[#allocation4 + $0x8] sm:$0x30]
    %v508 = vrot.slane %v493, 2
    %509 = vrot.lane.b32.xlu0 %v508, 64
    %v510 = vpop.permute.xlu0 %509
    %v511 = vsel %vm211, %v510, 0
    %513 = vmatpush.msra.mxu0 0.0
    %514 = vmatpush.msra.mxu0 0.0
    %515 = vmatpush.msra.mxu0 0.0
    %516 = vmatpush.msra.mxu0 0.0
    %517 = vmatpush.msra.mxu0 0.0
    %518 = vmatpush.msra.mxu0 0.0
    %519 = vmatpush.msra.mxu0 0.0
    %520 = vmatpush.msra.mxu0 0.0
    %521 = vmatpush.msra.mxu0 %v282
    %522 = vmatpush.msra.mxu0 %v280
    %523 = vmatpush.msra.mxu0 %v278
    %524 = vmatpush.msra.mxu0 %v276
    %525 = vmatpush.msra.mxu0 %v274
    %526 = vmatpush.msra.mxu0 %v272
    %527 = vmatpush.msra.mxu0 %v270
    %528 = vmatpush.msra.mxu0 %v268
    %529 = vmatmul.f32.gmra.mxu0 %v511
    %v530 = vpop.f32.mrf.mxu0
    %v531 = vadd.f32 0.0, %v530
    %532 = vdwg.mxu0
    %533 = vmatpush.msra.mxu0 0.0
    %534 = vmatpush.msra.mxu0 0.0
    %535 = vmatpush.msra.mxu0 0.0
    %536 = vmatpush.msra.mxu0 0.0
    %537 = vmatpush.msra.mxu0 0.0
    %538 = vmatpush.msra.mxu0 0.0
    %539 = vmatpush.msra.mxu0 0.0
    %540 = vmatpush.msra.mxu0 0.0
    %541 = vmatpush.msra.mxu0 %v283
    %542 = vmatpush.msra.mxu0 %v281
    %543 = vmatpush.msra.mxu0 %v279
    %544 = vmatpush.msra.mxu0 %v277
    %545 = vmatpush.msra.mxu0 %v275
    %546 = vmatpush.msra.mxu0 %v273
    %547 = vmatpush.msra.mxu0 %v271
    %548 = vmatpush.msra.mxu0 %v269
    %549 = vmatmul.f32.gmra.mxu0 %v511
    %v550 = vpop.f32.mrf.mxu0
    %v551 = vadd.f32 0.0, %v550
    %552 = vdwg.mxu0
    %v555 = vrot.slane %v531, 4
    %v556 = vrot.slane %v551, 4
    %v559 = vadd.f32 %v506, %v555
    %v560 = vadd.f32 %v507, %v556
    %v561 = vxor.u32 %v559, 2147483648
    %v562 = vxor.u32 %v560, 2147483648
    %v563 = vmul.f32 %v561, 1.442695
    %v564 = vpow.pop %v563
    %v565 = vmul.f32 %v562, 1.442695
    %v566 = vpow.pop %v565
    %v567 = vadd.f32 %v564, 1.0
    %v568 = vadd.f32 %v566, 1.0
    %v569 = vrcp.pop %v567
    %v570 = vmul.f32 %v567, %v569
    %v571 = vsub.f32 1.0, %v570
    %v572 = vmul.f32 %v569, %v571
    %v573 = vadd.f32 %v569, %v572
    %vm574 = vweird.f32 %v567
    %vm575 = vweird.f32 %v569
    %vm576 = vmor %vm574, %vm575
    %v577 = vsel %vm576, %v569, %v573
    %v578 = vand.u32 2147483647, %v567
    %vm579 = vcmp.eq.f32.partialorder %v578, 8.507059e+37
    %v580 = vand.u32 %v567, 2147483648
    %v581 = vor.u32 1.1754944e-38, %v580
    %v582 = vsel %vm579, %v581, %v577
    %v583 = vmul.f32 1.0, %v582
    %v584 = vrcp.pop %v568
    %v585 = vmul.f32 %v568, %v584
    %v586 = vsub.f32 1.0, %v585
    %v587 = vmul.f32 %v584, %v586
    %v588 = vadd.f32 %v584, %v587
    %vm589 = vweird.f32 %v568
    %vm590 = vweird.f32 %v584
    %vm591 = vmor %vm589, %vm590
    %v592 = vsel %vm591, %v584, %v588
    %v593 = vand.u32 2147483647, %v568
    %vm594 = vcmp.eq.f32.partialorder %v593, 8.507059e+37
    %v595 = vand.u32 %v568, 2147483648
    %v596 = vor.u32 1.1754944e-38, %v595
    %v597 = vsel %vm594, %v596, %v592
    %v598 = vmul.f32 1.0, %v597
    %v599 = vtanh.pop %v560
    %v601 = vrot.slane %v491, 6
    %v603 = vmul.f32 %v583, %v601
    %v604 = vmul.f32 %v583, %v599
    %606 = vrot.lane.b32.xlu0 %v604, 64
    %v607 = vpop.permute.xlu0 %606
    %v609 = vadd.f32 %v603, %v607
    %v610 = vtanh.pop %v609
    %v611 = vmul.f32 %v598, %v610
    %613 = vrot.lane.b32.xlu0 %v611, 64
    %v614 = vpop.permute.xlu0 %613
    %vm616 = vcmask 259076
    %617 = vst.msk [vmem:[#allocation3] sm:$0x30] %vm616, %v614
    %vm618 = vcmask 783876
    %619 = vst.msk [vmem:[#allocation3 + $0x6] sm:$0x30] %vm618, %v611
    %vm620 = vcmask 521476
    %621 = vst.msk [vmem:[#allocation3 + $0x6] sm:$0x30] %vm620, %v614
    %vm622 = vcmask 1046276
    %623 = vst.msk [vmem:[#allocation3] sm:$0x30] %vm622, %v611
    %v624 = vld [vmem:[#allocation4] sm:$0xc0]
    %v625 = vld [vmem:[#allocation4 + $0x8] sm:$0xc0]
    %v626 = vrot.slane %v611, 4
    %627 = vrot.lane.b32.xlu0 %v626, 64
    %v628 = vpop.permute.xlu0 %627
    %v629 = vsel %vm211, %v628, 0
    %631 = vmatpush.msra.mxu0 0.0
    %632 = vmatpush.msra.mxu0 0.0
    %633 = vmatpush.msra.mxu0 0.0
    %634 = vmatpush.msra.mxu0 0.0
    %635 = vmatpush.msra.mxu0 0.0
    %636 = vmatpush.msra.mxu0 0.0
    %637 = vmatpush.msra.mxu0 0.0
    %638 = vmatpush.msra.mxu0 0.0
    %639 = vmatpush.msra.mxu0 %v282
    %640 = vmatpush.msra.mxu0 %v280
    %641 = vmatpush.msra.mxu0 %v278
    %642 = vmatpush.msra.mxu0 %v276
    %643 = vmatpush.msra.mxu0 %v274
    %644 = vmatpush.msra.mxu0 %v272
    %645 = vmatpush.msra.mxu0 %v270
    %646 = vmatpush.msra.mxu0 %v268
    %647 = vmatmul.f32.gmra.mxu0 %v629
    %v648 = vpop.f32.mrf.mxu0
    %v649 = vadd.f32 0.0, %v648
    %650 = vdwg.mxu0
    %651 = vmatpush.msra.mxu0 0.0
    %652 = vmatpush.msra.mxu0 0.0
    %653 = vmatpush.msra.mxu0 0.0
    %654 = vmatpush.msra.mxu0 0.0
    %655 = vmatpush.msra.mxu0 0.0
    %656 = vmatpush.msra.mxu0 0.0
    %657 = vmatpush.msra.mxu0 0.0
    %658 = vmatpush.msra.mxu0 0.0
    %659 = vmatpush.msra.mxu0 %v283
    %660 = vmatpush.msra.mxu0 %v281
    %661 = vmatpush.msra.mxu0 %v279
    %662 = vmatpush.msra.mxu0 %v277
    %663 = vmatpush.msra.mxu0 %v275
    %664 = vmatpush.msra.mxu0 %v273
    %665 = vmatpush.msra.mxu0 %v271
    %666 = vmatpush.msra.mxu0 %v269
    %667 = vmatmul.f32.gmra.mxu0 %v629
    %v668 = vpop.f32.mrf.mxu0
    %v669 = vadd.f32 0.0, %v668
    %670 = vdwg.mxu0
    %v673 = vrot.slane %v649, 2
    %v674 = vrot.slane %v669, 2
    %v677 = vadd.f32 %v624, %v673
    %v678 = vadd.f32 %v625, %v674
    %v679 = vxor.u32 %v677, 2147483648
    %v680 = vxor.u32 %v678, 2147483648
    %v681 = vmul.f32 %v679, 1.442695
    %v682 = vpow.pop %v681
    %v683 = vmul.f32 %v680, 1.442695
    %v684 = vpow.pop %v683
    %v685 = vadd.f32 %v682, 1.0
    %v686 = vadd.f32 %v684, 1.0
    %v687 = vrcp.pop %v685
    %v688 = vmul.f32 %v685, %v687
    %v689 = vsub.f32 1.0, %v688
    %v690 = vmul.f32 %v687, %v689
    %v691 = vadd.f32 %v687, %v690
    %vm692 = vweird.f32 %v685
    %vm693 = vweird.f32 %v687
    %vm694 = vmor %vm692, %vm693
    %v695 = vsel %vm694, %v687, %v691
    %v696 = vand.u32 2147483647, %v685
    %vm697 = vcmp.eq.f32.partialorder %v696, 8.507059e+37
    %v698 = vand.u32 %v685, 2147483648
    %v699 = vor.u32 1.1754944e-38, %v698
    %v700 = vsel %vm697, %v699, %v695
    %v701 = vmul.f32 1.0, %v700
    %v702 = vrcp.pop %v686
    %v703 = vmul.f32 %v686, %v702
    %v704 = vsub.f32 1.0, %v703
    %v705 = vmul.f32 %v702, %v704
    %v706 = vadd.f32 %v702, %v705
    %vm707 = vweird.f32 %v686
    %vm708 = vweird.f32 %v702
    %vm709 = vmor %vm707, %vm708
    %v710 = vsel %vm709, %v702, %v706
    %v711 = vand.u32 2147483647, %v686
    %vm712 = vcmp.eq.f32.partialorder %v711, 8.507059e+37
    %v713 = vand.u32 %v686, 2147483648
    %v714 = vor.u32 1.1754944e-38, %v713
    %v715 = vsel %vm712, %v714, %v710
    %v716 = vmul.f32 1.0, %v715
    %v717 = vtanh.pop %v678
    %v719 = vrot.slane %v609, 6
    %v721 = vmul.f32 %v701, %v719
    %v722 = vmul.f32 %v701, %v717
    %724 = vrot.lane.b32.xlu0 %v722, 64
    %v725 = vpop.permute.xlu0 %724
    %v727 = vadd.f32 %v721, %v725
    %v728 = vtanh.pop %v727
    %v729 = vmul.f32 %v716, %v728
    %731 = vrot.lane.b32.xlu0 %v729, 64
    %v732 = vpop.permute.xlu0 %731
    %vm734 = vcmask 261126
    %735 = vst.msk [vmem:[#allocation3] sm:$0xc0] %vm734, %v732
    %vm736 = vcmask 785926
    %737 = vst.msk [vmem:[#allocation3 + $0x2] sm:$0xc0] %vm736, %v729
    %vm738 = vcmask 523526
    %739 = vst.msk [vmem:[#allocation3 + $0x2] sm:$0xc0] %vm738, %v732
    %vm740 = vcmask 1048326
    %741 = vst.msk [vmem:[#allocation3] sm:$0xc0] %vm740, %v729
    %v742 = vld [vmem:[#allocation4 + $0x10] sm:$0x3]
    %v743 = vld [vmem:[#allocation4 + $0x18] sm:$0x3]
    %v744 = vrot.slane %v729, 6
    %745 = vrot.lane.b32.xlu0 %v744, 64
    %v746 = vpop.permute.xlu0 %745
    %v747 = vsel %vm211, %v746, 0
    %749 = vmatpush.msra.mxu0 0.0
    %750 = vmatpush.msra.mxu0 0.0
    %751 = vmatpush.msra.mxu0 0.0
    %752 = vmatpush.msra.mxu0 0.0
    %753 = vmatpush.msra.mxu0 0.0
    %754 = vmatpush.msra.mxu0 0.0
    %755 = vmatpush.msra.mxu0 0.0
    %756 = vmatpush.msra.mxu0 0.0
    %757 = vmatpush.msra.mxu0 %v282
    %758 = vmatpush.msra.mxu0 %v280
    %759 = vmatpush.msra.mxu0 %v278
    %760 = vmatpush.msra.mxu0 %v276
    %761 = vmatpush.msra.mxu0 %v274
    %762 = vmatpush.msra.mxu0 %v272
    %763 = vmatpush.msra.mxu0 %v270
    %764 = vmatpush.msra.mxu0 %v268
    %765 = vmatmul.f32.gmra.mxu0 %v747
    %v766 = vpop.f32.mrf.mxu0
    %v767 = vadd.f32 0.0, %v766
    %768 = vdwg.mxu0
    %769 = vmatpush.msra.mxu0 0.0
    %770 = vmatpush.msra.mxu0 0.0
    %771 = vmatpush.msra.mxu0 0.0
    %772 = vmatpush.msra.mxu0 0.0
    %773 = vmatpush.msra.mxu0 0.0
    %774 = vmatpush.msra.mxu0 0.0
    %775 = vmatpush.msra.mxu0 0.0
    %776 = vmatpush.msra.mxu0 0.0
    %777 = vmatpush.msra.mxu0 %v283
    %778 = vmatpush.msra.mxu0 %v281
    %779 = vmatpush.msra.mxu0 %v279
    %780 = vmatpush.msra.mxu0 %v277
    %781 = vmatpush.msra.mxu0 %v275
    %782 = vmatpush.msra.mxu0 %v273
    %783 = vmatpush.msra.mxu0 %v271
    %784 = vmatpush.msra.mxu0 %v269
    %785 = vmatmul.f32.gmra.mxu0 %v747
    %v786 = vpop.f32.mrf.mxu0
    %v787 = vadd.f32 0.0, %v786
    %788 = vdwg.mxu0
    %v789 = vadd.f32 %v742, %v767
    %v790 = vadd.f32 %v743, %v787
    %v791 = vxor.u32 %v789, 2147483648
    %v792 = vxor.u32 %v790, 2147483648
    %v793 = vmul.f32 %v791, 1.442695
    %v794 = vpow.pop %v793
    %v795 = vmul.f32 %v792, 1.442695
    %v796 = vpow.pop %v795
    %v797 = vadd.f32 %v794, 1.0
    %v798 = vadd.f32 %v796, 1.0
    %v799 = vrcp.pop %v797
    %v800 = vmul.f32 %v797, %v799
    %v801 = vsub.f32 1.0, %v800
    %v802 = vmul.f32 %v799, %v801
    %v803 = vadd.f32 %v799, %v802
    %vm804 = vweird.f32 %v797
    %vm805 = vweird.f32 %v799
    %vm806 = vmor %vm804, %vm805
    %v807 = vsel %vm806, %v799, %v803
    %v808 = vand.u32 2147483647, %v797
    %vm809 = vcmp.eq.f32.partialorder %v808, 8.507059e+37
    %v810 = vand.u32 %v797, 2147483648
    %v811 = vor.u32 1.1754944e-38, %v810
    %v812 = vsel %vm809, %v811, %v807
    %v813 = vmul.f32 1.0, %v812
    %v814 = vrcp.pop %v798
    %v815 = vmul.f32 %v798, %v814
    %v816 = vsub.f32 1.0, %v815
    %v817 = vmul.f32 %v814, %v816
    %v818 = vadd.f32 %v814, %v817
    %vm819 = vweird.f32 %v798
    %vm820 = vweird.f32 %v814
    %vm821 = vmor %vm819, %vm820
    %v822 = vsel %vm821, %v814, %v818
    %v823 = vand.u32 2147483647, %v798
    %vm824 = vcmp.eq.f32.partialorder %v823, 8.507059e+37
    %v825 = vand.u32 %v798, 2147483648
    %v826 = vor.u32 1.1754944e-38, %v825
    %v827 = vsel %vm824, %v826, %v822
    %v828 = vmul.f32 1.0, %v827
    %v829 = vtanh.pop %v790
    %v831 = vrot.slane %v727, 6
    %v833 = vmul.f32 %v813, %v831
    %v834 = vmul.f32 %v813, %v829
    %836 = vrot.lane.b32.xlu0 %v834, 64
    %v837 = vpop.permute.xlu0 %836
    %v839 = vadd.f32 %v833, %v837
    %v840 = vtanh.pop %v839
    %v841 = vmul.f32 %v828, %v840
    %843 = vrot.lane.b32.xlu0 %v841, 64
    %v844 = vpop.permute.xlu0 %843
    %846 = vst.msk [vmem:[#allocation3 + $0x8] sm:$0x3] %vm383, %v844
    %847 = vst.msk [vmem:[#allocation3 + $0x6] sm:$0x3] %vm385, %v841
    %848 = vst.msk [vmem:[#allocation3 + $0x6] sm:$0x3] %vm387, %v844
    %849 = vst.msk [vmem:[#allocation3 + $0x8] sm:$0x3] %vm389, %v841
    %v850 = vld [vmem:[#allocation4 + $0x10] sm:$0xc]
    %v851 = vld [vmem:[#allocation4 + $0x18] sm:$0xc]
    %v852 = vsel %vm211, %v844, 0
    %854 = vmatpush.msra.mxu0 0.0
    %855 = vmatpush.msra.mxu0 0.0
    %856 = vmatpush.msra.mxu0 0.0
    %857 = vmatpush.msra.mxu0 0.0
    %858 = vmatpush.msra.mxu0 0.0
    %859 = vmatpush.msra.mxu0 0.0
    %860 = vmatpush.msra.mxu0 0.0
    %861 = vmatpush.msra.mxu0 0.0
    %862 = vmatpush.msra.mxu0 %v282
    %863 = vmatpush.msra.mxu0 %v280
    %864 = vmatpush.msra.mxu0 %v278
    %865 = vmatpush.msra.mxu0 %v276
    %866 = vmatpush.msra.mxu0 %v274
    %867 = vmatpush.msra.mxu0 %v272
    %868 = vmatpush.msra.mxu0 %v270
    %869 = vmatpush.msra.mxu0 %v268
    %870 = vmatmul.f32.gmra.mxu0 %v852
    %v871 = vpop.f32.mrf.mxu0
    %v872 = vadd.f32 0.0, %v871
    %873 = vdwg.mxu0
    %874 = vmatpush.msra.mxu0 0.0
    %875 = vmatpush.msra.mxu0 0.0
    %876 = vmatpush.msra.mxu0 0.0
    %877 = vmatpush.msra.mxu0 0.0
    %878 = vmatpush.msra.mxu0 0.0
    %879 = vmatpush.msra.mxu0 0.0
    %880 = vmatpush.msra.mxu0 0.0
    %881 = vmatpush.msra.mxu0 0.0
    %882 = vmatpush.msra.mxu0 %v283
    %883 = vmatpush.msra.mxu0 %v281
    %884 = vmatpush.msra.mxu0 %v279
    %885 = vmatpush.msra.mxu0 %v277
    %886 = vmatpush.msra.mxu0 %v275
    %887 = vmatpush.msra.mxu0 %v273
    %888 = vmatpush.msra.mxu0 %v271
    %889 = vmatpush.msra.mxu0 %v269
    %890 = vmatmul.f32.gmra.mxu0 %v852
    %v891 = vpop.f32.mrf.mxu0
    %v892 = vadd.f32 0.0, %v891
    %893 = vdwg.mxu0
    %v896 = vrot.slane %v872, 6
    %v897 = vrot.slane %v892, 6
    %v900 = vadd.f32 %v850, %v896
    %v901 = vadd.f32 %v851, %v897
    %v902 = vxor.u32 %v900, 2147483648
    %v903 = vxor.u32 %v901, 2147483648
    %v904 = vmul.f32 %v902, 1.442695
    %v905 = vpow.pop %v904
    %v906 = vmul.f32 %v903, 1.442695
    %v907 = vpow.pop %v906
    %v908 = vadd.f32 %v905, 1.0
    %v909 = vadd.f32 %v907, 1.0
    %v910 = vrcp.pop %v908
    %v911 = vmul.f32 %v908, %v910
    %v912 = vsub.f32 1.0, %v911
    %v913 = vmul.f32 %v910, %v912
    %v914 = vadd.f32 %v910, %v913
    %vm915 = vweird.f32 %v908
    %vm916 = vweird.f32 %v910
    %vm917 = vmor %vm915, %vm916
    %v918 = vsel %vm917, %v910, %v914
    %v919 = vand.u32 2147483647, %v908
    %vm920 = vcmp.eq.f32.partialorder %v919, 8.507059e+37
    %v921 = vand.u32 %v908, 2147483648
    %v922 = vor.u32 1.1754944e-38, %v921
    %v923 = vsel %vm920, %v922, %v918
    %v924 = vmul.f32 1.0, %v923
    %v925 = vrcp.pop %v909
    %v926 = vmul.f32 %v909, %v925
    %v927 = vsub.f32 1.0, %v926
    %v928 = vmul.f32 %v925, %v927
    %v929 = vadd.f32 %v925, %v928
    %vm930 = vweird.f32 %v909
    %vm931 = vweird.f32 %v925
    %vm932 = vmor %vm930, %vm931
    %v933 = vsel %vm932, %v925, %v929
    %v934 = vand.u32 2147483647, %v909
    %vm935 = vcmp.eq.f32.partialorder %v934, 8.507059e+37
    %v936 = vand.u32 %v909, 2147483648
    %v937 = vor.u32 1.1754944e-38, %v936
    %v938 = vsel %vm935, %v937, %v933
    %v939 = vmul.f32 1.0, %v938
    %v940 = vtanh.pop %v901
    %v942 = vrot.slane %v839, 6
    %v944 = vmul.f32 %v924, %v942
    %v945 = vmul.f32 %v924, %v940
    %947 = vrot.lane.b32.xlu0 %v945, 64
    %v948 = vpop.permute.xlu0 %947
    %v950 = vadd.f32 %v944, %v948
    %v951 = vtanh.pop %v950
    %v952 = vmul.f32 %v939, %v951
    %954 = vrot.lane.b32.xlu0 %v952, 64
    %v955 = vpop.permute.xlu0 %954
    %957 = vst.msk [vmem:[#allocation3 + $0x8] sm:$0xc] %vm498, %v955
    %958 = vst.msk [vmem:[#allocation3 + $0x2] sm:$0xc] %vm500, %v952
    %959 = vst.msk [vmem:[#allocation3 + $0x2] sm:$0xc] %vm502, %v955
    %960 = vst.msk [vmem:[#allocation3 + $0x8] sm:$0xc] %vm504, %v952
    %v961 = vld [vmem:[#allocation4 + $0x10] sm:$0x30]
    %v962 = vld [vmem:[#allocation4 + $0x18] sm:$0x30]
    %v963 = vrot.slane %v952, 2
    %964 = vrot.lane.b32.xlu0 %v963, 64
    %v965 = vpop.permute.xlu0 %964
    %v966 = vsel %vm211, %v965, 0
    %968 = vmatpush.msra.mxu0 0.0
    %969 = vmatpush.msra.mxu0 0.0
    %970 = vmatpush.msra.mxu0 0.0
    %971 = vmatpush.msra.mxu0 0.0
    %972 = vmatpush.msra.mxu0 0.0
    %973 = vmatpush.msra.mxu0 0.0
    %974 = vmatpush.msra.mxu0 0.0
    %975 = vmatpush.msra.mxu0 0.0
    %976 = vmatpush.msra.mxu0 %v282
    %977 = vmatpush.msra.mxu0 %v280
    %978 = vmatpush.msra.mxu0 %v278
    %979 = vmatpush.msra.mxu0 %v276
    %980 = vmatpush.msra.mxu0 %v274
    %981 = vmatpush.msra.mxu0 %v272
    %982 = vmatpush.msra.mxu0 %v270
    %983 = vmatpush.msra.mxu0 %v268
    %984 = vmatmul.f32.gmra.mxu0 %v966
    %v985 = vpop.f32.mrf.mxu0
    %v986 = vadd.f32 0.0, %v985
    %987 = vdwg.mxu0
    %988 = vmatpush.msra.mxu0 0.0
    %989 = vmatpush.msra.mxu0 0.0
    %990 = vmatpush.msra.mxu0 0.0
    %991 = vmatpush.msra.mxu0 0.0
    %992 = vmatpush.msra.mxu0 0.0
    %993 = vmatpush.msra.mxu0 0.0
    %994 = vmatpush.msra.mxu0 0.0
    %995 = vmatpush.msra.mxu0 0.0
    %996 = vmatpush.msra.mxu0 %v283
    %997 = vmatpush.msra.mxu0 %v281
    %998 = vmatpush.msra.mxu0 %v279
    %999 = vmatpush.msra.mxu0 %v277
    %1000 = vmatpush.msra.mxu0 %v275
    %1001 = vmatpush.msra.mxu0 %v273
    %1002 = vmatpush.msra.mxu0 %v271
    %1003 = vmatpush.msra.mxu0 %v269
    %1004 = vmatmul.f32.gmra.mxu0 %v966
    %v1005 = vpop.f32.mrf.mxu0
    %v1006 = vadd.f32 0.0, %v1005
    %1007 = vdwg.mxu0
    %v1010 = vrot.slane %v986, 4
    %v1011 = vrot.slane %v1006, 4
    %v1014 = vadd.f32 %v961, %v1010
    %v1015 = vadd.f32 %v962, %v1011
    %v1016 = vxor.u32 %v1014, 2147483648
    %v1017 = vxor.u32 %v1015, 2147483648
    %v1018 = vmul.f32 %v1016, 1.442695
    %v1019 = vpow.pop %v1018
    %v1020 = vmul.f32 %v1017, 1.442695
    %v1021 = vpow.pop %v1020
    %v1022 = vadd.f32 %v1019, 1.0
    %v1023 = vadd.f32 %v1021, 1.0
    %v1024 = vrcp.pop %v1022
    %v1025 = vmul.f32 %v1022, %v1024
    %v1026 = vsub.f32 1.0, %v1025
    %v1027 = vmul.f32 %v1024, %v1026
    %v1028 = vadd.f32 %v1024, %v1027
    %vm1029 = vweird.f32 %v1022
    %vm1030 = vweird.f32 %v1024
    %vm1031 = vmor %vm1029, %vm1030
    %v1032 = vsel %vm1031, %v1024, %v1028
    %v1033 = vand.u32 2147483647, %v1022
    %vm1034 = vcmp.eq.f32.partialorder %v1033, 8.507059e+37
    %v1035 = vand.u32 %v1022, 2147483648
    %v1036 = vor.u32 1.1754944e-38, %v1035
    %v1037 = vsel %vm1034, %v1036, %v1032
    %v1038 = vmul.f32 1.0, %v1037
    %v1039 = vrcp.pop %v1023
    %v1040 = vmul.f32 %v1023, %v1039
    %v1041 = vsub.f32 1.0, %v1040
    %v1042 = vmul.f32 %v1039, %v1041
    %v1043 = vadd.f32 %v1039, %v1042
    %vm1044 = vweird.f32 %v1023
    %vm1045 = vweird.f32 %v1039
    %vm1046 = vmor %vm1044, %vm1045
    %v1047 = vsel %vm1046, %v1039, %v1043
    %v1048 = vand.u32 2147483647, %v1023
    %vm1049 = vcmp.eq.f32.partialorder %v1048, 8.507059e+37
    %v1050 = vand.u32 %v1023, 2147483648
    %v1051 = vor.u32 1.1754944e-38, %v1050
    %v1052 = vsel %vm1049, %v1051, %v1047
    %v1053 = vmul.f32 1.0, %v1052
    %v1054 = vtanh.pop %v1015
    %v1056 = vrot.slane %v950, 6
    %v1058 = vmul.f32 %v1038, %v1056
    %v1059 = vmul.f32 %v1038, %v1054
    %1061 = vrot.lane.b32.xlu0 %v1059, 64
    %v1062 = vpop.permute.xlu0 %1061
    %v1064 = vadd.f32 %v1058, %v1062
    %v1065 = vtanh.pop %v1064
    %v1066 = vmul.f32 %v1053, %v1065
    %1068 = vrot.lane.b32.xlu0 %v1066, 64
    %v1069 = vpop.permute.xlu0 %1068
    %1071 = vst.msk [vmem:[#allocation3 + $0x8] sm:$0x30] %vm616, %v1069
    %1072 = vst.msk [vmem:[#allocation3 - $0x2] sm:$0x30] %vm618, %v1066
    %1073 = vst.msk [vmem:[#allocation3 - $0x2] sm:$0x30] %vm620, %v1069
    %1074 = vst.msk [vmem:[#allocation3 + $0x8] sm:$0x30] %vm622, %v1066
    %v1075 = vld [vmem:[#allocation4 + $0x10] sm:$0xc0]
    %v1076 = vld [vmem:[#allocation4 + $0x18] sm:$0xc0]
    %v1077 = vrot.slane %v1066, 4
    %1078 = vrot.lane.b32.xlu0 %v1077, 64
    %v1079 = vpop.permute.xlu0 %1078
    %v1080 = vsel %vm211, %v1079, 0
    %1082 = vmatpush.msra.mxu0 0.0
    %1083 = vmatpush.msra.mxu0 0.0
    %1084 = vmatpush.msra.mxu0 0.0
    %1085 = vmatpush.msra.mxu0 0.0
    %1086 = vmatpush.msra.mxu0 0.0
    %1087 = vmatpush.msra.mxu0 0.0
    %1088 = vmatpush.msra.mxu0 0.0
    %1089 = vmatpush.msra.mxu0 0.0
    %1090 = vmatpush.msra.mxu0 %v282
    %1091 = vmatpush.msra.mxu0 %v280
    %1092 = vmatpush.msra.mxu0 %v278
    %1093 = vmatpush.msra.mxu0 %v276
    %1094 = vmatpush.msra.mxu0 %v274
    %1095 = vmatpush.msra.mxu0 %v272
    %1096 = vmatpush.msra.mxu0 %v270
    %1097 = vmatpush.msra.mxu0 %v268
    %1098 = vmatmul.f32.gmra.mxu0 %v1080
    %v1099 = vpop.f32.mrf.mxu0
    %v1100 = vadd.f32 0.0, %v1099
    %1101 = vdwg.mxu0
    %1102 = vmatpush.msra.mxu0 0.0
    %1103 = vmatpush.msra.mxu0 0.0
    %1104 = vmatpush.msra.mxu0 0.0
    %1105 = vmatpush.msra.mxu0 0.0
    %1106 = vmatpush.msra.mxu0 0.0
    %1107 = vmatpush.msra.mxu0 0.0
    %1108 = vmatpush.msra.mxu0 0.0
    %1109 = vmatpush.msra.mxu0 0.0
    %1110 = vmatpush.msra.mxu0 %v283
    %1111 = vmatpush.msra.mxu0 %v281
    %1112 = vmatpush.msra.mxu0 %v279
    %1113 = vmatpush.msra.mxu0 %v277
    %1114 = vmatpush.msra.mxu0 %v275
    %1115 = vmatpush.msra.mxu0 %v273
    %1116 = vmatpush.msra.mxu0 %v271
    %1117 = vmatpush.msra.mxu0 %v269
    %1118 = vmatmul.f32.gmra.mxu0 %v1080
    %v1119 = vpop.f32.mrf.mxu0
    %v1120 = vadd.f32 0.0, %v1119
    %1121 = vdwg.mxu0
    %v1124 = vrot.slane %v1100, 2
    %v1125 = vrot.slane %v1120, 2
    %v1128 = vadd.f32 %v1075, %v1124
    %v1129 = vadd.f32 %v1076, %v1125
    %v1130 = vxor.u32 %v1128, 2147483648
    %v1131 = vxor.u32 %v1129, 2147483648
    %v1132 = vmul.f32 %v1130, 1.442695
    %v1133 = vpow.pop %v1132
    %v1134 = vmul.f32 %v1131, 1.442695
    %v1135 = vpow.pop %v1134
    %v1136 = vadd.f32 %v1133, 1.0
    %v1137 = vadd.f32 %v1135, 1.0
    %v1138 = vrcp.pop %v1136
    %v1139 = vmul.f32 %v1136, %v1138
    %v1140 = vsub.f32 1.0, %v1139
    %v1141 = vmul.f32 %v1138, %v1140
    %v1142 = vadd.f32 %v1138, %v1141
    %vm1143 = vweird.f32 %v1136
    %vm1144 = vweird.f32 %v1138
    %vm1145 = vmor %vm1143, %vm1144
    %v1146 = vsel %vm1145, %v1138, %v1142
    %v1147 = vand.u32 2147483647, %v1136
    %vm1148 = vcmp.eq.f32.partialorder %v1147, 8.507059e+37
    %v1149 = vand.u32 %v1136, 2147483648
    %v1150 = vor.u32 1.1754944e-38, %v1149
    %v1151 = vsel %vm1148, %v1150, %v1146
    %v1152 = vmul.f32 1.0, %v1151
    %v1153 = vrcp.pop %v1137
    %v1154 = vmul.f32 %v1137, %v1153
    %v1155 = vsub.f32 1.0, %v1154
    %v1156 = vmul.f32 %v1153, %v1155
    %v1157 = vadd.f32 %v1153, %v1156
    %vm1158 = vweird.f32 %v1137
    %vm1159 = vweird.f32 %v1153
    %vm1160 = vmor %vm1158, %vm1159
    %v1161 = vsel %vm1160, %v1153, %v1157
    %v1162 = vand.u32 2147483647, %v1137
    %vm1163 = vcmp.eq.f32.partialorder %v1162, 8.507059e+37
    %v1164 = vand.u32 %v1137, 2147483648
    %v1165 = vor.u32 1.1754944e-38, %v1164
    %v1166 = vsel %vm1163, %v1165, %v1161
    %v1167 = vmul.f32 1.0, %v1166
    %v1168 = vtanh.pop %v1129
    %v1170 = vrot.slane %v1064, 6
    %v1172 = vmul.f32 %v1152, %v1170
    %v1173 = vmul.f32 %v1152, %v1168
    %1175 = vrot.lane.b32.xlu0 %v1173, 64
    %v1176 = vpop.permute.xlu0 %1175
    %v1178 = vadd.f32 %v1172, %v1176
    %v1179 = vtanh.pop %v1178
    %v1180 = vmul.f32 %v1167, %v1179
    %1182 = vrot.lane.b32.xlu0 %v1180, 64
    %v1183 = vpop.permute.xlu0 %1182
    %1185 = vst.msk [vmem:[#allocation3 + $0x8] sm:$0xc0] %vm734, %v1183
    %1186 = vst.msk [vmem:[#allocation3 - $0x6] sm:$0xc0] %vm736, %v1180
    %1187 = vst.msk [vmem:[#allocation3 - $0x6] sm:$0xc0] %vm738, %v1183
    %1188 = vst.msk [vmem:[#allocation3 + $0x8] sm:$0xc0] %vm740, %v1180
    %v1189 = vld [vmem:[#allocation3] sm:$0xff]
    %v1190 = vld [vmem:[#allocation3 + $0x8] sm:$0xff]
    %v1191 = vld [vmem:[#allocation7 + $0x100] sm:$0xff]
    %v1192 = vld [vmem:[#allocation7 + $0x108] sm:$0xff]
    %v1193 = vld [vmem:[#allocation7 + $0x110] sm:$0xff]
    %v1194 = vld [vmem:[#allocation7 + $0x118] sm:$0xff]
    %v1195 = vld [vmem:[#allocation7 + $0x120] sm:$0xff]
    %v1196 = vld [vmem:[#allocation7 + $0x128] sm:$0xff]
    %v1197 = vld [vmem:[#allocation7 + $0x130] sm:$0xff]
    %v1198 = vld [vmem:[#allocation7 + $0x138] sm:$0xff]
    %v1199 = vld [vmem:[#allocation7 + $0x140] sm:$0xff]
    %v1200 = vld [vmem:[#allocation7 + $0x148] sm:$0xff]
    %v1201 = vld [vmem:[#allocation7 + $0x150] sm:$0xff]
    %v1202 = vld [vmem:[#allocation7 + $0x158] sm:$0xff]
    %v1203 = vld [vmem:[#allocation7 + $0x160] sm:$0xff]
    %v1204 = vld [vmem:[#allocation7 + $0x168] sm:$0xff]
    %v1205 = vld [vmem:[#allocation7 + $0x170] sm:$0xff]
    %v1206 = vld [vmem:[#allocation7 + $0x178] sm:$0xff]
    %v1207 = vld [vmem:[#allocation7 + $0x180] sm:$0xff]
    %v1208 = vld [vmem:[#allocation7 + $0x188] sm:$0xff]
    %v1209 = vld [vmem:[#allocation7 + $0x190] sm:$0xff]
    %v1210 = vld [vmem:[#allocation7 + $0x198] sm:$0xff]
    %v1211 = vld [vmem:[#allocation7 + $0x1a0] sm:$0xff]
    %v1212 = vld [vmem:[#allocation7 + $0x1a8] sm:$0xff]
    %v1213 = vld [vmem:[#allocation7 + $0x1b0] sm:$0xff]
    %v1214 = vld [vmem:[#allocation7 + $0x1b8] sm:$0xff]
    %v1215 = vld [vmem:[#allocation7 + $0x1c0] sm:$0xff]
    %v1216 = vld [vmem:[#allocation7 + $0x1c8] sm:$0xff]
    %v1217 = vld [vmem:[#allocation7 + $0x1d0] sm:$0xff]
    %v1218 = vld [vmem:[#allocation7 + $0x1d8] sm:$0xff]
    %v1219 = vld [vmem:[#allocation7 + $0x1e0] sm:$0xff]
    %v1220 = vld [vmem:[#allocation7 + $0x1e8] sm:$0xff]
    %v1221 = vld [vmem:[#allocation7 + $0x1f0] sm:$0xff]
    %v1222 = vld [vmem:[#allocation7 + $0x1f8] sm:$0xff]
    %s1223 = scalar_lea.vmem [#allocation7], 656
    %v1224 = vld [vmem:[%s1223] ss:$8 sm:$0x3]
    %v1226 = vperm.slane %v1224, 0
    %v1227 = vperm.slane %v1224, 1
    %1230 = vmatpush.msra.mxu0 %v1221
    %1231 = vmatpush.msra.mxu0 %v1219
    %1232 = vmatpush.msra.mxu0 %v1217
    %1233 = vmatpush.msra.mxu0 %v1215
    %1234 = vmatpush.msra.mxu0 %v1213
    %1235 = vmatpush.msra.mxu0 %v1211
    %1236 = vmatpush.msra.mxu0 %v1209
    %1237 = vmatpush.msra.mxu0 %v1207
    %1238 = vmatpush.msra.mxu0 %v1205
    %1239 = vmatpush.msra.mxu0 %v1203
    %1240 = vmatpush.msra.mxu0 %v1201
    %1241 = vmatpush.msra.mxu0 %v1199
    %1242 = vmatpush.msra.mxu0 %v1197
    %1243 = vmatpush.msra.mxu0 %v1195
    %1244 = vmatpush.msra.mxu0 %v1193
    %1245 = vmatpush.msra.mxu0 %v1191
    %1246 = vmatmul.f32.gmra.mxu0 %v1189
    %v1247 = vpop.f32.mrf.mxu0
    %v1248 = vadd.f32 %v1226, %v1247
    %1249 = vmatmul.f32.gmra.mxu0 %v1190
    %v1250 = vpop.f32.mrf.mxu0
    %v1251 = vadd.f32 %v1226, %v1250
    %1252 = vdwg.mxu0
    %1253 = vmatpush.msra.mxu0 %v1222
    %1254 = vmatpush.msra.mxu0 %v1220
    %1255 = vmatpush.msra.mxu0 %v1218
    %1256 = vmatpush.msra.mxu0 %v1216
    %1257 = vmatpush.msra.mxu0 %v1214
    %1258 = vmatpush.msra.mxu0 %v1212
    %1259 = vmatpush.msra.mxu0 %v1210
    %1260 = vmatpush.msra.mxu0 %v1208
    %1261 = vmatpush.msra.mxu0 %v1206
    %1262 = vmatpush.msra.mxu0 %v1204
    %1263 = vmatpush.msra.mxu0 %v1202
    %1264 = vmatpush.msra.mxu0 %v1200
    %1265 = vmatpush.msra.mxu0 %v1198
    %1266 = vmatpush.msra.mxu0 %v1196
    %1267 = vmatpush.msra.mxu0 %v1194
    %1268 = vmatpush.msra.mxu0 %v1192
    %1269 = vmatmul.f32.gmra.mxu0 %v1189
    %v1270 = vpop.f32.mrf.mxu0
    %v1271 = vadd.f32 %v1227, %v1270
    %1272 = vmatmul.f32.gmra.mxu0 %v1190
    %v1273 = vpop.f32.mrf.mxu0
    %v1274 = vadd.f32 %v1227, %v1273
    %1275 = vdwg.mxu0
    %1276 = vst [vmem:[#allocation4] sm:$0xff] %v1248
    %1277 = vst [vmem:[#allocation4 + $0x8] sm:$0xff] %v1271
    %1278 = vst [vmem:[#allocation4 + $0x10] sm:$0xff] %v1251
    %1279 = vst [vmem:[#allocation4 + $0x18] sm:$0xff] %v1274
    %v1280 = vld [vmem:[#allocation7 + $0x200] sm:$0xff]
    %v1281 = vld [vmem:[#allocation7 + $0x208] sm:$0xff]
    %v1282 = vld [vmem:[#allocation7 + $0x210] sm:$0xff]
    %v1283 = vld [vmem:[#allocation7 + $0x218] sm:$0xff]
    %v1284 = vld [vmem:[#allocation7 + $0x220] sm:$0xff]
    %v1285 = vld [vmem:[#allocation7 + $0x228] sm:$0xff]
    %v1286 = vld [vmem:[#allocation7 + $0x230] sm:$0xff]
    %v1287 = vld [vmem:[#allocation7 + $0x238] sm:$0xff]
    %v1288 = vld [vmem:[#allocation7 + $0x240] sm:$0xff]
    %v1289 = vld [vmem:[#allocation7 + $0x248] sm:$0xff]
    %v1290 = vld [vmem:[#allocation7 + $0x250] sm:$0xff]
    %v1291 = vld [vmem:[#allocation7 + $0x258] sm:$0xff]
    %v1292 = vld [vmem:[#allocation7 + $0x260] sm:$0xff]
    %v1293 = vld [vmem:[#allocation7 + $0x268] sm:$0xff]
    %v1294 = vld [vmem:[#allocation7 + $0x270] sm:$0xff]
    %v1295 = vld [vmem:[#allocation7 + $0x278] sm:$0xff]
    %v1296 = vld [vmem:[#allocation4] sm:$0x3]
    %v1297 = vld [vmem:[#allocation4 + $0x8] sm:$0x3]
    %1298 = vmatpush.msra.mxu0 0.0
    %1299 = vmatpush.msra.mxu0 0.0
    %1300 = vmatpush.msra.mxu0 0.0
    %1301 = vmatpush.msra.mxu0 0.0
    %1302 = vmatpush.msra.mxu0 0.0
    %1303 = vmatpush.msra.mxu0 0.0
    %1304 = vmatpush.msra.mxu0 0.0
    %1305 = vmatpush.msra.mxu0 0.0
    %1306 = vmatpush.msra.mxu0 %v1294
    %1307 = vmatpush.msra.mxu0 %v1292
    %1308 = vmatpush.msra.mxu0 %v1290
    %1309 = vmatpush.msra.mxu0 %v1288
    %1310 = vmatpush.msra.mxu0 %v1286
    %1311 = vmatpush.msra.mxu0 %v1284
    %1312 = vmatpush.msra.mxu0 %v1282
    %1313 = vmatpush.msra.mxu0 %v1280
    %1314 = vmatmul.f32.gmra.mxu0 %v287
    %v1315 = vpop.f32.mrf.mxu0
    %v1316 = vadd.f32 0.0, %v1315
    %1317 = vdwg.mxu0
    %1318 = vmatpush.msra.mxu0 0.0
    %1319 = vmatpush.msra.mxu0 0.0
    %1320 = vmatpush.msra.mxu0 0.0
    %1321 = vmatpush.msra.mxu0 0.0
    %1322 = vmatpush.msra.mxu0 0.0
    %1323 = vmatpush.msra.mxu0 0.0
    %1324 = vmatpush.msra.mxu0 0.0
    %1325 = vmatpush.msra.mxu0 0.0
    %1326 = vmatpush.msra.mxu0 %v1295
    %1327 = vmatpush.msra.mxu0 %v1293
    %1328 = vmatpush.msra.mxu0 %v1291
    %1329 = vmatpush.msra.mxu0 %v1289
    %1330 = vmatpush.msra.mxu0 %v1287
    %1331 = vmatpush.msra.mxu0 %v1285
    %1332 = vmatpush.msra.mxu0 %v1283
    %1333 = vmatpush.msra.mxu0 %v1281
    %1334 = vmatmul.f32.gmra.mxu0 %v287
    %v1335 = vpop.f32.mrf.mxu0
    %v1336 = vadd.f32 0.0, %v1335
    %1337 = vdwg.mxu0
    %v1338 = vadd.f32 %v1296, %v1316
    %v1339 = vadd.f32 %v1297, %v1336
    %v1340 = vxor.u32 %v1338, 2147483648
    %v1341 = vxor.u32 %v1339, 2147483648
    %v1342 = vmul.f32 %v1340, 1.442695
    %v1343 = vpow.pop %v1342
    %v1344 = vmul.f32 %v1341, 1.442695
    %v1345 = vpow.pop %v1344
    %v1346 = vadd.f32 %v1343, 1.0
    %v1347 = vadd.f32 %v1345, 1.0
    %v1348 = vrcp.pop %v1346
    %v1349 = vmul.f32 %v1346, %v1348
    %v1350 = vsub.f32 1.0, %v1349
    %v1351 = vmul.f32 %v1348, %v1350
    %v1352 = vadd.f32 %v1348, %v1351
    %vm1353 = vweird.f32 %v1346
    %vm1354 = vweird.f32 %v1348
    %vm1355 = vmor %vm1353, %vm1354
    %v1356 = vsel %vm1355, %v1348, %v1352
    %v1357 = vand.u32 2147483647, %v1346
    %vm1358 = vcmp.eq.f32.partialorder %v1357, 8.507059e+37
    %v1359 = vand.u32 %v1346, 2147483648
    %v1360 = vor.u32 1.1754944e-38, %v1359
    %v1361 = vsel %vm1358, %v1360, %v1356
    %v1362 = vmul.f32 1.0, %v1361
    %v1363 = vrcp.pop %v1347
    %v1364 = vmul.f32 %v1347, %v1363
    %v1365 = vsub.f32 1.0, %v1364
    %v1366 = vmul.f32 %v1363, %v1365
    %v1367 = vadd.f32 %v1363, %v1366
    %vm1368 = vweird.f32 %v1347
    %vm1369 = vweird.f32 %v1363
    %vm1370 = vmor %vm1368, %vm1369
    %v1371 = vsel %vm1370, %v1363, %v1367
    %v1372 = vand.u32 2147483647, %v1347
    %vm1373 = vcmp.eq.f32.partialorder %v1372, 8.507059e+37
    %v1374 = vand.u32 %v1347, 2147483648
    %v1375 = vor.u32 1.1754944e-38, %v1374
    %v1376 = vsel %vm1373, %v1375, %v1371
    %v1377 = vmul.f32 1.0, %v1376
    %v1378 = vtanh.pop %v1339
    %v1379 = vmul.f32 %v1362, 0.0
    %v1380 = vmul.f32 %v1362, %v1378
    %1382 = vrot.lane.b32.xlu0 %v1380, 64
    %v1383 = vpop.permute.xlu0 %1382
    %v1385 = vadd.f32 %v1379, %v1383
    %v1386 = vtanh.pop %v1385
    %v1387 = vmul.f32 %v1377, %v1386
    %v1388 = vld [vmem:[#allocation4] sm:$0xc]
    %v1389 = vld [vmem:[#allocation4 + $0x8] sm:$0xc]
    %1391 = vrot.lane.b32.xlu0 %v1387, 64
    %v1392 = vpop.permute.xlu0 %1391
    %v1393 = vsel %vm211, %v1392, 0
    %1395 = vmatpush.msra.mxu0 0.0
    %1396 = vmatpush.msra.mxu0 0.0
    %1397 = vmatpush.msra.mxu0 0.0
    %1398 = vmatpush.msra.mxu0 0.0
    %1399 = vmatpush.msra.mxu0 0.0
    %1400 = vmatpush.msra.mxu0 0.0
    %1401 = vmatpush.msra.mxu0 0.0
    %1402 = vmatpush.msra.mxu0 0.0
    %1403 = vmatpush.msra.mxu0 %v1294
    %1404 = vmatpush.msra.mxu0 %v1292
    %1405 = vmatpush.msra.mxu0 %v1290
    %1406 = vmatpush.msra.mxu0 %v1288
    %1407 = vmatpush.msra.mxu0 %v1286
    %1408 = vmatpush.msra.mxu0 %v1284
    %1409 = vmatpush.msra.mxu0 %v1282
    %1410 = vmatpush.msra.mxu0 %v1280
    %1411 = vmatmul.f32.gmra.mxu0 %v1393
    %v1412 = vpop.f32.mrf.mxu0
    %v1413 = vadd.f32 0.0, %v1412
    %1414 = vdwg.mxu0
    %1415 = vmatpush.msra.mxu0 0.0
    %1416 = vmatpush.msra.mxu0 0.0
    %1417 = vmatpush.msra.mxu0 0.0
    %1418 = vmatpush.msra.mxu0 0.0
    %1419 = vmatpush.msra.mxu0 0.0
    %1420 = vmatpush.msra.mxu0 0.0
    %1421 = vmatpush.msra.mxu0 0.0
    %1422 = vmatpush.msra.mxu0 0.0
    %1423 = vmatpush.msra.mxu0 %v1295
    %1424 = vmatpush.msra.mxu0 %v1293
    %1425 = vmatpush.msra.mxu0 %v1291
    %1426 = vmatpush.msra.mxu0 %v1289
    %1427 = vmatpush.msra.mxu0 %v1287
    %1428 = vmatpush.msra.mxu0 %v1285
    %1429 = vmatpush.msra.mxu0 %v1283
    %1430 = vmatpush.msra.mxu0 %v1281
    %1431 = vmatmul.f32.gmra.mxu0 %v1393
    %v1432 = vpop.f32.mrf.mxu0
    %v1433 = vadd.f32 0.0, %v1432
    %1434 = vdwg.mxu0
    %v1437 = vrot.slane %v1413, 6
    %v1438 = vrot.slane %v1433, 6
    %v1441 = vadd.f32 %v1388, %v1437
    %v1442 = vadd.f32 %v1389, %v1438
    %v1443 = vxor.u32 %v1441, 2147483648
    %v1444 = vxor.u32 %v1442, 2147483648
    %v1445 = vmul.f32 %v1443, 1.442695
    %v1446 = vpow.pop %v1445
    %v1447 = vmul.f32 %v1444, 1.442695
    %v1448 = vpow.pop %v1447
    %v1449 = vadd.f32 %v1446, 1.0
    %v1450 = vadd.f32 %v1448, 1.0
    %v1451 = vrcp.pop %v1449
    %v1452 = vmul.f32 %v1449, %v1451
    %v1453 = vsub.f32 1.0, %v1452
    %v1454 = vmul.f32 %v1451, %v1453
    %v1455 = vadd.f32 %v1451, %v1454
    %vm1456 = vweird.f32 %v1449
    %vm1457 = vweird.f32 %v1451
    %vm1458 = vmor %vm1456, %vm1457
    %v1459 = vsel %vm1458, %v1451, %v1455
    %v1460 = vand.u32 2147483647, %v1449
    %vm1461 = vcmp.eq.f32.partialorder %v1460, 8.507059e+37
    %v1462 = vand.u32 %v1449, 2147483648
    %v1463 = vor.u32 1.1754944e-38, %v1462
    %v1464 = vsel %vm1461, %v1463, %v1459
    %v1465 = vmul.f32 1.0, %v1464
    %v1466 = vrcp.pop %v1450
    %v1467 = vmul.f32 %v1450, %v1466
    %v1468 = vsub.f32 1.0, %v1467
    %v1469 = vmul.f32 %v1466, %v1468
    %v1470 = vadd.f32 %v1466, %v1469
    %vm1471 = vweird.f32 %v1450
    %vm1472 = vweird.f32 %v1466
    %vm1473 = vmor %vm1471, %vm1472
    %v1474 = vsel %vm1473, %v1466, %v1470
    %v1475 = vand.u32 2147483647, %v1450
    %vm1476 = vcmp.eq.f32.partialorder %v1475, 8.507059e+37
    %v1477 = vand.u32 %v1450, 2147483648
    %v1478 = vor.u32 1.1754944e-38, %v1477
    %v1479 = vsel %vm1476, %v1478, %v1474
    %v1480 = vmul.f32 1.0, %v1479
    %v1481 = vtanh.pop %v1442
    %v1483 = vrot.slane %v1385, 6
    %v1485 = vmul.f32 %v1465, %v1483
    %v1486 = vmul.f32 %v1465, %v1481
    %1488 = vrot.lane.b32.xlu0 %v1486, 64
    %v1489 = vpop.permute.xlu0 %1488
    %v1491 = vadd.f32 %v1485, %v1489
    %v1492 = vtanh.pop %v1491
    %v1493 = vmul.f32 %v1480, %v1492
    %v1494 = vld [vmem:[#allocation4] sm:$0x30]
    %v1495 = vld [vmem:[#allocation4 + $0x8] sm:$0x30]
    %v1497 = vrot.slane %v1493, 2
    %1498 = vrot.lane.b32.xlu0 %v1497, 64
    %v1499 = vpop.permute.xlu0 %1498
    %v1500 = vsel %vm211, %v1499, 0
    %1502 = vmatpush.msra.mxu0 0.0
    %1503 = vmatpush.msra.mxu0 0.0
    %1504 = vmatpush.msra.mxu0 0.0
    %1505 = vmatpush.msra.mxu0 0.0
    %1506 = vmatpush.msra.mxu0 0.0
    %1507 = vmatpush.msra.mxu0 0.0
    %1508 = vmatpush.msra.mxu0 0.0
    %1509 = vmatpush.msra.mxu0 0.0
    %1510 = vmatpush.msra.mxu0 %v1294
    %1511 = vmatpush.msra.mxu0 %v1292
    %1512 = vmatpush.msra.mxu0 %v1290
    %1513 = vmatpush.msra.mxu0 %v1288
    %1514 = vmatpush.msra.mxu0 %v1286
    %1515 = vmatpush.msra.mxu0 %v1284
    %1516 = vmatpush.msra.mxu0 %v1282
    %1517 = vmatpush.msra.mxu0 %v1280
    %1518 = vmatmul.f32.gmra.mxu0 %v1500
    %v1519 = vpop.f32.mrf.mxu0
    %v1520 = vadd.f32 0.0, %v1519
    %1521 = vdwg.mxu0
    %1522 = vmatpush.msra.mxu0 0.0
    %1523 = vmatpush.msra.mxu0 0.0
    %1524 = vmatpush.msra.mxu0 0.0
    %1525 = vmatpush.msra.mxu0 0.0
    %1526 = vmatpush.msra.mxu0 0.0
    %1527 = vmatpush.msra.mxu0 0.0
    %1528 = vmatpush.msra.mxu0 0.0
    %1529 = vmatpush.msra.mxu0 0.0
    %1530 = vmatpush.msra.mxu0 %v1295
    %1531 = vmatpush.msra.mxu0 %v1293
    %1532 = vmatpush.msra.mxu0 %v1291
    %1533 = vmatpush.msra.mxu0 %v1289
    %1534 = vmatpush.msra.mxu0 %v1287
    %1535 = vmatpush.msra.mxu0 %v1285
    %1536 = vmatpush.msra.mxu0 %v1283
    %1537 = vmatpush.msra.mxu0 %v1281
    %1538 = vmatmul.f32.gmra.mxu0 %v1500
    %v1539 = vpop.f32.mrf.mxu0
    %v1540 = vadd.f32 0.0, %v1539
    %1541 = vdwg.mxu0
    %v1544 = vrot.slane %v1520, 4
    %v1545 = vrot.slane %v1540, 4
    %v1548 = vadd.f32 %v1494, %v1544
    %v1549 = vadd.f32 %v1495, %v1545
    %v1550 = vxor.u32 %v1548, 2147483648
    %v1551 = vxor.u32 %v1549, 2147483648
    %v1552 = vmul.f32 %v1550, 1.442695
    %v1553 = vpow.pop %v1552
    %v1554 = vmul.f32 %v1551, 1.442695
    %v1555 = vpow.pop %v1554
    %v1556 = vadd.f32 %v1553, 1.0
    %v1557 = vadd.f32 %v1555, 1.0
    %v1558 = vrcp.pop %v1556
    %v1559 = vmul.f32 %v1556, %v1558
    %v1560 = vsub.f32 1.0, %v1559
    %v1561 = vmul.f32 %v1558, %v1560
    %v1562 = vadd.f32 %v1558, %v1561
    %vm1563 = vweird.f32 %v1556
    %vm1564 = vweird.f32 %v1558
    %vm1565 = vmor %vm1563, %vm1564
    %v1566 = vsel %vm1565, %v1558, %v1562
    %v1567 = vand.u32 2147483647, %v1556
    %vm1568 = vcmp.eq.f32.partialorder %v1567, 8.507059e+37
    %v1569 = vand.u32 %v1556, 2147483648
    %v1570 = vor.u32 1.1754944e-38, %v1569
    %v1571 = vsel %vm1568, %v1570, %v1566
    %v1572 = vmul.f32 1.0, %v1571
    %v1573 = vrcp.pop %v1557
    %v1574 = vmul.f32 %v1557, %v1573
    %v1575 = vsub.f32 1.0, %v1574
    %v1576 = vmul.f32 %v1573, %v1575
    %v1577 = vadd.f32 %v1573, %v1576
    %vm1578 = vweird.f32 %v1557
    %vm1579 = vweird.f32 %v1573
    %vm1580 = vmor %vm1578, %vm1579
    %v1581 = vsel %vm1580, %v1573, %v1577
    %v1582 = vand.u32 2147483647, %v1557
    %vm1583 = vcmp.eq.f32.partialorder %v1582, 8.507059e+37
    %v1584 = vand.u32 %v1557, 2147483648
    %v1585 = vor.u32 1.1754944e-38, %v1584
    %v1586 = vsel %vm1583, %v1585, %v1581
    %v1587 = vmul.f32 1.0, %v1586
    %v1588 = vtanh.pop %v1549
    %v1590 = vrot.slane %v1491, 6
    %v1592 = vmul.f32 %v1572, %v1590
    %v1593 = vmul.f32 %v1572, %v1588
    %1595 = vrot.lane.b32.xlu0 %v1593, 64
    %v1596 = vpop.permute.xlu0 %1595
    %v1598 = vadd.f32 %v1592, %v1596
    %v1599 = vtanh.pop %v1598
    %v1600 = vmul.f32 %v1587, %v1599
    %v1601 = vld [vmem:[#allocation4] sm:$0xc0]
    %v1602 = vld [vmem:[#allocation4 + $0x8] sm:$0xc0]
    %v1604 = vrot.slane %v1600, 4
    %1605 = vrot.lane.b32.xlu0 %v1604, 64
    %v1606 = vpop.permute.xlu0 %1605
    %v1607 = vsel %vm211, %v1606, 0
    %1609 = vmatpush.msra.mxu0 0.0
    %1610 = vmatpush.msra.mxu0 0.0
    %1611 = vmatpush.msra.mxu0 0.0
    %1612 = vmatpush.msra.mxu0 0.0
    %1613 = vmatpush.msra.mxu0 0.0
    %1614 = vmatpush.msra.mxu0 0.0
    %1615 = vmatpush.msra.mxu0 0.0
    %1616 = vmatpush.msra.mxu0 0.0
    %1617 = vmatpush.msra.mxu0 %v1294
    %1618 = vmatpush.msra.mxu0 %v1292
    %1619 = vmatpush.msra.mxu0 %v1290
    %1620 = vmatpush.msra.mxu0 %v1288
    %1621 = vmatpush.msra.mxu0 %v1286
    %1622 = vmatpush.msra.mxu0 %v1284
    %1623 = vmatpush.msra.mxu0 %v1282
    %1624 = vmatpush.msra.mxu0 %v1280
    %1625 = vmatmul.f32.gmra.mxu0 %v1607
    %v1626 = vpop.f32.mrf.mxu0
    %v1627 = vadd.f32 0.0, %v1626
    %1628 = vdwg.mxu0
    %1629 = vmatpush.msra.mxu0 0.0
    %1630 = vmatpush.msra.mxu0 0.0
    %1631 = vmatpush.msra.mxu0 0.0
    %1632 = vmatpush.msra.mxu0 0.0
    %1633 = vmatpush.msra.mxu0 0.0
    %1634 = vmatpush.msra.mxu0 0.0
    %1635 = vmatpush.msra.mxu0 0.0
    %1636 = vmatpush.msra.mxu0 0.0
    %1637 = vmatpush.msra.mxu0 %v1295
    %1638 = vmatpush.msra.mxu0 %v1293
    %1639 = vmatpush.msra.mxu0 %v1291
    %1640 = vmatpush.msra.mxu0 %v1289
    %1641 = vmatpush.msra.mxu0 %v1287
    %1642 = vmatpush.msra.mxu0 %v1285
    %1643 = vmatpush.msra.mxu0 %v1283
    %1644 = vmatpush.msra.mxu0 %v1281
    %1645 = vmatmul.f32.gmra.mxu0 %v1607
    %v1646 = vpop.f32.mrf.mxu0
    %v1647 = vadd.f32 0.0, %v1646
    %1648 = vdwg.mxu0
    %v1651 = vrot.slane %v1627, 2
    %v1652 = vrot.slane %v1647, 2
    %v1655 = vadd.f32 %v1601, %v1651
    %v1656 = vadd.f32 %v1602, %v1652
    %v1657 = vxor.u32 %v1655, 2147483648
    %v1658 = vxor.u32 %v1656, 2147483648
    %v1659 = vmul.f32 %v1657, 1.442695
    %v1660 = vpow.pop %v1659
    %v1661 = vmul.f32 %v1658, 1.442695
    %v1662 = vpow.pop %v1661
    %v1663 = vadd.f32 %v1660, 1.0
    %v1664 = vadd.f32 %v1662, 1.0
    %v1665 = vrcp.pop %v1663
    %v1666 = vmul.f32 %v1663, %v1665
    %v1667 = vsub.f32 1.0, %v1666
    %v1668 = vmul.f32 %v1665, %v1667
    %v1669 = vadd.f32 %v1665, %v1668
    %vm1670 = vweird.f32 %v1663
    %vm1671 = vweird.f32 %v1665
    %vm1672 = vmor %vm1670, %vm1671
    %v1673 = vsel %vm1672, %v1665, %v1669
    %v1674 = vand.u32 2147483647, %v1663
    %vm1675 = vcmp.eq.f32.partialorder %v1674, 8.507059e+37
    %v1676 = vand.u32 %v1663, 2147483648
    %v1677 = vor.u32 1.1754944e-38, %v1676
    %v1678 = vsel %vm1675, %v1677, %v1673
    %v1679 = vmul.f32 1.0, %v1678
    %v1680 = vrcp.pop %v1664
    %v1681 = vmul.f32 %v1664, %v1680
    %v1682 = vsub.f32 1.0, %v1681
    %v1683 = vmul.f32 %v1680, %v1682
    %v1684 = vadd.f32 %v1680, %v1683
    %vm1685 = vweird.f32 %v1664
    %vm1686 = vweird.f32 %v1680
    %vm1687 = vmor %vm1685, %vm1686
    %v1688 = vsel %vm1687, %v1680, %v1684
    %v1689 = vand.u32 2147483647, %v1664
    %vm1690 = vcmp.eq.f32.partialorder %v1689, 8.507059e+37
    %v1691 = vand.u32 %v1664, 2147483648
    %v1692 = vor.u32 1.1754944e-38, %v1691
    %v1693 = vsel %vm1690, %v1692, %v1688
    %v1694 = vmul.f32 1.0, %v1693
    %v1695 = vtanh.pop %v1656
    %v1697 = vrot.slane %v1598, 6
    %v1699 = vmul.f32 %v1679, %v1697
    %v1700 = vmul.f32 %v1679, %v1695
    %1702 = vrot.lane.b32.xlu0 %v1700, 64
    %v1703 = vpop.permute.xlu0 %1702
    %v1705 = vadd.f32 %v1699, %v1703
    %v1706 = vtanh.pop %v1705
    %v1707 = vmul.f32 %v1694, %v1706
    %v1708 = vld [vmem:[#allocation4 + $0x10] sm:$0x3]
    %v1709 = vld [vmem:[#allocation4 + $0x18] sm:$0x3]
    %v1711 = vrot.slane %v1707, 6
    %1712 = vrot.lane.b32.xlu0 %v1711, 64
    %v1713 = vpop.permute.xlu0 %1712
    %v1714 = vsel %vm211, %v1713, 0
    %1716 = vmatpush.msra.mxu0 0.0
    %1717 = vmatpush.msra.mxu0 0.0
    %1718 = vmatpush.msra.mxu0 0.0
    %1719 = vmatpush.msra.mxu0 0.0
    %1720 = vmatpush.msra.mxu0 0.0
    %1721 = vmatpush.msra.mxu0 0.0
    %1722 = vmatpush.msra.mxu0 0.0
    %1723 = vmatpush.msra.mxu0 0.0
    %1724 = vmatpush.msra.mxu0 %v1294
    %1725 = vmatpush.msra.mxu0 %v1292
    %1726 = vmatpush.msra.mxu0 %v1290
    %1727 = vmatpush.msra.mxu0 %v1288
    %1728 = vmatpush.msra.mxu0 %v1286
    %1729 = vmatpush.msra.mxu0 %v1284
    %1730 = vmatpush.msra.mxu0 %v1282
    %1731 = vmatpush.msra.mxu0 %v1280
    %1732 = vmatmul.f32.gmra.mxu0 %v1714
    %v1733 = vpop.f32.mrf.mxu0
    %v1734 = vadd.f32 0.0, %v1733
    %1735 = vdwg.mxu0
    %1736 = vmatpush.msra.mxu0 0.0
    %1737 = vmatpush.msra.mxu0 0.0
    %1738 = vmatpush.msra.mxu0 0.0
    %1739 = vmatpush.msra.mxu0 0.0
    %1740 = vmatpush.msra.mxu0 0.0
    %1741 = vmatpush.msra.mxu0 0.0
    %1742 = vmatpush.msra.mxu0 0.0
    %1743 = vmatpush.msra.mxu0 0.0
    %1744 = vmatpush.msra.mxu0 %v1295
    %1745 = vmatpush.msra.mxu0 %v1293
    %1746 = vmatpush.msra.mxu0 %v1291
    %1747 = vmatpush.msra.mxu0 %v1289
    %1748 = vmatpush.msra.mxu0 %v1287
    %1749 = vmatpush.msra.mxu0 %v1285
    %1750 = vmatpush.msra.mxu0 %v1283
    %1751 = vmatpush.msra.mxu0 %v1281
    %1752 = vmatmul.f32.gmra.mxu0 %v1714
    %v1753 = vpop.f32.mrf.mxu0
    %v1754 = vadd.f32 0.0, %v1753
    %1755 = vdwg.mxu0
    %v1756 = vadd.f32 %v1708, %v1734
    %v1757 = vadd.f32 %v1709, %v1754
    %v1758 = vxor.u32 %v1756, 2147483648
    %v1759 = vxor.u32 %v1757, 2147483648
    %v1760 = vmul.f32 %v1758, 1.442695
    %v1761 = vpow.pop %v1760
    %v1762 = vmul.f32 %v1759, 1.442695
    %v1763 = vpow.pop %v1762
    %v1764 = vadd.f32 %v1761, 1.0
    %v1765 = vadd.f32 %v1763, 1.0
    %v1766 = vrcp.pop %v1764
    %v1767 = vmul.f32 %v1764, %v1766
    %v1768 = vsub.f32 1.0, %v1767
    %v1769 = vmul.f32 %v1766, %v1768
    %v1770 = vadd.f32 %v1766, %v1769
    %vm1771 = vweird.f32 %v1764
    %vm1772 = vweird.f32 %v1766
    %vm1773 = vmor %vm1771, %vm1772
    %v1774 = vsel %vm1773, %v1766, %v1770
    %v1775 = vand.u32 2147483647, %v1764
    %vm1776 = vcmp.eq.f32.partialorder %v1775, 8.507059e+37
    %v1777 = vand.u32 %v1764, 2147483648
    %v1778 = vor.u32 1.1754944e-38, %v1777
    %v1779 = vsel %vm1776, %v1778, %v1774
    %v1780 = vmul.f32 1.0, %v1779
    %v1781 = vrcp.pop %v1765
    %v1782 = vmul.f32 %v1765, %v1781
    %v1783 = vsub.f32 1.0, %v1782
    %v1784 = vmul.f32 %v1781, %v1783
    %v1785 = vadd.f32 %v1781, %v1784
    %vm1786 = vweird.f32 %v1765
    %vm1787 = vweird.f32 %v1781
    %vm1788 = vmor %vm1786, %vm1787
    %v1789 = vsel %vm1788, %v1781, %v1785
    %v1790 = vand.u32 2147483647, %v1765
    %vm1791 = vcmp.eq.f32.partialorder %v1790, 8.507059e+37
    %v1792 = vand.u32 %v1765, 2147483648
    %v1793 = vor.u32 1.1754944e-38, %v1792
    %v1794 = vsel %vm1791, %v1793, %v1789
    %v1795 = vmul.f32 1.0, %v1794
    %v1796 = vtanh.pop %v1757
    %v1798 = vrot.slane %v1705, 6
    %v1800 = vmul.f32 %v1780, %v1798
    %v1801 = vmul.f32 %v1780, %v1796
    %1803 = vrot.lane.b32.xlu0 %v1801, 64
    %v1804 = vpop.permute.xlu0 %1803
    %v1806 = vadd.f32 %v1800, %v1804
    %v1807 = vtanh.pop %v1806
    %v1808 = vmul.f32 %v1795, %v1807
    %v1809 = vld [vmem:[#allocation4 + $0x10] sm:$0xc]
    %v1810 = vld [vmem:[#allocation4 + $0x18] sm:$0xc]
    %1812 = vrot.lane.b32.xlu0 %v1808, 64
    %v1813 = vpop.permute.xlu0 %1812
    %v1814 = vsel %vm211, %v1813, 0
    %1816 = vmatpush.msra.mxu0 0.0
    %1817 = vmatpush.msra.mxu0 0.0
    %1818 = vmatpush.msra.mxu0 0.0
    %1819 = vmatpush.msra.mxu0 0.0
    %1820 = vmatpush.msra.mxu0 0.0
    %1821 = vmatpush.msra.mxu0 0.0
    %1822 = vmatpush.msra.mxu0 0.0
    %1823 = vmatpush.msra.mxu0 0.0
    %1824 = vmatpush.msra.mxu0 %v1294
    %1825 = vmatpush.msra.mxu0 %v1292
    %1826 = vmatpush.msra.mxu0 %v1290
    %1827 = vmatpush.msra.mxu0 %v1288
    %1828 = vmatpush.msra.mxu0 %v1286
    %1829 = vmatpush.msra.mxu0 %v1284
    %1830 = vmatpush.msra.mxu0 %v1282
    %1831 = vmatpush.msra.mxu0 %v1280
    %1832 = vmatmul.f32.gmra.mxu0 %v1814
    %v1833 = vpop.f32.mrf.mxu0
    %v1834 = vadd.f32 0.0, %v1833
    %1835 = vdwg.mxu0
    %1836 = vmatpush.msra.mxu0 0.0
    %1837 = vmatpush.msra.mxu0 0.0
    %1838 = vmatpush.msra.mxu0 0.0
    %1839 = vmatpush.msra.mxu0 0.0
    %1840 = vmatpush.msra.mxu0 0.0
    %1841 = vmatpush.msra.mxu0 0.0
    %1842 = vmatpush.msra.mxu0 0.0
    %1843 = vmatpush.msra.mxu0 0.0
    %1844 = vmatpush.msra.mxu0 %v1295
    %1845 = vmatpush.msra.mxu0 %v1293
    %1846 = vmatpush.msra.mxu0 %v1291
    %1847 = vmatpush.msra.mxu0 %v1289
    %1848 = vmatpush.msra.mxu0 %v1287
    %1849 = vmatpush.msra.mxu0 %v1285
    %1850 = vmatpush.msra.mxu0 %v1283
    %1851 = vmatpush.msra.mxu0 %v1281
    %1852 = vmatmul.f32.gmra.mxu0 %v1814
    %v1853 = vpop.f32.mrf.mxu0
    %v1854 = vadd.f32 0.0, %v1853
    %1855 = vdwg.mxu0
    %v1858 = vrot.slane %v1834, 6
    %v1859 = vrot.slane %v1854, 6
    %v1862 = vadd.f32 %v1809, %v1858
    %v1863 = vadd.f32 %v1810, %v1859
    %v1864 = vxor.u32 %v1862, 2147483648
    %v1865 = vxor.u32 %v1863, 2147483648
    %v1866 = vmul.f32 %v1864, 1.442695
    %v1867 = vpow.pop %v1866
    %v1868 = vmul.f32 %v1865, 1.442695
    %v1869 = vpow.pop %v1868
    %v1870 = vadd.f32 %v1867, 1.0
    %v1871 = vadd.f32 %v1869, 1.0
    %v1872 = vrcp.pop %v1870
    %v1873 = vmul.f32 %v1870, %v1872
    %v1874 = vsub.f32 1.0, %v1873
    %v1875 = vmul.f32 %v1872, %v1874
    %v1876 = vadd.f32 %v1872, %v1875
    %vm1877 = vweird.f32 %v1870
    %vm1878 = vweird.f32 %v1872
    %vm1879 = vmor %vm1877, %vm1878
    %v1880 = vsel %vm1879, %v1872, %v1876
    %v1881 = vand.u32 2147483647, %v1870
    %vm1882 = vcmp.eq.f32.partialorder %v1881, 8.507059e+37
    %v1883 = vand.u32 %v1870, 2147483648
    %v1884 = vor.u32 1.1754944e-38, %v1883
    %v1885 = vsel %vm1882, %v1884, %v1880
    %v1886 = vmul.f32 1.0, %v1885
    %v1887 = vrcp.pop %v1871
    %v1888 = vmul.f32 %v1871, %v1887
    %v1889 = vsub.f32 1.0, %v1888
    %v1890 = vmul.f32 %v1887, %v1889
    %v1891 = vadd.f32 %v1887, %v1890
    %vm1892 = vweird.f32 %v1871
    %vm1893 = vweird.f32 %v1887
    %vm1894 = vmor %vm1892, %vm1893
    %v1895 = vsel %vm1894, %v1887, %v1891
    %v1896 = vand.u32 2147483647, %v1871
    %vm1897 = vcmp.eq.f32.partialorder %v1896, 8.507059e+37
    %v1898 = vand.u32 %v1871, 2147483648
    %v1899 = vor.u32 1.1754944e-38, %v1898
    %v1900 = vsel %vm1897, %v1899, %v1895
    %v1901 = vmul.f32 1.0, %v1900
    %v1902 = vtanh.pop %v1863
    %v1904 = vrot.slane %v1806, 6
    %v1906 = vmul.f32 %v1886, %v1904
    %v1907 = vmul.f32 %v1886, %v1902
    %1909 = vrot.lane.b32.xlu0 %v1907, 64
    %v1910 = vpop.permute.xlu0 %1909
    %v1912 = vadd.f32 %v1906, %v1910
    %v1913 = vtanh.pop %v1912
    %v1914 = vmul.f32 %v1901, %v1913
    %v1915 = vld [vmem:[#allocation4 + $0x10] sm:$0x30]
    %v1916 = vld [vmem:[#allocation4 + $0x18] sm:$0x30]
    %v1918 = vrot.slane %v1914, 2
    %1919 = vrot.lane.b32.xlu0 %v1918, 64
    %v1920 = vpop.permute.xlu0 %1919
    %v1921 = vsel %vm211, %v1920, 0
    %1923 = vmatpush.msra.mxu0 0.0
    %1924 = vmatpush.msra.mxu0 0.0
    %1925 = vmatpush.msra.mxu0 0.0
    %1926 = vmatpush.msra.mxu0 0.0
    %1927 = vmatpush.msra.mxu0 0.0
    %1928 = vmatpush.msra.mxu0 0.0
    %1929 = vmatpush.msra.mxu0 0.0
    %1930 = vmatpush.msra.mxu0 0.0
    %1931 = vmatpush.msra.mxu0 %v1294
    %1932 = vmatpush.msra.mxu0 %v1292
    %1933 = vmatpush.msra.mxu0 %v1290
    %1934 = vmatpush.msra.mxu0 %v1288
    %1935 = vmatpush.msra.mxu0 %v1286
    %1936 = vmatpush.msra.mxu0 %v1284
    %1937 = vmatpush.msra.mxu0 %v1282
    %1938 = vmatpush.msra.mxu0 %v1280
    %1939 = vmatmul.f32.gmra.mxu0 %v1921
    %v1940 = vpop.f32.mrf.mxu0
    %v1941 = vadd.f32 0.0, %v1940
    %1942 = vdwg.mxu0
    %1943 = vmatpush.msra.mxu0 0.0
    %1944 = vmatpush.msra.mxu0 0.0
    %1945 = vmatpush.msra.mxu0 0.0
    %1946 = vmatpush.msra.mxu0 0.0
    %1947 = vmatpush.msra.mxu0 0.0
    %1948 = vmatpush.msra.mxu0 0.0
    %1949 = vmatpush.msra.mxu0 0.0
    %1950 = vmatpush.msra.mxu0 0.0
    %1951 = vmatpush.msra.mxu0 %v1295
    %1952 = vmatpush.msra.mxu0 %v1293
    %1953 = vmatpush.msra.mxu0 %v1291
    %1954 = vmatpush.msra.mxu0 %v1289
    %1955 = vmatpush.msra.mxu0 %v1287
    %1956 = vmatpush.msra.mxu0 %v1285
    %1957 = vmatpush.msra.mxu0 %v1283
    %1958 = vmatpush.msra.mxu0 %v1281
    %1959 = vmatmul.f32.gmra.mxu0 %v1921
    %v1960 = vpop.f32.mrf.mxu0
    %v1961 = vadd.f32 0.0, %v1960
    %1962 = vdwg.mxu0
    %v1965 = vrot.slane %v1941, 4
    %v1966 = vrot.slane %v1961, 4
    %v1969 = vadd.f32 %v1915, %v1965
    %v1970 = vadd.f32 %v1916, %v1966
    %v1971 = vxor.u32 %v1969, 2147483648
    %v1972 = vxor.u32 %v1970, 2147483648
    %v1973 = vmul.f32 %v1971, 1.442695
    %v1974 = vpow.pop %v1973
    %v1975 = vmul.f32 %v1972, 1.442695
    %v1976 = vpow.pop %v1975
    %v1977 = vadd.f32 %v1974, 1.0
    %v1978 = vadd.f32 %v1976, 1.0
    %v1979 = vrcp.pop %v1977
    %v1980 = vmul.f32 %v1977, %v1979
    %v1981 = vsub.f32 1.0, %v1980
    %v1982 = vmul.f32 %v1979, %v1981
    %v1983 = vadd.f32 %v1979, %v1982
    %vm1984 = vweird.f32 %v1977
    %vm1985 = vweird.f32 %v1979
    %vm1986 = vmor %vm1984, %vm1985
    %v1987 = vsel %vm1986, %v1979, %v1983
    %v1988 = vand.u32 2147483647, %v1977
    %vm1989 = vcmp.eq.f32.partialorder %v1988, 8.507059e+37
    %v1990 = vand.u32 %v1977, 2147483648
    %v1991 = vor.u32 1.1754944e-38, %v1990
    %v1992 = vsel %vm1989, %v1991, %v1987
    %v1993 = vmul.f32 1.0, %v1992
    %v1994 = vrcp.pop %v1978
    %v1995 = vmul.f32 %v1978, %v1994
    %v1996 = vsub.f32 1.0, %v1995
    %v1997 = vmul.f32 %v1994, %v1996
    %v1998 = vadd.f32 %v1994, %v1997
    %vm1999 = vweird.f32 %v1978
    %vm2000 = vweird.f32 %v1994
    %vm2001 = vmor %vm1999, %vm2000
    %v2002 = vsel %vm2001, %v1994, %v1998
    %v2003 = vand.u32 2147483647, %v1978
    %vm2004 = vcmp.eq.f32.partialorder %v2003, 8.507059e+37
    %v2005 = vand.u32 %v1978, 2147483648
    %v2006 = vor.u32 1.1754944e-38, %v2005
    %v2007 = vsel %vm2004, %v2006, %v2002
    %v2008 = vmul.f32 1.0, %v2007
    %v2009 = vtanh.pop %v1970
    %v2011 = vrot.slane %v1912, 6
    %v2013 = vmul.f32 %v1993, %v2011
    %v2014 = vmul.f32 %v1993, %v2009
    %2016 = vrot.lane.b32.xlu0 %v2014, 64
    %v2017 = vpop.permute.xlu0 %2016
    %v2019 = vadd.f32 %v2013, %v2017
    %v2020 = vtanh.pop %v2019
    %v2021 = vmul.f32 %v2008, %v2020
    %v2022 = vld [vmem:[#allocation4 + $0x10] sm:$0xc0]
    %v2023 = vld [vmem:[#allocation4 + $0x18] sm:$0xc0]
    %v2025 = vrot.slane %v2021, 4
    %2026 = vrot.lane.b32.xlu0 %v2025, 64
    %v2027 = vpop.permute.xlu0 %2026
    %v2028 = vsel %vm211, %v2027, 0
    %2030 = vmatpush.msra.mxu0 0.0
    %2031 = vmatpush.msra.mxu0 0.0
    %2032 = vmatpush.msra.mxu0 0.0
    %2033 = vmatpush.msra.mxu0 0.0
    %2034 = vmatpush.msra.mxu0 0.0
    %2035 = vmatpush.msra.mxu0 0.0
    %2036 = vmatpush.msra.mxu0 0.0
    %2037 = vmatpush.msra.mxu0 0.0
    %2038 = vmatpush.msra.mxu0 %v1294
    %2039 = vmatpush.msra.mxu0 %v1292
    %2040 = vmatpush.msra.mxu0 %v1290
    %2041 = vmatpush.msra.mxu0 %v1288
    %2042 = vmatpush.msra.mxu0 %v1286
    %2043 = vmatpush.msra.mxu0 %v1284
    %2044 = vmatpush.msra.mxu0 %v1282
    %2045 = vmatpush.msra.mxu0 %v1280
    %2046 = vmatmul.f32.gmra.mxu0 %v2028
    %v2047 = vpop.f32.mrf.mxu0
    %v2048 = vadd.f32 0.0, %v2047
    %2049 = vdwg.mxu0
    %2050 = vmatpush.msra.mxu0 0.0
    %2051 = vmatpush.msra.mxu0 0.0
    %2052 = vmatpush.msra.mxu0 0.0
    %2053 = vmatpush.msra.mxu0 0.0
    %2054 = vmatpush.msra.mxu0 0.0
    %2055 = vmatpush.msra.mxu0 0.0
    %2056 = vmatpush.msra.mxu0 0.0
    %2057 = vmatpush.msra.mxu0 0.0
    %2058 = vmatpush.msra.mxu0 %v1295
    %2059 = vmatpush.msra.mxu0 %v1293
    %2060 = vmatpush.msra.mxu0 %v1291
    %2061 = vmatpush.msra.mxu0 %v1289
    %2062 = vmatpush.msra.mxu0 %v1287
    %2063 = vmatpush.msra.mxu0 %v1285
    %2064 = vmatpush.msra.mxu0 %v1283
    %2065 = vmatpush.msra.mxu0 %v1281
    %2066 = vmatmul.f32.gmra.mxu0 %v2028
    %v2067 = vpop.f32.mrf.mxu0
    %v2068 = vadd.f32 0.0, %v2067
    %2069 = vdwg.mxu0
    %v2072 = vrot.slane %v2048, 2
    %v2073 = vrot.slane %v2068, 2
    %v2076 = vadd.f32 %v2022, %v2072
    %v2077 = vadd.f32 %v2023, %v2073
    %v2078 = vxor.u32 %v2076, 2147483648
    %v2079 = vxor.u32 %v2077, 2147483648
    %v2080 = vmul.f32 %v2078, 1.442695
    %v2081 = vpow.pop %v2080
    %v2082 = vmul.f32 %v2079, 1.442695
    %v2083 = vpow.pop %v2082
    %v2084 = vadd.f32 %v2081, 1.0
    %v2085 = vadd.f32 %v2083, 1.0
    %v2086 = vrcp.pop %v2084
    %v2087 = vmul.f32 %v2084, %v2086
    %v2088 = vsub.f32 1.0, %v2087
    %v2089 = vmul.f32 %v2086, %v2088
    %v2090 = vadd.f32 %v2086, %v2089
    %vm2091 = vweird.f32 %v2084
    %vm2092 = vweird.f32 %v2086
    %vm2093 = vmor %vm2091, %vm2092
    %v2094 = vsel %vm2093, %v2086, %v2090
    %v2095 = vand.u32 2147483647, %v2084
    %vm2096 = vcmp.eq.f32.partialorder %v2095, 8.507059e+37
    %v2097 = vand.u32 %v2084, 2147483648
    %v2098 = vor.u32 1.1754944e-38, %v2097
    %v2099 = vsel %vm2096, %v2098, %v2094
    %v2100 = vmul.f32 1.0, %v2099
    %v2101 = vrcp.pop %v2085
    %v2102 = vmul.f32 %v2085, %v2101
    %v2103 = vsub.f32 1.0, %v2102
    %v2104 = vmul.f32 %v2101, %v2103
    %v2105 = vadd.f32 %v2101, %v2104
    %vm2106 = vweird.f32 %v2085
    %vm2107 = vweird.f32 %v2101
    %vm2108 = vmor %vm2106, %vm2107
    %v2109 = vsel %vm2108, %v2101, %v2105
    %v2110 = vand.u32 2147483647, %v2085
    %vm2111 = vcmp.eq.f32.partialorder %v2110, 8.507059e+37
    %v2112 = vand.u32 %v2085, 2147483648
    %v2113 = vor.u32 1.1754944e-38, %v2112
    %v2114 = vsel %vm2111, %v2113, %v2109
    %v2115 = vmul.f32 1.0, %v2114
    %v2116 = vtanh.pop %v2077
    %v2118 = vrot.slane %v2019, 6
    %v2120 = vmul.f32 %v2100, %v2118
    %v2121 = vmul.f32 %v2100, %v2116
    %2123 = vrot.lane.b32.xlu0 %v2121, 64
    %v2124 = vpop.permute.xlu0 %2123
    %v2126 = vadd.f32 %v2120, %v2124
    %v2127 = vtanh.pop %v2126
    %v2128 = vmul.f32 %v2115, %v2127
    %v2129 = vld [vmem:[%s3 + $0x40] sm:$0x1]
    %v2130 = vld [vmem:[%s3] sm:$0xff]
    %v2131 = vld [vmem:[%s3 + $0x8] sm:$0xff]
    %v2132 = vld [vmem:[%s3 + $0x10] sm:$0xff]
    %v2133 = vld [vmem:[%s3 + $0x18] sm:$0xff]
    %v2135 = vrot.slane %v2128, 6
    %2136 = vrot.lane.b32.xlu0 %v2135, 64
    %v2137 = vpop.permute.xlu0 %2136
    %vm2138 = vcmask 261120
    %v2139 = vsel %vm2138, %v2137, 0
    %2141 = vmatpush.msra.mxu0 0.0
    %2142 = vmatpush.msra.mxu0 0.0
    %2143 = vmatpush.msra.mxu0 0.0
    %2144 = vmatpush.msra.mxu0 0.0
    %2145 = vmatpush.msra.mxu0 0.0
    %2146 = vmatpush.msra.mxu0 0.0
    %2147 = vmatpush.msra.mxu0 0.0
    %2148 = vmatpush.msra.mxu0 0.0
    %2149 = vmatpush.msra.mxu0 0.0
    %2150 = vmatpush.msra.mxu0 0.0
    %2151 = vmatpush.msra.mxu0 0.0
    %2152 = vmatpush.msra.mxu0 0.0
    %2153 = vmatpush.msra.mxu0 %v2133
    %2154 = vmatpush.msra.mxu0 %v2132
    %2155 = vmatpush.msra.mxu0 %v2131
    %2156 = vmatpush.msra.mxu0 %v2130
    %2157 = vmatmul.f32.gmra.mxu0 %v2139
    %v2158 = vpop.f32.mrf.mxu0
    %v2159 = vadd.f32 0.0, %v2158
    %2160 = vdwg.mxu0
    %v2161 = vperm.slane %v2129, 0
    %v2162 = vadd.f32 %v2161, %v2159
    %v2163 = vld [vmem:[%s3 + $0x20] sm:$0xff]
    %v2164 = vld [vmem:[%s3 + $0x28] sm:$0xff]
    %v2165 = vld [vmem:[%s3 + $0x30] sm:$0xff]
    %v2166 = vld [vmem:[%s3 + $0x38] sm:$0xff]
    %2167 = vrot.lane.b32.xlu0 %v1387, 32
    %v2168 = vpop.permute.xlu0 %2167
    %v2169 = vsel %vm2138, %v2168, 0
    %2171 = vmatpush.msra.mxu0 0.0
    %2172 = vmatpush.msra.mxu0 0.0
    %2173 = vmatpush.msra.mxu0 0.0
    %2174 = vmatpush.msra.mxu0 0.0
    %2175 = vmatpush.msra.mxu0 0.0
    %2176 = vmatpush.msra.mxu0 0.0
    %2177 = vmatpush.msra.mxu0 0.0
    %2178 = vmatpush.msra.mxu0 0.0
    %2179 = vmatpush.msra.mxu0 0.0
    %2180 = vmatpush.msra.mxu0 0.0
    %2181 = vmatpush.msra.mxu0 0.0
    %2182 = vmatpush.msra.mxu0 0.0
    %2183 = vmatpush.msra.mxu0 %v2166
    %2184 = vmatpush.msra.mxu0 %v2165
    %2185 = vmatpush.msra.mxu0 %v2164
    %2186 = vmatpush.msra.mxu0 %v2163
    %2187 = vmatmul.f32.gmra.mxu0 %v2169
    %v2188 = vpop.f32.mrf.mxu0
    %v2189 = vadd.f32 0.0, %v2188
    %2190 = vdwg.mxu0
    %v2191 = vadd.f32 %v2162, %v2189
    %vm2192 = vcmask 25600
    %2193 = vst.msk [vmem:[#allocation10] sm:$0x3] %vm2192, %v2191
    // Predicated region
    $region18: #{tpu_custom_call.1} parent=1 // pred_check
      _
    $region19: #{tpu_custom_call.1} parent=1 // pred_check_branch
      %2195 = sbr.rel (0) target = $region21
    $region20: #{tpu_custom_call.1} parent=1 // pred_region
      %2197 = vsyncadd [#allocation9], 0
      %s2199 = sshll.u32 [#allocation10], 4
      %s2200 = int_to_ptr.vmem [resolvable:$true] %s2199
      %s2201 = sshll.u32 %s4, 4
      %s2202 = int_to_ptr.hbm [resolvable:$true] %s2201
      %2204 = dma.vmem_to_hbm [thread:$0]  %s2200, 32, %s2202, [#allocation9]
    $region21: #{tpu_custom_call.1} parent=1 // pred_fallthru
      _
    // Predicated region
    $region22: #{tpu_custom_call.1} parent=1 // pred_check
      _
    $region23: #{tpu_custom_call.1} parent=1 // pred_check_branch
      %2206 = sbr.rel (0) target = $region25
    $region24: #{tpu_custom_call.1} parent=1 // pred_region
      %2208 = dma.done [#allocation9], 32
    $region25: #{tpu_custom_call.1} parent=1 // pred_fallthru
      _
    %2209 = vsyncpa [#allocation8], 1
    %2210 = vsyncpa [#allocation9], 1

</llo_original>
